<compile_context>
chip_gen: v7x
topology: tpu7x:2x2x1
jax: 0.10.0
libtpu: 0.0.40
codegen_flags: <defaults>
</compile_context>

<pallas_src>
import math
import jax
import jax.numpy as jnp
from jax import lax
from jax.experimental import pallas as pl
from jax.experimental.pallas import tpu as pltpu

KSIZE = 7
PAD = (KSIZE - 1) // 2  # 3


def _make_kernel(BT, C, H, W, HWp):
    NK2 = KSIZE * KSIZE

    def attention_gate_kernel(x_ref, idx_ref, w_ref, shift_ref, o_ref):
        # x_ref:     (BT, C, HWp)  lane-dense input block
        # idx_ref:   (2, HWp) f32  row / col index of each flat position
        #                          (-1e4 sentinel on the HW -> HWp padding tail)
        # w_ref:     (98,) SMEM    conv weights with BN scale (and 1/C for the
        #                          mean path) folded in; layout [ch*49 + kh*7 + kw]
        # shift_ref: (1,)  SMEM    conv bias + BN shift folded
        # o_ref:     (BT, C, HWp)

        # --- ZPool: channel max and channel sum (1/C folded into the weights) ---
        mx = jnp.max(x_ref[...], axis=1).astype(jnp.float32)          # (BT, HWp)
        sm = jnp.sum(x_ref[...].astype(jnp.float32), axis=1)          # (BT, HWp)

        row_id = idx_ref[0:1, :]                                       # (1, HWp)
        col_id = idx_ref[1:2, :]                                       # (1, HWp)

        # Column-validity masks (static per kw), hoisted out of the loop.
        cmasks = [
            ((col_id >= float(PAD - kw)) &
             (col_id <= float(W - 1 + PAD - kw))).astype(jnp.float32)
            for kw in range(KSIZE)
        ]

        # --- 7x7 conv (2 -> 1 channel) on flat maps: XLU rolls + validity masks ---
        def kh_body(kh, acc):
            khf = jnp.asarray(kh, jnp.float32)
            rmask = ((row_id >= (PAD - khf)) &
                     (row_id <= (H - 1 + PAD - khf))).astype(jnp.float32)
            row_shift = (PAD - kh) * W
            part = jnp.zeros((BT, HWp), jnp.float32)
            for kw in range(KSIZE):
                shift = (row_shift + (PAD - kw)) % HWp                 # >= 0
                w0 = w_ref[kh * KSIZE + kw]                            # max-map tap
                w1 = w_ref[NK2 + kh * KSIZE + kw]                      # mean-map tap
                tap = (pltpu.roll(mx, shift, axis=1) * w0 +
                       pltpu.roll(sm, shift, axis=1) * w1)
                part = part + tap * cmasks[kw]
            return acc + part * rmask

        acc = lax.fori_loop(0, KSIZE, kh_body,
                            jnp.zeros((BT, HWp), jnp.float32), unroll=True)

        # --- folded conv-bias + BN shift, sigmoid (EUP), gate ---
        scale = jax.nn.sigmoid(acc + shift_ref[0]).astype(o_ref.dtype)  # (BT, HWp)
        o_ref[...] = x_ref[...] * scale[:, None, :]

    return attention_gate_kernel


def _device_budget():
    """(vmem_limit_cap_bytes, target_block_bytes) for the local TPU generation."""
    try:
        kind = jax.devices()[0].device_kind.lower()
    except Exception:
        kind = ""
    if ("v5 lite" in kind) or ("v5e" in kind) or ("v6" in kind):
        return 96 << 20, 8 << 20     # 128 MiB physical VMEM: larger blocks/limit
    return 40 << 20, 3 << 20         # v7x (64 MiB physical VMEM) / unknown: safe


def attention_gate(x, conv_w, conv_b, bn_gamma, bn_beta, bn_mean, bn_var, eps=1e-5):
    """x: (B, C, H, W) float32 or bfloat16.  Returns (B, C, H, W) in x.dtype."""
    B, C, H, W = x.shape
    HW = H * W
    HWp = max(128, ((HW + 127) // 128) * 128)        # lane-dense flat spatial dim
    itemsize = jnp.dtype(x.dtype).itemsize

    # Fold eval-mode BatchNorm + conv bias (+ 1/C for the mean path) into weights.
    # TODO(synk): training-mode BatchNorm (batch statistics + running-stat update)
    # is not implemented; eval-mode running stats are folded instead.
    a = (bn_gamma / jnp.sqrt(bn_var + eps)).astype(jnp.float32)           # (1,)
    w_max = (conv_w[0, 0] * a[0]).astype(jnp.float32).reshape(-1)         # (49,)
    w_mean = (conv_w[0, 1] * (a[0] / C)).astype(jnp.float32).reshape(-1)  # (49,)
    w_flat = jnp.concatenate([w_max, w_mean])                             # (98,)
    shift = ((conv_b - bn_mean) * a + bn_beta).astype(jnp.float32).reshape(1)

    # Per-position row / col indices on the flat (padded) spatial domain.
    pos = jnp.arange(HWp, dtype=jnp.int32)
    row_id = jnp.where(pos < HW, pos // W, -10000).astype(jnp.float32)
    col_id = jnp.where(pos < HW, pos % W, -10000).astype(jnp.float32)
    idx = jnp.stack([row_id, col_id], axis=0)                             # (2, HWp)

    # Batch tiling: multi-MiB blocks, >= 2 "parallel" grid steps when B >= 2
    # (v7x has 2 TensorCores), remainder handled by zero-padding the batch.
    vmem_cap, target_block = _device_budget()
    per_image_bytes = C * HWp * itemsize
    BT = int(max(1, min(B, target_block // max(per_image_bytes, 1))))
    if B >= 2:
        BT = min(BT, max(1, B // 2))
    grid_b = -(-B // BT)                         # cdiv
    Bp = grid_b * BT

    x_flat = x.reshape(B, C, HW)                 # row-major: free reshape
    pad_b, pad_hw = Bp - B, HWp - HW
    if pad_b or pad_hw:
        x_flat = jnp.pad(x_flat, ((0, pad_b), (0, 0), (0, pad_hw)))

    # VMEM budget: double-buffered in/out blocks + f32 temporaries, clamped per
    # generation so the tiling also fits v7x's 64 MiB physical VMEM.
    block_bytes = BT * per_image_bytes
    tmp_bytes = BT * C * HWp * 4 + 10 * BT * HWp * 4
    need = 4 * block_bytes + tmp_bytes + (2 << 20)
    vmem_limit = int(min(max(need, 16 << 20), vmem_cap))

    out = pl.pallas_call(
        _make_kernel(BT, C, H, W, HWp),
        out_shape=jax.ShapeDtypeStruct((Bp, C, HWp), x.dtype),
        grid=(grid_b,),
        in_specs=[
            pl.BlockSpec((BT, C, HWp), lambda b: (b, 0, 0)),
            pl.BlockSpec((2, HWp), lambda b: (0, 0)),
            pl.BlockSpec(memory_space=pltpu.MemorySpace.SMEM),
            pl.BlockSpec(memory_space=pltpu.MemorySpace.SMEM),
        ],
        out_specs=pl.BlockSpec((BT, C, HWp), lambda b: (b, 0, 0)),
        input_output_aliases={0: 0},             # in-place gating: reuse x's buffer
        compiler_params=pltpu.CompilerParams(
            dimension_semantics=("parallel",),
            vmem_limit_bytes=vmem_limit),
    )(x_flat, idx, w_flat, shift)

    return out[:B, :, :HW].reshape(B, C, H, W)


def attention_gate_ref(x, conv_w, conv_b, bn_gamma, bn_beta, bn_mean, bn_var, eps=1e-5):
    """Pure-JAX reference mirroring the PyTorch forward (eval-mode BN)."""
    B, C, H, W = x.shape
    mx = jnp.max(x, axis=1)
    mn = jnp.mean(x, axis=1)
    comp = jnp.stack([mx, mn], axis=1)                        # (B, 2, H, W)
    padded = jnp.pad(comp, ((0, 0), (0, 0), (PAD, PAD), (PAD, PAD)))
    out = jnp.zeros((B, H, W), jnp.float32)
    for kh in range(KSIZE):
        for kw in range(KSIZE):
            win = padded[:, :, kh:kh + H, kw:kw + W]          # (B, 2, H, W)
            out = out + jnp.einsum("bchw,c->bhw", win, conv_w[0, :, kh, kw])
    out = out + conv_b[0]
    out = (out - bn_mean[0]) / jnp.sqrt(bn_var[0] + eps) * bn_gamma[0] + bn_beta[0]
    scale = jax.nn.sigmoid(out)[:, None, :, :]
    return x * scale


if __name__ == "__main__":
    B, C, H, W = 2, 4, 16, 16
    key = jax.random.PRNGKey(0)
    kx, kw, kb = jax.random.split(key, 3)

    x = jax.random.normal(kx, (B, C, H, W), dtype=jnp.float32)

    # Deterministic parameter init (shapes per nn.Conv2d(2,1,7) + nn.BatchNorm2d(1)).
    fan_in = 2 * KSIZE * KSIZE
    bound = 1.0 / math.sqrt(fan_in)
    conv_w = jax.random.uniform(kw, (1, 2, KSIZE, KSIZE), jnp.float32, -bound, bound)
    conv_b = jax.random.uniform(kb, (1,), jnp.float32, -bound, bound)
    bn_gamma = jnp.ones((1,), jnp.float32)
    bn_beta = jnp.zeros((1,), jnp.float32)
    bn_mean = jnp.zeros((1,), jnp.float32)   # eval-mode running stats
    bn_var = jnp.ones((1,), jnp.float32)

    out = attention_gate(x, conv_w, conv_b, bn_gamma, bn_beta, bn_mean, bn_var)
    out = jax.block_until_ready(out)

    ref = attention_gate_ref(x, conv_w, conv_b, bn_gamma, bn_beta, bn_mean, bn_var)
    assert out.shape == (B, C, H, W)
    assert jnp.allclose(out, ref, atol=2e-5, rtol=2e-5), "mismatch vs reference"

    print("KERNEL_OK")
</pallas_src>

<mosaic_0001>
module attributes {stable_mosaic.version = 11 : i64} {
  func.func @attention_gate_kernel(%arg0: i32, %arg1: memref<1x4x256xf32, #tpu.memory_space<vmem>>, %arg2: memref<2x256xf32, #tpu.memory_space<vmem>>, %arg3: memref<98xf32, #tpu.memory_space<smem>>, %arg4: memref<1xf32, #tpu.memory_space<smem>>, %arg5: memref<1x4x256xf32, #tpu.memory_space<vmem>>) attributes {dimension_semantics = [#tpu.dimension_semantics<parallel>], iteration_bounds = array<i64: 2>, scalar_prefetch = 0 : i64, scratch_operands = 0 : i64, tpu.core_type = #tpu.core_type<tc>, window_params = [{transform_indices = @transform_0, window_bounds = array<i64: 1, 4, 256>}, {pipeline_mode = #tpu.pipeline_mode<synchronous>, transform_indices = @transform_1, window_bounds = array<i64: 2, 256>}, {transform_indices = @transform_2, window_bounds = array<i64: 98>}, {transform_indices = @transform_3, window_bounds = array<i64: 1>}, {transform_indices = @transform_4, window_bounds = array<i64: 1, 4, 256>}]} {
    %c0 = arith.constant 0 : index
    %c0_0 = arith.constant 0 : index
    %c0_1 = arith.constant 0 : index
    %0 = vector.load %arg1[%c0, %c0_0, %c0_1] : memref<1x4x256xf32, #tpu.memory_space<vmem>>, vector<1x4x256xf32>
    %cst = arith.constant dense<0xFF800000> : vector<1x256xf32>
    %1 = vector.multi_reduction <maximumf>, %0, %cst [1] : vector<1x4x256xf32> to vector<1x256xf32>
    %c0_2 = arith.constant 0 : index
    %c0_3 = arith.constant 0 : index
    %c0_4 = arith.constant 0 : index
    %2 = vector.load %arg1[%c0_2, %c0_3, %c0_4] : memref<1x4x256xf32, #tpu.memory_space<vmem>>, vector<1x4x256xf32>
    %cst_5 = arith.constant dense<0.000000e+00> : vector<1x256xf32>
    %3 = vector.multi_reduction <add>, %2, %cst_5 [1] : vector<1x4x256xf32> to vector<1x256xf32>
    %c0_6 = arith.constant 0 : index
    %c0_7 = arith.constant 0 : index
    %4 = vector.load %arg2[%c0_6, %c0_7] : memref<2x256xf32, #tpu.memory_space<vmem>>, vector<1x256xf32>
    %c1 = arith.constant 1 : index
    %c0_8 = arith.constant 0 : index
    %5 = vector.load %arg2[%c1, %c0_8] : memref<2x256xf32, #tpu.memory_space<vmem>>, vector<1x256xf32>
    %cst_9 = arith.constant 3.000000e+00 : f32
    %6 = vector.broadcast %cst_9 : f32 to vector<1x256xf32>
    %7 = arith.cmpf oge, %5, %6 : vector<1x256xf32>
    %cst_10 = arith.constant 1.800000e+01 : f32
    %8 = vector.broadcast %cst_10 : f32 to vector<1x256xf32>
    %9 = arith.cmpf ole, %5, %8 : vector<1x256xf32>
    %10 = arith.andi %7, %9 : vector<1x256xi1>
    %11 = arith.extui %10 : vector<1x256xi1> to vector<1x256xi32>
    %12 = arith.sitofp %11 : vector<1x256xi32> to vector<1x256xf32>
    %cst_11 = arith.constant 2.000000e+00 : f32
    %13 = vector.broadcast %cst_11 : f32 to vector<1x256xf32>
    %14 = arith.cmpf oge, %5, %13 : vector<1x256xf32>
    %cst_12 = arith.constant 1.700000e+01 : f32
    %15 = vector.broadcast %cst_12 : f32 to vector<1x256xf32>
    %16 = arith.cmpf ole, %5, %15 : vector<1x256xf32>
    %17 = arith.andi %14, %16 : vector<1x256xi1>
    %18 = arith.extui %17 : vector<1x256xi1> to vector<1x256xi32>
    %19 = arith.sitofp %18 : vector<1x256xi32> to vector<1x256xf32>
    %cst_13 = arith.constant 1.000000e+00 : f32
    %20 = vector.broadcast %cst_13 : f32 to vector<1x256xf32>
    %21 = arith.cmpf oge, %5, %20 : vector<1x256xf32>
    %cst_14 = arith.constant 1.600000e+01 : f32
    %22 = vector.broadcast %cst_14 : f32 to vector<1x256xf32>
    %23 = arith.cmpf ole, %5, %22 : vector<1x256xf32>
    %24 = arith.andi %21, %23 : vector<1x256xi1>
    %25 = arith.extui %24 : vector<1x256xi1> to vector<1x256xi32>
    %26 = arith.sitofp %25 : vector<1x256xi32> to vector<1x256xf32>
    %cst_15 = arith.constant 0.000000e+00 : f32
    %27 = vector.broadcast %cst_15 : f32 to vector<1x256xf32>
    %28 = arith.cmpf oge, %5, %27 : vector<1x256xf32>
    %cst_16 = arith.constant 1.500000e+01 : f32
    %29 = vector.broadcast %cst_16 : f32 to vector<1x256xf32>
    %30 = arith.cmpf ole, %5, %29 : vector<1x256xf32>
    %31 = arith.andi %28, %30 : vector<1x256xi1>
    %32 = arith.extui %31 : vector<1x256xi1> to vector<1x256xi32>
    %33 = arith.sitofp %32 : vector<1x256xi32> to vector<1x256xf32>
    %cst_17 = arith.constant -1.000000e+00 : f32
    %34 = vector.broadcast %cst_17 : f32 to vector<1x256xf32>
    %35 = arith.cmpf oge, %5, %34 : vector<1x256xf32>
    %cst_18 = arith.constant 1.400000e+01 : f32
    %36 = vector.broadcast %cst_18 : f32 to vector<1x256xf32>
    %37 = arith.cmpf ole, %5, %36 : vector<1x256xf32>
    %38 = arith.andi %35, %37 : vector<1x256xi1>
    %39 = arith.extui %38 : vector<1x256xi1> to vector<1x256xi32>
    %40 = arith.sitofp %39 : vector<1x256xi32> to vector<1x256xf32>
    %cst_19 = arith.constant -2.000000e+00 : f32
    %41 = vector.broadcast %cst_19 : f32 to vector<1x256xf32>
    %42 = arith.cmpf oge, %5, %41 : vector<1x256xf32>
    %cst_20 = arith.constant 1.300000e+01 : f32
    %43 = vector.broadcast %cst_20 : f32 to vector<1x256xf32>
    %44 = arith.cmpf ole, %5, %43 : vector<1x256xf32>
    %45 = arith.andi %42, %44 : vector<1x256xi1>
    %46 = arith.extui %45 : vector<1x256xi1> to vector<1x256xi32>
    %47 = arith.sitofp %46 : vector<1x256xi32> to vector<1x256xf32>
    %cst_21 = arith.constant -3.000000e+00 : f32
    %48 = vector.broadcast %cst_21 : f32 to vector<1x256xf32>
    %49 = arith.cmpf oge, %5, %48 : vector<1x256xf32>
    %cst_22 = arith.constant 1.200000e+01 : f32
    %50 = vector.broadcast %cst_22 : f32 to vector<1x256xf32>
    %51 = arith.cmpf ole, %5, %50 : vector<1x256xf32>
    %52 = arith.andi %49, %51 : vector<1x256xi1>
    %53 = arith.extui %52 : vector<1x256xi1> to vector<1x256xi32>
    %54 = arith.sitofp %53 : vector<1x256xi32> to vector<1x256xf32>
    %cst_23 = arith.constant 0.000000e+00 : f32
    %55 = vector.broadcast %cst_23 : f32 to vector<1x256xf32>
    %c0_i32 = arith.constant 0 : i32
    %56 = arith.sitofp %c0_i32 : i32 to f32
    %cst_24 = arith.constant 3.000000e+00 : f32
    %57 = arith.subf %cst_24, %56 : f32
    %58 = vector.broadcast %57 : f32 to vector<1x256xf32>
    %59 = arith.cmpf oge, %4, %58 : vector<1x256xf32>
    %cst_25 = arith.constant 1.800000e+01 : f32
    %60 = arith.subf %cst_25, %56 : f32
    %61 = vector.broadcast %60 : f32 to vector<1x256xf32>
    %62 = arith.cmpf ole, %4, %61 : vector<1x256xf32>
    %63 = arith.andi %59, %62 : vector<1x256xi1>
    %64 = arith.extui %63 : vector<1x256xi1> to vector<1x256xi32>
    %65 = arith.sitofp %64 : vector<1x256xi32> to vector<1x256xf32>
    %c3_i32 = arith.constant 3 : i32
    %66 = arith.subi %c3_i32, %c0_i32 : i32
    %c16_i32 = arith.constant 16 : i32
    %67 = arith.muli %66, %c16_i32 : i32
    %cst_26 = arith.constant 0.000000e+00 : f32
    %68 = vector.broadcast %cst_26 : f32 to vector<1x256xf32>
    %c3_i32_27 = arith.constant 3 : i32
    %69 = arith.addi %67, %c3_i32_27 : i32
    %c256_i32 = arith.constant 256 : i32
    %c0_i32_28 = arith.constant 0 : i32
    %70 = arith.cmpi eq, %c256_i32, %c0_i32_28 : i32
    %c1_i32 = arith.constant 1 : i32
    %71 = arith.select %70, %c1_i32, %c256_i32 : i32
    %72 = arith.remsi %69, %71 : i32
    %c0_i32_29 = arith.constant 0 : i32
    %73 = arith.cmpi ne, %72, %c0_i32_29 : i32
    %c0_i32_30 = arith.constant 0 : i32
    %74 = arith.cmpi slt, %72, %c0_i32_30 : i32
    %c0_i32_31 = arith.constant 0 : i32
    %75 = arith.cmpi slt, %71, %c0_i32_31 : i32
    %76 = arith.xori %74, %75 : i1
    %77 = arith.andi %76, %73 : i1
    %78 = arith.addi %72, %71 : i32
    %79 = arith.select %77, %78, %72 : i32
    %c7_i32 = arith.constant 7 : i32
    %80 = arith.muli %c0_i32, %c7_i32 : i32
    %c0_i32_32 = arith.constant 0 : i32
    %81 = arith.addi %80, %c0_i32_32 : i32
    %82 = arith.index_cast %81 : i32 to index
    %83 = memref.load %arg3[%82] : memref<98xf32, #tpu.memory_space<smem>>
    %c7_i32_33 = arith.constant 7 : i32
    %84 = arith.muli %c0_i32, %c7_i32_33 : i32
    %c49_i32 = arith.constant 49 : i32
    %85 = arith.addi %c49_i32, %84 : i32
    %c0_i32_34 = arith.constant 0 : i32
    %86 = arith.addi %85, %c0_i32_34 : i32
    %87 = arith.index_cast %86 : i32 to index
    %88 = memref.load %arg3[%87] : memref<98xf32, #tpu.memory_space<smem>>
    %89 = tpu.dynamic_rotate %1 by %79 dim 1 : vector<1x256xf32>, i32 -> vector<1x256xf32>
    %90 = vector.broadcast %83 : f32 to vector<1x256xf32>
    %91 = arith.mulf %89, %90 : vector<1x256xf32>
    %92 = tpu.dynamic_rotate %3 by %79 dim 1 : vector<1x256xf32>, i32 -> vector<1x256xf32>
    %93 = vector.broadcast %88 : f32 to vector<1x256xf32>
    %94 = arith.mulf %92, %93 : vector<1x256xf32>
    %95 = arith.addf %91, %94 : vector<1x256xf32>
    %96 = arith.mulf %95, %12 : vector<1x256xf32>
    %97 = arith.addf %68, %96 : vector<1x256xf32>
    %c2_i32 = arith.constant 2 : i32
    %98 = arith.addi %67, %c2_i32 : i32
    %c256_i32_35 = arith.constant 256 : i32
    %c0_i32_36 = arith.constant 0 : i32
    %99 = arith.cmpi eq, %c256_i32_35, %c0_i32_36 : i32
    %c1_i32_37 = arith.constant 1 : i32
    %100 = arith.select %99, %c1_i32_37, %c256_i32_35 : i32
    %101 = arith.remsi %98, %100 : i32
    %c0_i32_38 = arith.constant 0 : i32
    %102 = arith.cmpi ne, %101, %c0_i32_38 : i32
    %c0_i32_39 = arith.constant 0 : i32
    %103 = arith.cmpi slt, %101, %c0_i32_39 : i32
    %c0_i32_40 = arith.constant 0 : i32
    %104 = arith.cmpi slt, %100, %c0_i32_40 : i32
    %105 = arith.xori %103, %104 : i1
    %106 = arith.andi %105, %102 : i1
    %107 = arith.addi %101, %100 : i32
    %108 = arith.select %106, %107, %101 : i32
    %c7_i32_41 = arith.constant 7 : i32
    %109 = arith.muli %c0_i32, %c7_i32_41 : i32
    %c1_i32_42 = arith.constant 1 : i32
    %110 = arith.addi %109, %c1_i32_42 : i32
    %111 = arith.index_cast %110 : i32 to index
    %112 = memref.load %arg3[%111] : memref<98xf32, #tpu.memory_space<smem>>
    %c7_i32_43 = arith.constant 7 : i32
    %113 = arith.muli %c0_i32, %c7_i32_43 : i32
    %c49_i32_44 = arith.constant 49 : i32
    %114 = arith.addi %c49_i32_44, %113 : i32
    %c1_i32_45 = arith.constant 1 : i32
    %115 = arith.addi %114, %c1_i32_45 : i32
    %116 = arith.index_cast %115 : i32 to index
    %117 = memref.load %arg3[%116] : memref<98xf32, #tpu.memory_space<smem>>
    %118 = tpu.dynamic_rotate %1 by %108 dim 1 : vector<1x256xf32>, i32 -> vector<1x256xf32>
    %119 = vector.broadcast %112 : f32 to vector<1x256xf32>
    %120 = arith.mulf %118, %119 : vector<1x256xf32>
    %121 = tpu.dynamic_rotate %3 by %108 dim 1 : vector<1x256xf32>, i32 -> vector<1x256xf32>
    %122 = vector.broadcast %117 : f32 to vector<1x256xf32>
    %123 = arith.mulf %121, %122 : vector<1x256xf32>
    %124 = arith.addf %120, %123 : vector<1x256xf32>
    %125 = arith.mulf %124, %19 : vector<1x256xf32>
    %126 = arith.addf %97, %125 : vector<1x256xf32>
    %c1_i32_46 = arith.constant 1 : i32
    %127 = arith.addi %67, %c1_i32_46 : i32
    %c256_i32_47 = arith.constant 256 : i32
    %c0_i32_48 = arith.constant 0 : i32
    %128 = arith.cmpi eq, %c256_i32_47, %c0_i32_48 : i32
    %c1_i32_49 = arith.constant 1 : i32
    %129 = arith.select %128, %c1_i32_49, %c256_i32_47 : i32
    %130 = arith.remsi %127, %129 : i32
    %c0_i32_50 = arith.constant 0 : i32
    %131 = arith.cmpi ne, %130, %c0_i32_50 : i32
    %c0_i32_51 = arith.constant 0 : i32
    %132 = arith.cmpi slt, %130, %c0_i32_51 : i32
    %c0_i32_52 = arith.constant 0 : i32
    %133 = arith.cmpi slt, %129, %c0_i32_52 : i32
    %134 = arith.xori %132, %133 : i1
    %135 = arith.andi %134, %131 : i1
    %136 = arith.addi %130, %129 : i32
    %137 = arith.select %135, %136, %130 : i32
    %c7_i32_53 = arith.constant 7 : i32
    %138 = arith.muli %c0_i32, %c7_i32_53 : i32
    %c2_i32_54 = arith.constant 2 : i32
    %139 = arith.addi %138, %c2_i32_54 : i32
    %140 = arith.index_cast %139 : i32 to index
    %141 = memref.load %arg3[%140] : memref<98xf32, #tpu.memory_space<smem>>
    %c7_i32_55 = arith.constant 7 : i32
    %142 = arith.muli %c0_i32, %c7_i32_55 : i32
    %c49_i32_56 = arith.constant 49 : i32
    %143 = arith.addi %c49_i32_56, %142 : i32
    %c2_i32_57 = arith.constant 2 : i32
    %144 = arith.addi %143, %c2_i32_57 : i32
    %145 = arith.index_cast %144 : i32 to index
    %146 = memref.load %arg3[%145] : memref<98xf32, #tpu.memory_space<smem>>
    %147 = tpu.dynamic_rotate %1 by %137 dim 1 : vector<1x256xf32>, i32 -> vector<1x256xf32>
    %148 = vector.broadcast %141 : f32 to vector<1x256xf32>
    %149 = arith.mulf %147, %148 : vector<1x256xf32>
    %150 = tpu.dynamic_rotate %3 by %137 dim 1 : vector<1x256xf32>, i32 -> vector<1x256xf32>
    %151 = vector.broadcast %146 : f32 to vector<1x256xf32>
    %152 = arith.mulf %150, %151 : vector<1x256xf32>
    %153 = arith.addf %149, %152 : vector<1x256xf32>
    %154 = arith.mulf %153, %26 : vector<1x256xf32>
    %155 = arith.addf %126, %154 : vector<1x256xf32>
    %c0_i32_58 = arith.constant 0 : i32
    %156 = arith.addi %67, %c0_i32_58 : i32
    %c256_i32_59 = arith.constant 256 : i32
    %c0_i32_60 = arith.constant 0 : i32
    %157 = arith.cmpi eq, %c256_i32_59, %c0_i32_60 : i32
    %c1_i32_61 = arith.constant 1 : i32
    %158 = arith.select %157, %c1_i32_61, %c256_i32_59 : i32
    %159 = arith.remsi %156, %158 : i32
    %c0_i32_62 = arith.constant 0 : i32
    %160 = arith.cmpi ne, %159, %c0_i32_62 : i32
    %c0_i32_63 = arith.constant 0 : i32
    %161 = arith.cmpi slt, %159, %c0_i32_63 : i32
    %c0_i32_64 = arith.constant 0 : i32
    %162 = arith.cmpi slt, %158, %c0_i32_64 : i32
    %163 = arith.xori %161, %162 : i1
    %164 = arith.andi %163, %160 : i1
    %165 = arith.addi %159, %158 : i32
    %166 = arith.select %164, %165, %159 : i32
    %c7_i32_65 = arith.constant 7 : i32
    %167 = arith.muli %c0_i32, %c7_i32_65 : i32
    %c3_i32_66 = arith.constant 3 : i32
    %168 = arith.addi %167, %c3_i32_66 : i32
    %169 = arith.index_cast %168 : i32 to index
    %170 = memref.load %arg3[%169] : memref<98xf32, #tpu.memory_space<smem>>
    %c7_i32_67 = arith.constant 7 : i32
    %171 = arith.muli %c0_i32, %c7_i32_67 : i32
    %c49_i32_68 = arith.constant 49 : i32
    %172 = arith.addi %c49_i32_68, %171 : i32
    %c3_i32_69 = arith.constant 3 : i32
    %173 = arith.addi %172, %c3_i32_69 : i32
    %174 = arith.index_cast %173 : i32 to index
    %175 = memref.load %arg3[%174] : memref<98xf32, #tpu.memory_space<smem>>
    %176 = tpu.dynamic_rotate %1 by %166 dim 1 : vector<1x256xf32>, i32 -> vector<1x256xf32>
    %177 = vector.broadcast %170 : f32 to vector<1x256xf32>
    %178 = arith.mulf %176, %177 : vector<1x256xf32>
    %179 = tpu.dynamic_rotate %3 by %166 dim 1 : vector<1x256xf32>, i32 -> vector<1x256xf32>
    %180 = vector.broadcast %175 : f32 to vector<1x256xf32>
    %181 = arith.mulf %179, %180 : vector<1x256xf32>
    %182 = arith.addf %178, %181 : vector<1x256xf32>
    %183 = arith.mulf %182, %33 : vector<1x256xf32>
    %184 = arith.addf %155, %183 : vector<1x256xf32>
    %c-1_i32 = arith.constant -1 : i32
    %185 = arith.addi %67, %c-1_i32 : i32
    %c256_i32_70 = arith.constant 256 : i32
    %c0_i32_71 = arith.constant 0 : i32
    %186 = arith.cmpi eq, %c256_i32_70, %c0_i32_71 : i32
    %c1_i32_72 = arith.constant 1 : i32
    %187 = arith.select %186, %c1_i32_72, %c256_i32_70 : i32
    %188 = arith.remsi %185, %187 : i32
    %c0_i32_73 = arith.constant 0 : i32
    %189 = arith.cmpi ne, %188, %c0_i32_73 : i32
    %c0_i32_74 = arith.constant 0 : i32
    %190 = arith.cmpi slt, %188, %c0_i32_74 : i32
    %c0_i32_75 = arith.constant 0 : i32
    %191 = arith.cmpi slt, %187, %c0_i32_75 : i32
    %192 = arith.xori %190, %191 : i1
    %193 = arith.andi %192, %189 : i1
    %194 = arith.addi %188, %187 : i32
    %195 = arith.select %193, %194, %188 : i32
    %c7_i32_76 = arith.constant 7 : i32
    %196 = arith.muli %c0_i32, %c7_i32_76 : i32
    %c4_i32 = arith.constant 4 : i32
    %197 = arith.addi %196, %c4_i32 : i32
    %198 = arith.index_cast %197 : i32 to index
    %199 = memref.load %arg3[%198] : memref<98xf32, #tpu.memory_space<smem>>
    %c7_i32_77 = arith.constant 7 : i32
    %200 = arith.muli %c0_i32, %c7_i32_77 : i32
    %c49_i32_78 = arith.constant 49 : i32
    %201 = arith.addi %c49_i32_78, %200 : i32
    %c4_i32_79 = arith.constant 4 : i32
    %202 = arith.addi %201, %c4_i32_79 : i32
    %203 = arith.index_cast %202 : i32 to index
    %204 = memref.load %arg3[%203] : memref<98xf32, #tpu.memory_space<smem>>
    %205 = tpu.dynamic_rotate %1 by %195 dim 1 : vector<1x256xf32>, i32 -> vector<1x256xf32>
    %206 = vector.broadcast %199 : f32 to vector<1x256xf32>
    %207 = arith.mulf %205, %206 : vector<1x256xf32>
    %208 = tpu.dynamic_rotate %3 by %195 dim 1 : vector<1x256xf32>, i32 -> vector<1x256xf32>
    %209 = vector.broadcast %204 : f32 to vector<1x256xf32>
    %210 = arith.mulf %208, %209 : vector<1x256xf32>
    %211 = arith.addf %207, %210 : vector<1x256xf32>
    %212 = arith.mulf %211, %40 : vector<1x256xf32>
    %213 = arith.addf %184, %212 : vector<1x256xf32>
    %c-2_i32 = arith.constant -2 : i32
    %214 = arith.addi %67, %c-2_i32 : i32
    %c256_i32_80 = arith.constant 256 : i32
    %c0_i32_81 = arith.constant 0 : i32
    %215 = arith.cmpi eq, %c256_i32_80, %c0_i32_81 : i32
    %c1_i32_82 = arith.constant 1 : i32
    %216 = arith.select %215, %c1_i32_82, %c256_i32_80 : i32
    %217 = arith.remsi %214, %216 : i32
    %c0_i32_83 = arith.constant 0 : i32
    %218 = arith.cmpi ne, %217, %c0_i32_83 : i32
    %c0_i32_84 = arith.constant 0 : i32
    %219 = arith.cmpi slt, %217, %c0_i32_84 : i32
    %c0_i32_85 = arith.constant 0 : i32
    %220 = arith.cmpi slt, %216, %c0_i32_85 : i32
    %221 = arith.xori %219, %220 : i1
    %222 = arith.andi %221, %218 : i1
    %223 = arith.addi %217, %216 : i32
    %224 = arith.select %222, %223, %217 : i32
    %c7_i32_86 = arith.constant 7 : i32
    %225 = arith.muli %c0_i32, %c7_i32_86 : i32
    %c5_i32 = arith.constant 5 : i32
    %226 = arith.addi %225, %c5_i32 : i32
    %227 = arith.index_cast %226 : i32 to index
    %228 = memref.load %arg3[%227] : memref<98xf32, #tpu.memory_space<smem>>
    %c7_i32_87 = arith.constant 7 : i32
    %229 = arith.muli %c0_i32, %c7_i32_87 : i32
    %c49_i32_88 = arith.constant 49 : i32
    %230 = arith.addi %c49_i32_88, %229 : i32
    %c5_i32_89 = arith.constant 5 : i32
    %231 = arith.addi %230, %c5_i32_89 : i32
    %232 = arith.index_cast %231 : i32 to index
    %233 = memref.load %arg3[%232] : memref<98xf32, #tpu.memory_space<smem>>
    %234 = tpu.dynamic_rotate %1 by %224 dim 1 : vector<1x256xf32>, i32 -> vector<1x256xf32>
    %235 = vector.broadcast %228 : f32 to vector<1x256xf32>
    %236 = arith.mulf %234, %235 : vector<1x256xf32>
    %237 = tpu.dynamic_rotate %3 by %224 dim 1 : vector<1x256xf32>, i32 -> vector<1x256xf32>
    %238 = vector.broadcast %233 : f32 to vector<1x256xf32>
    %239 = arith.mulf %237, %238 : vector<1x256xf32>
    %240 = arith.addf %236, %239 : vector<1x256xf32>
    %241 = arith.mulf %240, %47 : vector<1x256xf32>
    %242 = arith.addf %213, %241 : vector<1x256xf32>
    %c-3_i32 = arith.constant -3 : i32
    %243 = arith.addi %67, %c-3_i32 : i32
    %c256_i32_90 = arith.constant 256 : i32
    %c0_i32_91 = arith.constant 0 : i32
    %244 = arith.cmpi eq, %c256_i32_90, %c0_i32_91 : i32
    %c1_i32_92 = arith.constant 1 : i32
    %245 = arith.select %244, %c1_i32_92, %c256_i32_90 : i32
    %246 = arith.remsi %243, %245 : i32
    %c0_i32_93 = arith.constant 0 : i32
    %247 = arith.cmpi ne, %246, %c0_i32_93 : i32
    %c0_i32_94 = arith.constant 0 : i32
    %248 = arith.cmpi slt, %246, %c0_i32_94 : i32
    %c0_i32_95 = arith.constant 0 : i32
    %249 = arith.cmpi slt, %245, %c0_i32_95 : i32
    %250 = arith.xori %248, %249 : i1
    %251 = arith.andi %250, %247 : i1
    %252 = arith.addi %246, %245 : i32
    %253 = arith.select %251, %252, %246 : i32
    %c7_i32_96 = arith.constant 7 : i32
    %254 = arith.muli %c0_i32, %c7_i32_96 : i32
    %c6_i32 = arith.constant 6 : i32
    %255 = arith.addi %254, %c6_i32 : i32
    %256 = arith.index_cast %255 : i32 to index
    %257 = memref.load %arg3[%256] : memref<98xf32, #tpu.memory_space<smem>>
    %c7_i32_97 = arith.constant 7 : i32
    %258 = arith.muli %c0_i32, %c7_i32_97 : i32
    %c49_i32_98 = arith.constant 49 : i32
    %259 = arith.addi %c49_i32_98, %258 : i32
    %c6_i32_99 = arith.constant 6 : i32
    %260 = arith.addi %259, %c6_i32_99 : i32
    %261 = arith.index_cast %260 : i32 to index
    %262 = memref.load %arg3[%261] : memref<98xf32, #tpu.memory_space<smem>>
    %263 = tpu.dynamic_rotate %1 by %253 dim 1 : vector<1x256xf32>, i32 -> vector<1x256xf32>
    %264 = vector.broadcast %257 : f32 to vector<1x256xf32>
    %265 = arith.mulf %263, %264 : vector<1x256xf32>
    %266 = tpu.dynamic_rotate %3 by %253 dim 1 : vector<1x256xf32>, i32 -> vector<1x256xf32>
    %267 = vector.broadcast %262 : f32 to vector<1x256xf32>
    %268 = arith.mulf %266, %267 : vector<1x256xf32>
    %269 = arith.addf %265, %268 : vector<1x256xf32>
    %270 = arith.mulf %269, %54 : vector<1x256xf32>
    %271 = arith.addf %242, %270 : vector<1x256xf32>
    %272 = arith.mulf %271, %65 : vector<1x256xf32>
    %273 = arith.addf %55, %272 : vector<1x256xf32>
    %c1_i32_100 = arith.constant 1 : i32
    %274 = arith.sitofp %c1_i32_100 : i32 to f32
    %cst_101 = arith.constant 3.000000e+00 : f32
    %275 = arith.subf %cst_101, %274 : f32
    %276 = vector.broadcast %275 : f32 to vector<1x256xf32>
    %277 = arith.cmpf oge, %4, %276 : vector<1x256xf32>
    %cst_102 = arith.constant 1.800000e+01 : f32
    %278 = arith.subf %cst_102, %274 : f32
    %279 = vector.broadcast %278 : f32 to vector<1x256xf32>
    %280 = arith.cmpf ole, %4, %279 : vector<1x256xf32>
    %281 = arith.andi %277, %280 : vector<1x256xi1>
    %282 = arith.extui %281 : vector<1x256xi1> to vector<1x256xi32>
    %283 = arith.sitofp %282 : vector<1x256xi32> to vector<1x256xf32>
    %c3_i32_103 = arith.constant 3 : i32
    %284 = arith.subi %c3_i32_103, %c1_i32_100 : i32
    %c16_i32_104 = arith.constant 16 : i32
    %285 = arith.muli %284, %c16_i32_104 : i32
    %cst_105 = arith.constant 0.000000e+00 : f32
    %286 = vector.broadcast %cst_105 : f32 to vector<1x256xf32>
    %c3_i32_106 = arith.constant 3 : i32
    %287 = arith.addi %285, %c3_i32_106 : i32
    %c256_i32_107 = arith.constant 256 : i32
    %c0_i32_108 = arith.constant 0 : i32
    %288 = arith.cmpi eq, %c256_i32_107, %c0_i32_108 : i32
    %c1_i32_109 = arith.constant 1 : i32
    %289 = arith.select %288, %c1_i32_109, %c256_i32_107 : i32
    %290 = arith.remsi %287, %289 : i32
    %c0_i32_110 = arith.constant 0 : i32
    %291 = arith.cmpi ne, %290, %c0_i32_110 : i32
    %c0_i32_111 = arith.constant 0 : i32
    %292 = arith.cmpi slt, %290, %c0_i32_111 : i32
    %c0_i32_112 = arith.constant 0 : i32
    %293 = arith.cmpi slt, %289, %c0_i32_112 : i32
    %294 = arith.xori %292, %293 : i1
    %295 = arith.andi %294, %291 : i1
    %296 = arith.addi %290, %289 : i32
    %297 = arith.select %295, %296, %290 : i32
    %c7_i32_113 = arith.constant 7 : i32
    %298 = arith.muli %c1_i32_100, %c7_i32_113 : i32
    %c0_i32_114 = arith.constant 0 : i32
    %299 = arith.addi %298, %c0_i32_114 : i32
    %300 = arith.index_cast %299 : i32 to index
    %301 = memref.load %arg3[%300] : memref<98xf32, #tpu.memory_space<smem>>
    %c7_i32_115 = arith.constant 7 : i32
    %302 = arith.muli %c1_i32_100, %c7_i32_115 : i32
    %c49_i32_116 = arith.constant 49 : i32
    %303 = arith.addi %c49_i32_116, %302 : i32
    %c0_i32_117 = arith.constant 0 : i32
    %304 = arith.addi %303, %c0_i32_117 : i32
    %305 = arith.index_cast %304 : i32 to index
    %306 = memref.load %arg3[%305] : memref<98xf32, #tpu.memory_space<smem>>
    %307 = tpu.dynamic_rotate %1 by %297 dim 1 : vector<1x256xf32>, i32 -> vector<1x256xf32>
    %308 = vector.broadcast %301 : f32 to vector<1x256xf32>
    %309 = arith.mulf %307, %308 : vector<1x256xf32>
    %310 = tpu.dynamic_rotate %3 by %297 dim 1 : vector<1x256xf32>, i32 -> vector<1x256xf32>
    %311 = vector.broadcast %306 : f32 to vector<1x256xf32>
    %312 = arith.mulf %310, %311 : vector<1x256xf32>
    %313 = arith.addf %309, %312 : vector<1x256xf32>
    %314 = arith.mulf %313, %12 : vector<1x256xf32>
    %315 = arith.addf %286, %314 : vector<1x256xf32>
    %c2_i32_118 = arith.constant 2 : i32
    %316 = arith.addi %285, %c2_i32_118 : i32
    %c256_i32_119 = arith.constant 256 : i32
    %c0_i32_120 = arith.constant 0 : i32
    %317 = arith.cmpi eq, %c256_i32_119, %c0_i32_120 : i32
    %c1_i32_121 = arith.constant 1 : i32
    %318 = arith.select %317, %c1_i32_121, %c256_i32_119 : i32
    %319 = arith.remsi %316, %318 : i32
    %c0_i32_122 = arith.constant 0 : i32
    %320 = arith.cmpi ne, %319, %c0_i32_122 : i32
    %c0_i32_123 = arith.constant 0 : i32
    %321 = arith.cmpi slt, %319, %c0_i32_123 : i32
    %c0_i32_124 = arith.constant 0 : i32
    %322 = arith.cmpi slt, %318, %c0_i32_124 : i32
    %323 = arith.xori %321, %322 : i1
    %324 = arith.andi %323, %320 : i1
    %325 = arith.addi %319, %318 : i32
    %326 = arith.select %324, %325, %319 : i32
    %c7_i32_125 = arith.constant 7 : i32
    %327 = arith.muli %c1_i32_100, %c7_i32_125 : i32
    %c1_i32_126 = arith.constant 1 : i32
    %328 = arith.addi %327, %c1_i32_126 : i32
    %329 = arith.index_cast %328 : i32 to index
    %330 = memref.load %arg3[%329] : memref<98xf32, #tpu.memory_space<smem>>
    %c7_i32_127 = arith.constant 7 : i32
    %331 = arith.muli %c1_i32_100, %c7_i32_127 : i32
    %c49_i32_128 = arith.constant 49 : i32
    %332 = arith.addi %c49_i32_128, %331 : i32
    %c1_i32_129 = arith.constant 1 : i32
    %333 = arith.addi %332, %c1_i32_129 : i32
    %334 = arith.index_cast %333 : i32 to index
    %335 = memref.load %arg3[%334] : memref<98xf32, #tpu.memory_space<smem>>
    %336 = tpu.dynamic_rotate %1 by %326 dim 1 : vector<1x256xf32>, i32 -> vector<1x256xf32>
    %337 = vector.broadcast %330 : f32 to vector<1x256xf32>
    %338 = arith.mulf %336, %337 : vector<1x256xf32>
    %339 = tpu.dynamic_rotate %3 by %326 dim 1 : vector<1x256xf32>, i32 -> vector<1x256xf32>
    %340 = vector.broadcast %335 : f32 to vector<1x256xf32>
    %341 = arith.mulf %339, %340 : vector<1x256xf32>
    %342 = arith.addf %338, %341 : vector<1x256xf32>
    %343 = arith.mulf %342, %19 : vector<1x256xf32>
    %344 = arith.addf %315, %343 : vector<1x256xf32>
    %c1_i32_130 = arith.constant 1 : i32
    %345 = arith.addi %285, %c1_i32_130 : i32
    %c256_i32_131 = arith.constant 256 : i32
    %c0_i32_132 = arith.constant 0 : i32
    %346 = arith.cmpi eq, %c256_i32_131, %c0_i32_132 : i32
    %c1_i32_133 = arith.constant 1 : i32
    %347 = arith.select %346, %c1_i32_133, %c256_i32_131 : i32
    %348 = arith.remsi %345, %347 : i32
    %c0_i32_134 = arith.constant 0 : i32
    %349 = arith.cmpi ne, %348, %c0_i32_134 : i32
    %c0_i32_135 = arith.constant 0 : i32
    %350 = arith.cmpi slt, %348, %c0_i32_135 : i32
    %c0_i32_136 = arith.constant 0 : i32
    %351 = arith.cmpi slt, %347, %c0_i32_136 : i32
    %352 = arith.xori %350, %351 : i1
    %353 = arith.andi %352, %349 : i1
    %354 = arith.addi %348, %347 : i32
    %355 = arith.select %353, %354, %348 : i32
    %c7_i32_137 = arith.constant 7 : i32
    %356 = arith.muli %c1_i32_100, %c7_i32_137 : i32
    %c2_i32_138 = arith.constant 2 : i32
    %357 = arith.addi %356, %c2_i32_138 : i32
    %358 = arith.index_cast %357 : i32 to index
    %359 = memref.load %arg3[%358] : memref<98xf32, #tpu.memory_space<smem>>
    %c7_i32_139 = arith.constant 7 : i32
    %360 = arith.muli %c1_i32_100, %c7_i32_139 : i32
    %c49_i32_140 = arith.constant 49 : i32
    %361 = arith.addi %c49_i32_140, %360 : i32
    %c2_i32_141 = arith.constant 2 : i32
    %362 = arith.addi %361, %c2_i32_141 : i32
    %363 = arith.index_cast %362 : i32 to index
    %364 = memref.load %arg3[%363] : memref<98xf32, #tpu.memory_space<smem>>
    %365 = tpu.dynamic_rotate %1 by %355 dim 1 : vector<1x256xf32>, i32 -> vector<1x256xf32>
    %366 = vector.broadcast %359 : f32 to vector<1x256xf32>
    %367 = arith.mulf %365, %366 : vector<1x256xf32>
    %368 = tpu.dynamic_rotate %3 by %355 dim 1 : vector<1x256xf32>, i32 -> vector<1x256xf32>
    %369 = vector.broadcast %364 : f32 to vector<1x256xf32>
    %370 = arith.mulf %368, %369 : vector<1x256xf32>
    %371 = arith.addf %367, %370 : vector<1x256xf32>
    %372 = arith.mulf %371, %26 : vector<1x256xf32>
    %373 = arith.addf %344, %372 : vector<1x256xf32>
    %c0_i32_142 = arith.constant 0 : i32
    %374 = arith.addi %285, %c0_i32_142 : i32
    %c256_i32_143 = arith.constant 256 : i32
    %c0_i32_144 = arith.constant 0 : i32
    %375 = arith.cmpi eq, %c256_i32_143, %c0_i32_144 : i32
    %c1_i32_145 = arith.constant 1 : i32
    %376 = arith.select %375, %c1_i32_145, %c256_i32_143 : i32
    %377 = arith.remsi %374, %376 : i32
    %c0_i32_146 = arith.constant 0 : i32
    %378 = arith.cmpi ne, %377, %c0_i32_146 : i32
    %c0_i32_147 = arith.constant 0 : i32
    %379 = arith.cmpi slt, %377, %c0_i32_147 : i32
    %c0_i32_148 = arith.constant 0 : i32
    %380 = arith.cmpi slt, %376, %c0_i32_148 : i32
    %381 = arith.xori %379, %380 : i1
    %382 = arith.andi %381, %378 : i1
    %383 = arith.addi %377, %376 : i32
    %384 = arith.select %382, %383, %377 : i32
    %c7_i32_149 = arith.constant 7 : i32
    %385 = arith.muli %c1_i32_100, %c7_i32_149 : i32
    %c3_i32_150 = arith.constant 3 : i32
    %386 = arith.addi %385, %c3_i32_150 : i32
    %387 = arith.index_cast %386 : i32 to index
    %388 = memref.load %arg3[%387] : memref<98xf32, #tpu.memory_space<smem>>
    %c7_i32_151 = arith.constant 7 : i32
    %389 = arith.muli %c1_i32_100, %c7_i32_151 : i32
    %c49_i32_152 = arith.constant 49 : i32
    %390 = arith.addi %c49_i32_152, %389 : i32
    %c3_i32_153 = arith.constant 3 : i32
    %391 = arith.addi %390, %c3_i32_153 : i32
    %392 = arith.index_cast %391 : i32 to index
    %393 = memref.load %arg3[%392] : memref<98xf32, #tpu.memory_space<smem>>
    %394 = tpu.dynamic_rotate %1 by %384 dim 1 : vector<1x256xf32>, i32 -> vector<1x256xf32>
    %395 = vector.broadcast %388 : f32 to vector<1x256xf32>
    %396 = arith.mulf %394, %395 : vector<1x256xf32>
    %397 = tpu.dynamic_rotate %3 by %384 dim 1 : vector<1x256xf32>, i32 -> vector<1x256xf32>
    %398 = vector.broadcast %393 : f32 to vector<1x256xf32>
    %399 = arith.mulf %397, %398 : vector<1x256xf32>
    %400 = arith.addf %396, %399 : vector<1x256xf32>
    %401 = arith.mulf %400, %33 : vector<1x256xf32>
    %402 = arith.addf %373, %401 : vector<1x256xf32>
    %c-1_i32_154 = arith.constant -1 : i32
    %403 = arith.addi %285, %c-1_i32_154 : i32
    %c256_i32_155 = arith.constant 256 : i32
    %c0_i32_156 = arith.constant 0 : i32
    %404 = arith.cmpi eq, %c256_i32_155, %c0_i32_156 : i32
    %c1_i32_157 = arith.constant 1 : i32
    %405 = arith.select %404, %c1_i32_157, %c256_i32_155 : i32
    %406 = arith.remsi %403, %405 : i32
    %c0_i32_158 = arith.constant 0 : i32
    %407 = arith.cmpi ne, %406, %c0_i32_158 : i32
    %c0_i32_159 = arith.constant 0 : i32
    %408 = arith.cmpi slt, %406, %c0_i32_159 : i32
    %c0_i32_160 = arith.constant 0 : i32
    %409 = arith.cmpi slt, %405, %c0_i32_160 : i32
    %410 = arith.xori %408, %409 : i1
    %411 = arith.andi %410, %407 : i1
    %412 = arith.addi %406, %405 : i32
    %413 = arith.select %411, %412, %406 : i32
    %c7_i32_161 = arith.constant 7 : i32
    %414 = arith.muli %c1_i32_100, %c7_i32_161 : i32
    %c4_i32_162 = arith.constant 4 : i32
    %415 = arith.addi %414, %c4_i32_162 : i32
    %416 = arith.index_cast %415 : i32 to index
    %417 = memref.load %arg3[%416] : memref<98xf32, #tpu.memory_space<smem>>
    %c7_i32_163 = arith.constant 7 : i32
    %418 = arith.muli %c1_i32_100, %c7_i32_163 : i32
    %c49_i32_164 = arith.constant 49 : i32
    %419 = arith.addi %c49_i32_164, %418 : i32
    %c4_i32_165 = arith.constant 4 : i32
    %420 = arith.addi %419, %c4_i32_165 : i32
    %421 = arith.index_cast %420 : i32 to index
    %422 = memref.load %arg3[%421] : memref<98xf32, #tpu.memory_space<smem>>
    %423 = tpu.dynamic_rotate %1 by %413 dim 1 : vector<1x256xf32>, i32 -> vector<1x256xf32>
    %424 = vector.broadcast %417 : f32 to vector<1x256xf32>
    %425 = arith.mulf %423, %424 : vector<1x256xf32>
    %426 = tpu.dynamic_rotate %3 by %413 dim 1 : vector<1x256xf32>, i32 -> vector<1x256xf32>
    %427 = vector.broadcast %422 : f32 to vector<1x256xf32>
    %428 = arith.mulf %426, %427 : vector<1x256xf32>
    %429 = arith.addf %425, %428 : vector<1x256xf32>
    %430 = arith.mulf %429, %40 : vector<1x256xf32>
    %431 = arith.addf %402, %430 : vector<1x256xf32>
    %c-2_i32_166 = arith.constant -2 : i32
    %432 = arith.addi %285, %c-2_i32_166 : i32
    %c256_i32_167 = arith.constant 256 : i32
    %c0_i32_168 = arith.constant 0 : i32
    %433 = arith.cmpi eq, %c256_i32_167, %c0_i32_168 : i32
    %c1_i32_169 = arith.constant 1 : i32
    %434 = arith.select %433, %c1_i32_169, %c256_i32_167 : i32
    %435 = arith.remsi %432, %434 : i32
    %c0_i32_170 = arith.constant 0 : i32
    %436 = arith.cmpi ne, %435, %c0_i32_170 : i32
    %c0_i32_171 = arith.constant 0 : i32
    %437 = arith.cmpi slt, %435, %c0_i32_171 : i32
    %c0_i32_172 = arith.constant 0 : i32
    %438 = arith.cmpi slt, %434, %c0_i32_172 : i32
    %439 = arith.xori %437, %438 : i1
    %440 = arith.andi %439, %436 : i1
    %441 = arith.addi %435, %434 : i32
    %442 = arith.select %440, %441, %435 : i32
    %c7_i32_173 = arith.constant 7 : i32
    %443 = arith.muli %c1_i32_100, %c7_i32_173 : i32
    %c5_i32_174 = arith.constant 5 : i32
    %444 = arith.addi %443, %c5_i32_174 : i32
    %445 = arith.index_cast %444 : i32 to index
    %446 = memref.load %arg3[%445] : memref<98xf32, #tpu.memory_space<smem>>
    %c7_i32_175 = arith.constant 7 : i32
    %447 = arith.muli %c1_i32_100, %c7_i32_175 : i32
    %c49_i32_176 = arith.constant 49 : i32
    %448 = arith.addi %c49_i32_176, %447 : i32
    %c5_i32_177 = arith.constant 5 : i32
    %449 = arith.addi %448, %c5_i32_177 : i32
    %450 = arith.index_cast %449 : i32 to index
    %451 = memref.load %arg3[%450] : memref<98xf32, #tpu.memory_space<smem>>
    %452 = tpu.dynamic_rotate %1 by %442 dim 1 : vector<1x256xf32>, i32 -> vector<1x256xf32>
    %453 = vector.broadcast %446 : f32 to vector<1x256xf32>
    %454 = arith.mulf %452, %453 : vector<1x256xf32>
    %455 = tpu.dynamic_rotate %3 by %442 dim 1 : vector<1x256xf32>, i32 -> vector<1x256xf32>
    %456 = vector.broadcast %451 : f32 to vector<1x256xf32>
    %457 = arith.mulf %455, %456 : vector<1x256xf32>
    %458 = arith.addf %454, %457 : vector<1x256xf32>
    %459 = arith.mulf %458, %47 : vector<1x256xf32>
    %460 = arith.addf %431, %459 : vector<1x256xf32>
    %c-3_i32_178 = arith.constant -3 : i32
    %461 = arith.addi %285, %c-3_i32_178 : i32
    %c256_i32_179 = arith.constant 256 : i32
    %c0_i32_180 = arith.constant 0 : i32
    %462 = arith.cmpi eq, %c256_i32_179, %c0_i32_180 : i32
    %c1_i32_181 = arith.constant 1 : i32
    %463 = arith.select %462, %c1_i32_181, %c256_i32_179 : i32
    %464 = arith.remsi %461, %463 : i32
    %c0_i32_182 = arith.constant 0 : i32
    %465 = arith.cmpi ne, %464, %c0_i32_182 : i32
    %c0_i32_183 = arith.constant 0 : i32
    %466 = arith.cmpi slt, %464, %c0_i32_183 : i32
    %c0_i32_184 = arith.constant 0 : i32
    %467 = arith.cmpi slt, %463, %c0_i32_184 : i32
    %468 = arith.xori %466, %467 : i1
    %469 = arith.andi %468, %465 : i1
    %470 = arith.addi %464, %463 : i32
    %471 = arith.select %469, %470, %464 : i32
    %c7_i32_185 = arith.constant 7 : i32
    %472 = arith.muli %c1_i32_100, %c7_i32_185 : i32
    %c6_i32_186 = arith.constant 6 : i32
    %473 = arith.addi %472, %c6_i32_186 : i32
    %474 = arith.index_cast %473 : i32 to index
    %475 = memref.load %arg3[%474] : memref<98xf32, #tpu.memory_space<smem>>
    %c7_i32_187 = arith.constant 7 : i32
    %476 = arith.muli %c1_i32_100, %c7_i32_187 : i32
    %c49_i32_188 = arith.constant 49 : i32
    %477 = arith.addi %c49_i32_188, %476 : i32
    %c6_i32_189 = arith.constant 6 : i32
    %478 = arith.addi %477, %c6_i32_189 : i32
    %479 = arith.index_cast %478 : i32 to index
    %480 = memref.load %arg3[%479] : memref<98xf32, #tpu.memory_space<smem>>
    %481 = tpu.dynamic_rotate %1 by %471 dim 1 : vector<1x256xf32>, i32 -> vector<1x256xf32>
    %482 = vector.broadcast %475 : f32 to vector<1x256xf32>
    %483 = arith.mulf %481, %482 : vector<1x256xf32>
    %484 = tpu.dynamic_rotate %3 by %471 dim 1 : vector<1x256xf32>, i32 -> vector<1x256xf32>
    %485 = vector.broadcast %480 : f32 to vector<1x256xf32>
    %486 = arith.mulf %484, %485 : vector<1x256xf32>
    %487 = arith.addf %483, %486 : vector<1x256xf32>
    %488 = arith.mulf %487, %54 : vector<1x256xf32>
    %489 = arith.addf %460, %488 : vector<1x256xf32>
    %490 = arith.mulf %489, %283 : vector<1x256xf32>
    %491 = arith.addf %273, %490 : vector<1x256xf32>
    %c2_i32_190 = arith.constant 2 : i32
    %492 = arith.sitofp %c2_i32_190 : i32 to f32
    %cst_191 = arith.constant 3.000000e+00 : f32
    %493 = arith.subf %cst_191, %492 : f32
    %494 = vector.broadcast %493 : f32 to vector<1x256xf32>
    %495 = arith.cmpf oge, %4, %494 : vector<1x256xf32>
    %cst_192 = arith.constant 1.800000e+01 : f32
    %496 = arith.subf %cst_192, %492 : f32
    %497 = vector.broadcast %496 : f32 to vector<1x256xf32>
    %498 = arith.cmpf ole, %4, %497 : vector<1x256xf32>
    %499 = arith.andi %495, %498 : vector<1x256xi1>
    %500 = arith.extui %499 : vector<1x256xi1> to vector<1x256xi32>
    %501 = arith.sitofp %500 : vector<1x256xi32> to vector<1x256xf32>
    %c3_i32_193 = arith.constant 3 : i32
    %502 = arith.subi %c3_i32_193, %c2_i32_190 : i32
    %c16_i32_194 = arith.constant 16 : i32
    %503 = arith.muli %502, %c16_i32_194 : i32
    %cst_195 = arith.constant 0.000000e+00 : f32
    %504 = vector.broadcast %cst_195 : f32 to vector<1x256xf32>
    %c3_i32_196 = arith.constant 3 : i32
    %505 = arith.addi %503, %c3_i32_196 : i32
    %c256_i32_197 = arith.constant 256 : i32
    %c0_i32_198 = arith.constant 0 : i32
    %506 = arith.cmpi eq, %c256_i32_197, %c0_i32_198 : i32
    %c1_i32_199 = arith.constant 1 : i32
    %507 = arith.select %506, %c1_i32_199, %c256_i32_197 : i32
    %508 = arith.remsi %505, %507 : i32
    %c0_i32_200 = arith.constant 0 : i32
    %509 = arith.cmpi ne, %508, %c0_i32_200 : i32
    %c0_i32_201 = arith.constant 0 : i32
    %510 = arith.cmpi slt, %508, %c0_i32_201 : i32
    %c0_i32_202 = arith.constant 0 : i32
    %511 = arith.cmpi slt, %507, %c0_i32_202 : i32
    %512 = arith.xori %510, %511 : i1
    %513 = arith.andi %512, %509 : i1
    %514 = arith.addi %508, %507 : i32
    %515 = arith.select %513, %514, %508 : i32
    %c7_i32_203 = arith.constant 7 : i32
    %516 = arith.muli %c2_i32_190, %c7_i32_203 : i32
    %c0_i32_204 = arith.constant 0 : i32
    %517 = arith.addi %516, %c0_i32_204 : i32
    %518 = arith.index_cast %517 : i32 to index
    %519 = memref.load %arg3[%518] : memref<98xf32, #tpu.memory_space<smem>>
    %c7_i32_205 = arith.constant 7 : i32
    %520 = arith.muli %c2_i32_190, %c7_i32_205 : i32
    %c49_i32_206 = arith.constant 49 : i32
    %521 = arith.addi %c49_i32_206, %520 : i32
    %c0_i32_207 = arith.constant 0 : i32
    %522 = arith.addi %521, %c0_i32_207 : i32
    %523 = arith.index_cast %522 : i32 to index
    %524 = memref.load %arg3[%523] : memref<98xf32, #tpu.memory_space<smem>>
    %525 = tpu.dynamic_rotate %1 by %515 dim 1 : vector<1x256xf32>, i32 -> vector<1x256xf32>
    %526 = vector.broadcast %519 : f32 to vector<1x256xf32>
    %527 = arith.mulf %525, %526 : vector<1x256xf32>
    %528 = tpu.dynamic_rotate %3 by %515 dim 1 : vector<1x256xf32>, i32 -> vector<1x256xf32>
    %529 = vector.broadcast %524 : f32 to vector<1x256xf32>
    %530 = arith.mulf %528, %529 : vector<1x256xf32>
    %531 = arith.addf %527, %530 : vector<1x256xf32>
    %532 = arith.mulf %531, %12 : vector<1x256xf32>
    %533 = arith.addf %504, %532 : vector<1x256xf32>
    %c2_i32_208 = arith.constant 2 : i32
    %534 = arith.addi %503, %c2_i32_208 : i32
    %c256_i32_209 = arith.constant 256 : i32
    %c0_i32_210 = arith.constant 0 : i32
    %535 = arith.cmpi eq, %c256_i32_209, %c0_i32_210 : i32
    %c1_i32_211 = arith.constant 1 : i32
    %536 = arith.select %535, %c1_i32_211, %c256_i32_209 : i32
    %537 = arith.remsi %534, %536 : i32
    %c0_i32_212 = arith.constant 0 : i32
    %538 = arith.cmpi ne, %537, %c0_i32_212 : i32
    %c0_i32_213 = arith.constant 0 : i32
    %539 = arith.cmpi slt, %537, %c0_i32_213 : i32
    %c0_i32_214 = arith.constant 0 : i32
    %540 = arith.cmpi slt, %536, %c0_i32_214 : i32
    %541 = arith.xori %539, %540 : i1
    %542 = arith.andi %541, %538 : i1
    %543 = arith.addi %537, %536 : i32
    %544 = arith.select %542, %543, %537 : i32
    %c7_i32_215 = arith.constant 7 : i32
    %545 = arith.muli %c2_i32_190, %c7_i32_215 : i32
    %c1_i32_216 = arith.constant 1 : i32
    %546 = arith.addi %545, %c1_i32_216 : i32
    %547 = arith.index_cast %546 : i32 to index
    %548 = memref.load %arg3[%547] : memref<98xf32, #tpu.memory_space<smem>>
    %c7_i32_217 = arith.constant 7 : i32
    %549 = arith.muli %c2_i32_190, %c7_i32_217 : i32
    %c49_i32_218 = arith.constant 49 : i32
    %550 = arith.addi %c49_i32_218, %549 : i32
    %c1_i32_219 = arith.constant 1 : i32
    %551 = arith.addi %550, %c1_i32_219 : i32
    %552 = arith.index_cast %551 : i32 to index
    %553 = memref.load %arg3[%552] : memref<98xf32, #tpu.memory_space<smem>>
    %554 = tpu.dynamic_rotate %1 by %544 dim 1 : vector<1x256xf32>, i32 -> vector<1x256xf32>
    %555 = vector.broadcast %548 : f32 to vector<1x256xf32>
    %556 = arith.mulf %554, %555 : vector<1x256xf32>
    %557 = tpu.dynamic_rotate %3 by %544 dim 1 : vector<1x256xf32>, i32 -> vector<1x256xf32>
    %558 = vector.broadcast %553 : f32 to vector<1x256xf32>
    %559 = arith.mulf %557, %558 : vector<1x256xf32>
    %560 = arith.addf %556, %559 : vector<1x256xf32>
    %561 = arith.mulf %560, %19 : vector<1x256xf32>
    %562 = arith.addf %533, %561 : vector<1x256xf32>
    %c1_i32_220 = arith.constant 1 : i32
    %563 = arith.addi %503, %c1_i32_220 : i32
    %c256_i32_221 = arith.constant 256 : i32
    %c0_i32_222 = arith.constant 0 : i32
    %564 = arith.cmpi eq, %c256_i32_221, %c0_i32_222 : i32
    %c1_i32_223 = arith.constant 1 : i32
    %565 = arith.select %564, %c1_i32_223, %c256_i32_221 : i32
    %566 = arith.remsi %563, %565 : i32
    %c0_i32_224 = arith.constant 0 : i32
    %567 = arith.cmpi ne, %566, %c0_i32_224 : i32
    %c0_i32_225 = arith.constant 0 : i32
    %568 = arith.cmpi slt, %566, %c0_i32_225 : i32
    %c0_i32_226 = arith.constant 0 : i32
    %569 = arith.cmpi slt, %565, %c0_i32_226 : i32
    %570 = arith.xori %568, %569 : i1
    %571 = arith.andi %570, %567 : i1
    %572 = arith.addi %566, %565 : i32
    %573 = arith.select %571, %572, %566 : i32
    %c7_i32_227 = arith.constant 7 : i32
    %574 = arith.muli %c2_i32_190, %c7_i32_227 : i32
    %c2_i32_228 = arith.constant 2 : i32
    %575 = arith.addi %574, %c2_i32_228 : i32
    %576 = arith.index_cast %575 : i32 to index
    %577 = memref.load %arg3[%576] : memref<98xf32, #tpu.memory_space<smem>>
    %c7_i32_229 = arith.constant 7 : i32
    %578 = arith.muli %c2_i32_190, %c7_i32_229 : i32
    %c49_i32_230 = arith.constant 49 : i32
    %579 = arith.addi %c49_i32_230, %578 : i32
    %c2_i32_231 = arith.constant 2 : i32
    %580 = arith.addi %579, %c2_i32_231 : i32
    %581 = arith.index_cast %580 : i32 to index
    %582 = memref.load %arg3[%581] : memref<98xf32, #tpu.memory_space<smem>>
    %583 = tpu.dynamic_rotate %1 by %573 dim 1 : vector<1x256xf32>, i32 -> vector<1x256xf32>
    %584 = vector.broadcast %577 : f32 to vector<1x256xf32>
    %585 = arith.mulf %583, %584 : vector<1x256xf32>
    %586 = tpu.dynamic_rotate %3 by %573 dim 1 : vector<1x256xf32>, i32 -> vector<1x256xf32>
    %587 = vector.broadcast %582 : f32 to vector<1x256xf32>
    %588 = arith.mulf %586, %587 : vector<1x256xf32>
    %589 = arith.addf %585, %588 : vector<1x256xf32>
    %590 = arith.mulf %589, %26 : vector<1x256xf32>
    %591 = arith.addf %562, %590 : vector<1x256xf32>
    %c0_i32_232 = arith.constant 0 : i32
    %592 = arith.addi %503, %c0_i32_232 : i32
    %c256_i32_233 = arith.constant 256 : i32
    %c0_i32_234 = arith.constant 0 : i32
    %593 = arith.cmpi eq, %c256_i32_233, %c0_i32_234 : i32
    %c1_i32_235 = arith.constant 1 : i32
    %594 = arith.select %593, %c1_i32_235, %c256_i32_233 : i32
    %595 = arith.remsi %592, %594 : i32
    %c0_i32_236 = arith.constant 0 : i32
    %596 = arith.cmpi ne, %595, %c0_i32_236 : i32
    %c0_i32_237 = arith.constant 0 : i32
    %597 = arith.cmpi slt, %595, %c0_i32_237 : i32
    %c0_i32_238 = arith.constant 0 : i32
    %598 = arith.cmpi slt, %594, %c0_i32_238 : i32
    %599 = arith.xori %597, %598 : i1
    %600 = arith.andi %599, %596 : i1
    %601 = arith.addi %595, %594 : i32
    %602 = arith.select %600, %601, %595 : i32
    %c7_i32_239 = arith.constant 7 : i32
    %603 = arith.muli %c2_i32_190, %c7_i32_239 : i32
    %c3_i32_240 = arith.constant 3 : i32
    %604 = arith.addi %603, %c3_i32_240 : i32
    %605 = arith.index_cast %604 : i32 to index
    %606 = memref.load %arg3[%605] : memref<98xf32, #tpu.memory_space<smem>>
    %c7_i32_241 = arith.constant 7 : i32
    %607 = arith.muli %c2_i32_190, %c7_i32_241 : i32
    %c49_i32_242 = arith.constant 49 : i32
    %608 = arith.addi %c49_i32_242, %607 : i32
    %c3_i32_243 = arith.constant 3 : i32
    %609 = arith.addi %608, %c3_i32_243 : i32
    %610 = arith.index_cast %609 : i32 to index
    %611 = memref.load %arg3[%610] : memref<98xf32, #tpu.memory_space<smem>>
    %612 = tpu.dynamic_rotate %1 by %602 dim 1 : vector<1x256xf32>, i32 -> vector<1x256xf32>
    %613 = vector.broadcast %606 : f32 to vector<1x256xf32>
    %614 = arith.mulf %612, %613 : vector<1x256xf32>
    %615 = tpu.dynamic_rotate %3 by %602 dim 1 : vector<1x256xf32>, i32 -> vector<1x256xf32>
    %616 = vector.broadcast %611 : f32 to vector<1x256xf32>
    %617 = arith.mulf %615, %616 : vector<1x256xf32>
    %618 = arith.addf %614, %617 : vector<1x256xf32>
    %619 = arith.mulf %618, %33 : vector<1x256xf32>
    %620 = arith.addf %591, %619 : vector<1x256xf32>
    %c-1_i32_244 = arith.constant -1 : i32
    %621 = arith.addi %503, %c-1_i32_244 : i32
    %c256_i32_245 = arith.constant 256 : i32
    %c0_i32_246 = arith.constant 0 : i32
    %622 = arith.cmpi eq, %c256_i32_245, %c0_i32_246 : i32
    %c1_i32_247 = arith.constant 1 : i32
    %623 = arith.select %622, %c1_i32_247, %c256_i32_245 : i32
    %624 = arith.remsi %621, %623 : i32
    %c0_i32_248 = arith.constant 0 : i32
    %625 = arith.cmpi ne, %624, %c0_i32_248 : i32
    %c0_i32_249 = arith.constant 0 : i32
    %626 = arith.cmpi slt, %624, %c0_i32_249 : i32
    %c0_i32_250 = arith.constant 0 : i32
    %627 = arith.cmpi slt, %623, %c0_i32_250 : i32
    %628 = arith.xori %626, %627 : i1
    %629 = arith.andi %628, %625 : i1
    %630 = arith.addi %624, %623 : i32
    %631 = arith.select %629, %630, %624 : i32
    %c7_i32_251 = arith.constant 7 : i32
    %632 = arith.muli %c2_i32_190, %c7_i32_251 : i32
    %c4_i32_252 = arith.constant 4 : i32
    %633 = arith.addi %632, %c4_i32_252 : i32
    %634 = arith.index_cast %633 : i32 to index
    %635 = memref.load %arg3[%634] : memref<98xf32, #tpu.memory_space<smem>>
    %c7_i32_253 = arith.constant 7 : i32
    %636 = arith.muli %c2_i32_190, %c7_i32_253 : i32
    %c49_i32_254 = arith.constant 49 : i32
    %637 = arith.addi %c49_i32_254, %636 : i32
    %c4_i32_255 = arith.constant 4 : i32
    %638 = arith.addi %637, %c4_i32_255 : i32
    %639 = arith.index_cast %638 : i32 to index
    %640 = memref.load %arg3[%639] : memref<98xf32, #tpu.memory_space<smem>>
    %641 = tpu.dynamic_rotate %1 by %631 dim 1 : vector<1x256xf32>, i32 -> vector<1x256xf32>
    %642 = vector.broadcast %635 : f32 to vector<1x256xf32>
    %643 = arith.mulf %641, %642 : vector<1x256xf32>
    %644 = tpu.dynamic_rotate %3 by %631 dim 1 : vector<1x256xf32>, i32 -> vector<1x256xf32>
    %645 = vector.broadcast %640 : f32 to vector<1x256xf32>
    %646 = arith.mulf %644, %645 : vector<1x256xf32>
    %647 = arith.addf %643, %646 : vector<1x256xf32>
    %648 = arith.mulf %647, %40 : vector<1x256xf32>
    %649 = arith.addf %620, %648 : vector<1x256xf32>
    %c-2_i32_256 = arith.constant -2 : i32
    %650 = arith.addi %503, %c-2_i32_256 : i32
    %c256_i32_257 = arith.constant 256 : i32
    %c0_i32_258 = arith.constant 0 : i32
    %651 = arith.cmpi eq, %c256_i32_257, %c0_i32_258 : i32
    %c1_i32_259 = arith.constant 1 : i32
    %652 = arith.select %651, %c1_i32_259, %c256_i32_257 : i32
    %653 = arith.remsi %650, %652 : i32
    %c0_i32_260 = arith.constant 0 : i32
    %654 = arith.cmpi ne, %653, %c0_i32_260 : i32
    %c0_i32_261 = arith.constant 0 : i32
    %655 = arith.cmpi slt, %653, %c0_i32_261 : i32
    %c0_i32_262 = arith.constant 0 : i32
    %656 = arith.cmpi slt, %652, %c0_i32_262 : i32
    %657 = arith.xori %655, %656 : i1
    %658 = arith.andi %657, %654 : i1
    %659 = arith.addi %653, %652 : i32
    %660 = arith.select %658, %659, %653 : i32
    %c7_i32_263 = arith.constant 7 : i32
    %661 = arith.muli %c2_i32_190, %c7_i32_263 : i32
    %c5_i32_264 = arith.constant 5 : i32
    %662 = arith.addi %661, %c5_i32_264 : i32
    %663 = arith.index_cast %662 : i32 to index
    %664 = memref.load %arg3[%663] : memref<98xf32, #tpu.memory_space<smem>>
    %c7_i32_265 = arith.constant 7 : i32
    %665 = arith.muli %c2_i32_190, %c7_i32_265 : i32
    %c49_i32_266 = arith.constant 49 : i32
    %666 = arith.addi %c49_i32_266, %665 : i32
    %c5_i32_267 = arith.constant 5 : i32
    %667 = arith.addi %666, %c5_i32_267 : i32
    %668 = arith.index_cast %667 : i32 to index
    %669 = memref.load %arg3[%668] : memref<98xf32, #tpu.memory_space<smem>>
    %670 = tpu.dynamic_rotate %1 by %660 dim 1 : vector<1x256xf32>, i32 -> vector<1x256xf32>
    %671 = vector.broadcast %664 : f32 to vector<1x256xf32>
    %672 = arith.mulf %670, %671 : vector<1x256xf32>
    %673 = tpu.dynamic_rotate %3 by %660 dim 1 : vector<1x256xf32>, i32 -> vector<1x256xf32>
    %674 = vector.broadcast %669 : f32 to vector<1x256xf32>
    %675 = arith.mulf %673, %674 : vector<1x256xf32>
    %676 = arith.addf %672, %675 : vector<1x256xf32>
    %677 = arith.mulf %676, %47 : vector<1x256xf32>
    %678 = arith.addf %649, %677 : vector<1x256xf32>
    %c-3_i32_268 = arith.constant -3 : i32
    %679 = arith.addi %503, %c-3_i32_268 : i32
    %c256_i32_269 = arith.constant 256 : i32
    %c0_i32_270 = arith.constant 0 : i32
    %680 = arith.cmpi eq, %c256_i32_269, %c0_i32_270 : i32
    %c1_i32_271 = arith.constant 1 : i32
    %681 = arith.select %680, %c1_i32_271, %c256_i32_269 : i32
    %682 = arith.remsi %679, %681 : i32
    %c0_i32_272 = arith.constant 0 : i32
    %683 = arith.cmpi ne, %682, %c0_i32_272 : i32
    %c0_i32_273 = arith.constant 0 : i32
    %684 = arith.cmpi slt, %682, %c0_i32_273 : i32
    %c0_i32_274 = arith.constant 0 : i32
    %685 = arith.cmpi slt, %681, %c0_i32_274 : i32
    %686 = arith.xori %684, %685 : i1
    %687 = arith.andi %686, %683 : i1
    %688 = arith.addi %682, %681 : i32
    %689 = arith.select %687, %688, %682 : i32
    %c7_i32_275 = arith.constant 7 : i32
    %690 = arith.muli %c2_i32_190, %c7_i32_275 : i32
    %c6_i32_276 = arith.constant 6 : i32
    %691 = arith.addi %690, %c6_i32_276 : i32
    %692 = arith.index_cast %691 : i32 to index
    %693 = memref.load %arg3[%692] : memref<98xf32, #tpu.memory_space<smem>>
    %c7_i32_277 = arith.constant 7 : i32
    %694 = arith.muli %c2_i32_190, %c7_i32_277 : i32
    %c49_i32_278 = arith.constant 49 : i32
    %695 = arith.addi %c49_i32_278, %694 : i32
    %c6_i32_279 = arith.constant 6 : i32
    %696 = arith.addi %695, %c6_i32_279 : i32
    %697 = arith.index_cast %696 : i32 to index
    %698 = memref.load %arg3[%697] : memref<98xf32, #tpu.memory_space<smem>>
    %699 = tpu.dynamic_rotate %1 by %689 dim 1 : vector<1x256xf32>, i32 -> vector<1x256xf32>
    %700 = vector.broadcast %693 : f32 to vector<1x256xf32>
    %701 = arith.mulf %699, %700 : vector<1x256xf32>
    %702 = tpu.dynamic_rotate %3 by %689 dim 1 : vector<1x256xf32>, i32 -> vector<1x256xf32>
    %703 = vector.broadcast %698 : f32 to vector<1x256xf32>
    %704 = arith.mulf %702, %703 : vector<1x256xf32>
    %705 = arith.addf %701, %704 : vector<1x256xf32>
    %706 = arith.mulf %705, %54 : vector<1x256xf32>
    %707 = arith.addf %678, %706 : vector<1x256xf32>
    %708 = arith.mulf %707, %501 : vector<1x256xf32>
    %709 = arith.addf %491, %708 : vector<1x256xf32>
    %c3_i32_280 = arith.constant 3 : i32
    %710 = arith.sitofp %c3_i32_280 : i32 to f32
    %cst_281 = arith.constant 3.000000e+00 : f32
    %711 = arith.subf %cst_281, %710 : f32
    %712 = vector.broadcast %711 : f32 to vector<1x256xf32>
    %713 = arith.cmpf oge, %4, %712 : vector<1x256xf32>
    %cst_282 = arith.constant 1.800000e+01 : f32
    %714 = arith.subf %cst_282, %710 : f32
    %715 = vector.broadcast %714 : f32 to vector<1x256xf32>
    %716 = arith.cmpf ole, %4, %715 : vector<1x256xf32>
    %717 = arith.andi %713, %716 : vector<1x256xi1>
    %718 = arith.extui %717 : vector<1x256xi1> to vector<1x256xi32>
    %719 = arith.sitofp %718 : vector<1x256xi32> to vector<1x256xf32>
    %c3_i32_283 = arith.constant 3 : i32
    %720 = arith.subi %c3_i32_283, %c3_i32_280 : i32
    %c16_i32_284 = arith.constant 16 : i32
    %721 = arith.muli %720, %c16_i32_284 : i32
    %cst_285 = arith.constant 0.000000e+00 : f32
    %722 = vector.broadcast %cst_285 : f32 to vector<1x256xf32>
    %c3_i32_286 = arith.constant 3 : i32
    %723 = arith.addi %721, %c3_i32_286 : i32
    %c256_i32_287 = arith.constant 256 : i32
    %c0_i32_288 = arith.constant 0 : i32
    %724 = arith.cmpi eq, %c256_i32_287, %c0_i32_288 : i32
    %c1_i32_289 = arith.constant 1 : i32
    %725 = arith.select %724, %c1_i32_289, %c256_i32_287 : i32
    %726 = arith.remsi %723, %725 : i32
    %c0_i32_290 = arith.constant 0 : i32
    %727 = arith.cmpi ne, %726, %c0_i32_290 : i32
    %c0_i32_291 = arith.constant 0 : i32
    %728 = arith.cmpi slt, %726, %c0_i32_291 : i32
    %c0_i32_292 = arith.constant 0 : i32
    %729 = arith.cmpi slt, %725, %c0_i32_292 : i32
    %730 = arith.xori %728, %729 : i1
    %731 = arith.andi %730, %727 : i1
    %732 = arith.addi %726, %725 : i32
    %733 = arith.select %731, %732, %726 : i32
    %c7_i32_293 = arith.constant 7 : i32
    %734 = arith.muli %c3_i32_280, %c7_i32_293 : i32
    %c0_i32_294 = arith.constant 0 : i32
    %735 = arith.addi %734, %c0_i32_294 : i32
    %736 = arith.index_cast %735 : i32 to index
    %737 = memref.load %arg3[%736] : memref<98xf32, #tpu.memory_space<smem>>
    %c7_i32_295 = arith.constant 7 : i32
    %738 = arith.muli %c3_i32_280, %c7_i32_295 : i32
    %c49_i32_296 = arith.constant 49 : i32
    %739 = arith.addi %c49_i32_296, %738 : i32
    %c0_i32_297 = arith.constant 0 : i32
    %740 = arith.addi %739, %c0_i32_297 : i32
    %741 = arith.index_cast %740 : i32 to index
    %742 = memref.load %arg3[%741] : memref<98xf32, #tpu.memory_space<smem>>
    %743 = tpu.dynamic_rotate %1 by %733 dim 1 : vector<1x256xf32>, i32 -> vector<1x256xf32>
    %744 = vector.broadcast %737 : f32 to vector<1x256xf32>
    %745 = arith.mulf %743, %744 : vector<1x256xf32>
    %746 = tpu.dynamic_rotate %3 by %733 dim 1 : vector<1x256xf32>, i32 -> vector<1x256xf32>
    %747 = vector.broadcast %742 : f32 to vector<1x256xf32>
    %748 = arith.mulf %746, %747 : vector<1x256xf32>
    %749 = arith.addf %745, %748 : vector<1x256xf32>
    %750 = arith.mulf %749, %12 : vector<1x256xf32>
    %751 = arith.addf %722, %750 : vector<1x256xf32>
    %c2_i32_298 = arith.constant 2 : i32
    %752 = arith.addi %721, %c2_i32_298 : i32
    %c256_i32_299 = arith.constant 256 : i32
    %c0_i32_300 = arith.constant 0 : i32
    %753 = arith.cmpi eq, %c256_i32_299, %c0_i32_300 : i32
    %c1_i32_301 = arith.constant 1 : i32
    %754 = arith.select %753, %c1_i32_301, %c256_i32_299 : i32
    %755 = arith.remsi %752, %754 : i32
    %c0_i32_302 = arith.constant 0 : i32
    %756 = arith.cmpi ne, %755, %c0_i32_302 : i32
    %c0_i32_303 = arith.constant 0 : i32
    %757 = arith.cmpi slt, %755, %c0_i32_303 : i32
    %c0_i32_304 = arith.constant 0 : i32
    %758 = arith.cmpi slt, %754, %c0_i32_304 : i32
    %759 = arith.xori %757, %758 : i1
    %760 = arith.andi %759, %756 : i1
    %761 = arith.addi %755, %754 : i32
    %762 = arith.select %760, %761, %755 : i32
    %c7_i32_305 = arith.constant 7 : i32
    %763 = arith.muli %c3_i32_280, %c7_i32_305 : i32
    %c1_i32_306 = arith.constant 1 : i32
    %764 = arith.addi %763, %c1_i32_306 : i32
    %765 = arith.index_cast %764 : i32 to index
    %766 = memref.load %arg3[%765] : memref<98xf32, #tpu.memory_space<smem>>
    %c7_i32_307 = arith.constant 7 : i32
    %767 = arith.muli %c3_i32_280, %c7_i32_307 : i32
    %c49_i32_308 = arith.constant 49 : i32
    %768 = arith.addi %c49_i32_308, %767 : i32
    %c1_i32_309 = arith.constant 1 : i32
    %769 = arith.addi %768, %c1_i32_309 : i32
    %770 = arith.index_cast %769 : i32 to index
    %771 = memref.load %arg3[%770] : memref<98xf32, #tpu.memory_space<smem>>
    %772 = tpu.dynamic_rotate %1 by %762 dim 1 : vector<1x256xf32>, i32 -> vector<1x256xf32>
    %773 = vector.broadcast %766 : f32 to vector<1x256xf32>
    %774 = arith.mulf %772, %773 : vector<1x256xf32>
    %775 = tpu.dynamic_rotate %3 by %762 dim 1 : vector<1x256xf32>, i32 -> vector<1x256xf32>
    %776 = vector.broadcast %771 : f32 to vector<1x256xf32>
    %777 = arith.mulf %775, %776 : vector<1x256xf32>
    %778 = arith.addf %774, %777 : vector<1x256xf32>
    %779 = arith.mulf %778, %19 : vector<1x256xf32>
    %780 = arith.addf %751, %779 : vector<1x256xf32>
    %c1_i32_310 = arith.constant 1 : i32
    %781 = arith.addi %721, %c1_i32_310 : i32
    %c256_i32_311 = arith.constant 256 : i32
    %c0_i32_312 = arith.constant 0 : i32
    %782 = arith.cmpi eq, %c256_i32_311, %c0_i32_312 : i32
    %c1_i32_313 = arith.constant 1 : i32
    %783 = arith.select %782, %c1_i32_313, %c256_i32_311 : i32
    %784 = arith.remsi %781, %783 : i32
    %c0_i32_314 = arith.constant 0 : i32
    %785 = arith.cmpi ne, %784, %c0_i32_314 : i32
    %c0_i32_315 = arith.constant 0 : i32
    %786 = arith.cmpi slt, %784, %c0_i32_315 : i32
    %c0_i32_316 = arith.constant 0 : i32
    %787 = arith.cmpi slt, %783, %c0_i32_316 : i32
    %788 = arith.xori %786, %787 : i1
    %789 = arith.andi %788, %785 : i1
    %790 = arith.addi %784, %783 : i32
    %791 = arith.select %789, %790, %784 : i32
    %c7_i32_317 = arith.constant 7 : i32
    %792 = arith.muli %c3_i32_280, %c7_i32_317 : i32
    %c2_i32_318 = arith.constant 2 : i32
    %793 = arith.addi %792, %c2_i32_318 : i32
    %794 = arith.index_cast %793 : i32 to index
    %795 = memref.load %arg3[%794] : memref<98xf32, #tpu.memory_space<smem>>
    %c7_i32_319 = arith.constant 7 : i32
    %796 = arith.muli %c3_i32_280, %c7_i32_319 : i32
    %c49_i32_320 = arith.constant 49 : i32
    %797 = arith.addi %c49_i32_320, %796 : i32
    %c2_i32_321 = arith.constant 2 : i32
    %798 = arith.addi %797, %c2_i32_321 : i32
    %799 = arith.index_cast %798 : i32 to index
    %800 = memref.load %arg3[%799] : memref<98xf32, #tpu.memory_space<smem>>
    %801 = tpu.dynamic_rotate %1 by %791 dim 1 : vector<1x256xf32>, i32 -> vector<1x256xf32>
    %802 = vector.broadcast %795 : f32 to vector<1x256xf32>
    %803 = arith.mulf %801, %802 : vector<1x256xf32>
    %804 = tpu.dynamic_rotate %3 by %791 dim 1 : vector<1x256xf32>, i32 -> vector<1x256xf32>
    %805 = vector.broadcast %800 : f32 to vector<1x256xf32>
    %806 = arith.mulf %804, %805 : vector<1x256xf32>
    %807 = arith.addf %803, %806 : vector<1x256xf32>
    %808 = arith.mulf %807, %26 : vector<1x256xf32>
    %809 = arith.addf %780, %808 : vector<1x256xf32>
    %c0_i32_322 = arith.constant 0 : i32
    %810 = arith.addi %721, %c0_i32_322 : i32
    %c256_i32_323 = arith.constant 256 : i32
    %c0_i32_324 = arith.constant 0 : i32
    %811 = arith.cmpi eq, %c256_i32_323, %c0_i32_324 : i32
    %c1_i32_325 = arith.constant 1 : i32
    %812 = arith.select %811, %c1_i32_325, %c256_i32_323 : i32
    %813 = arith.remsi %810, %812 : i32
    %c0_i32_326 = arith.constant 0 : i32
    %814 = arith.cmpi ne, %813, %c0_i32_326 : i32
    %c0_i32_327 = arith.constant 0 : i32
    %815 = arith.cmpi slt, %813, %c0_i32_327 : i32
    %c0_i32_328 = arith.constant 0 : i32
    %816 = arith.cmpi slt, %812, %c0_i32_328 : i32
    %817 = arith.xori %815, %816 : i1
    %818 = arith.andi %817, %814 : i1
    %819 = arith.addi %813, %812 : i32
    %820 = arith.select %818, %819, %813 : i32
    %c7_i32_329 = arith.constant 7 : i32
    %821 = arith.muli %c3_i32_280, %c7_i32_329 : i32
    %c3_i32_330 = arith.constant 3 : i32
    %822 = arith.addi %821, %c3_i32_330 : i32
    %823 = arith.index_cast %822 : i32 to index
    %824 = memref.load %arg3[%823] : memref<98xf32, #tpu.memory_space<smem>>
    %c7_i32_331 = arith.constant 7 : i32
    %825 = arith.muli %c3_i32_280, %c7_i32_331 : i32
    %c49_i32_332 = arith.constant 49 : i32
    %826 = arith.addi %c49_i32_332, %825 : i32
    %c3_i32_333 = arith.constant 3 : i32
    %827 = arith.addi %826, %c3_i32_333 : i32
    %828 = arith.index_cast %827 : i32 to index
    %829 = memref.load %arg3[%828] : memref<98xf32, #tpu.memory_space<smem>>
    %830 = tpu.dynamic_rotate %1 by %820 dim 1 : vector<1x256xf32>, i32 -> vector<1x256xf32>
    %831 = vector.broadcast %824 : f32 to vector<1x256xf32>
    %832 = arith.mulf %830, %831 : vector<1x256xf32>
    %833 = tpu.dynamic_rotate %3 by %820 dim 1 : vector<1x256xf32>, i32 -> vector<1x256xf32>
    %834 = vector.broadcast %829 : f32 to vector<1x256xf32>
    %835 = arith.mulf %833, %834 : vector<1x256xf32>
    %836 = arith.addf %832, %835 : vector<1x256xf32>
    %837 = arith.mulf %836, %33 : vector<1x256xf32>
    %838 = arith.addf %809, %837 : vector<1x256xf32>
    %c-1_i32_334 = arith.constant -1 : i32
    %839 = arith.addi %721, %c-1_i32_334 : i32
    %c256_i32_335 = arith.constant 256 : i32
    %c0_i32_336 = arith.constant 0 : i32
    %840 = arith.cmpi eq, %c256_i32_335, %c0_i32_336 : i32
    %c1_i32_337 = arith.constant 1 : i32
    %841 = arith.select %840, %c1_i32_337, %c256_i32_335 : i32
    %842 = arith.remsi %839, %841 : i32
    %c0_i32_338 = arith.constant 0 : i32
    %843 = arith.cmpi ne, %842, %c0_i32_338 : i32
    %c0_i32_339 = arith.constant 0 : i32
    %844 = arith.cmpi slt, %842, %c0_i32_339 : i32
    %c0_i32_340 = arith.constant 0 : i32
    %845 = arith.cmpi slt, %841, %c0_i32_340 : i32
    %846 = arith.xori %844, %845 : i1
    %847 = arith.andi %846, %843 : i1
    %848 = arith.addi %842, %841 : i32
    %849 = arith.select %847, %848, %842 : i32
    %c7_i32_341 = arith.constant 7 : i32
    %850 = arith.muli %c3_i32_280, %c7_i32_341 : i32
    %c4_i32_342 = arith.constant 4 : i32
    %851 = arith.addi %850, %c4_i32_342 : i32
    %852 = arith.index_cast %851 : i32 to index
    %853 = memref.load %arg3[%852] : memref<98xf32, #tpu.memory_space<smem>>
    %c7_i32_343 = arith.constant 7 : i32
    %854 = arith.muli %c3_i32_280, %c7_i32_343 : i32
    %c49_i32_344 = arith.constant 49 : i32
    %855 = arith.addi %c49_i32_344, %854 : i32
    %c4_i32_345 = arith.constant 4 : i32
    %856 = arith.addi %855, %c4_i32_345 : i32
    %857 = arith.index_cast %856 : i32 to index
    %858 = memref.load %arg3[%857] : memref<98xf32, #tpu.memory_space<smem>>
    %859 = tpu.dynamic_rotate %1 by %849 dim 1 : vector<1x256xf32>, i32 -> vector<1x256xf32>
    %860 = vector.broadcast %853 : f32 to vector<1x256xf32>
    %861 = arith.mulf %859, %860 : vector<1x256xf32>
    %862 = tpu.dynamic_rotate %3 by %849 dim 1 : vector<1x256xf32>, i32 -> vector<1x256xf32>
    %863 = vector.broadcast %858 : f32 to vector<1x256xf32>
    %864 = arith.mulf %862, %863 : vector<1x256xf32>
    %865 = arith.addf %861, %864 : vector<1x256xf32>
    %866 = arith.mulf %865, %40 : vector<1x256xf32>
    %867 = arith.addf %838, %866 : vector<1x256xf32>
    %c-2_i32_346 = arith.constant -2 : i32
    %868 = arith.addi %721, %c-2_i32_346 : i32
    %c256_i32_347 = arith.constant 256 : i32
    %c0_i32_348 = arith.constant 0 : i32
    %869 = arith.cmpi eq, %c256_i32_347, %c0_i32_348 : i32
    %c1_i32_349 = arith.constant 1 : i32
    %870 = arith.select %869, %c1_i32_349, %c256_i32_347 : i32
    %871 = arith.remsi %868, %870 : i32
    %c0_i32_350 = arith.constant 0 : i32
    %872 = arith.cmpi ne, %871, %c0_i32_350 : i32
    %c0_i32_351 = arith.constant 0 : i32
    %873 = arith.cmpi slt, %871, %c0_i32_351 : i32
    %c0_i32_352 = arith.constant 0 : i32
    %874 = arith.cmpi slt, %870, %c0_i32_352 : i32
    %875 = arith.xori %873, %874 : i1
    %876 = arith.andi %875, %872 : i1
    %877 = arith.addi %871, %870 : i32
    %878 = arith.select %876, %877, %871 : i32
    %c7_i32_353 = arith.constant 7 : i32
    %879 = arith.muli %c3_i32_280, %c7_i32_353 : i32
    %c5_i32_354 = arith.constant 5 : i32
    %880 = arith.addi %879, %c5_i32_354 : i32
    %881 = arith.index_cast %880 : i32 to index
    %882 = memref.load %arg3[%881] : memref<98xf32, #tpu.memory_space<smem>>
    %c7_i32_355 = arith.constant 7 : i32
    %883 = arith.muli %c3_i32_280, %c7_i32_355 : i32
    %c49_i32_356 = arith.constant 49 : i32
    %884 = arith.addi %c49_i32_356, %883 : i32
    %c5_i32_357 = arith.constant 5 : i32
    %885 = arith.addi %884, %c5_i32_357 : i32
    %886 = arith.index_cast %885 : i32 to index
    %887 = memref.load %arg3[%886] : memref<98xf32, #tpu.memory_space<smem>>
    %888 = tpu.dynamic_rotate %1 by %878 dim 1 : vector<1x256xf32>, i32 -> vector<1x256xf32>
    %889 = vector.broadcast %882 : f32 to vector<1x256xf32>
    %890 = arith.mulf %888, %889 : vector<1x256xf32>
    %891 = tpu.dynamic_rotate %3 by %878 dim 1 : vector<1x256xf32>, i32 -> vector<1x256xf32>
    %892 = vector.broadcast %887 : f32 to vector<1x256xf32>
    %893 = arith.mulf %891, %892 : vector<1x256xf32>
    %894 = arith.addf %890, %893 : vector<1x256xf32>
    %895 = arith.mulf %894, %47 : vector<1x256xf32>
    %896 = arith.addf %867, %895 : vector<1x256xf32>
    %c-3_i32_358 = arith.constant -3 : i32
    %897 = arith.addi %721, %c-3_i32_358 : i32
    %c256_i32_359 = arith.constant 256 : i32
    %c0_i32_360 = arith.constant 0 : i32
    %898 = arith.cmpi eq, %c256_i32_359, %c0_i32_360 : i32
    %c1_i32_361 = arith.constant 1 : i32
    %899 = arith.select %898, %c1_i32_361, %c256_i32_359 : i32
    %900 = arith.remsi %897, %899 : i32
    %c0_i32_362 = arith.constant 0 : i32
    %901 = arith.cmpi ne, %900, %c0_i32_362 : i32
    %c0_i32_363 = arith.constant 0 : i32
    %902 = arith.cmpi slt, %900, %c0_i32_363 : i32
    %c0_i32_364 = arith.constant 0 : i32
    %903 = arith.cmpi slt, %899, %c0_i32_364 : i32
    %904 = arith.xori %902, %903 : i1
    %905 = arith.andi %904, %901 : i1
    %906 = arith.addi %900, %899 : i32
    %907 = arith.select %905, %906, %900 : i32
    %c7_i32_365 = arith.constant 7 : i32
    %908 = arith.muli %c3_i32_280, %c7_i32_365 : i32
    %c6_i32_366 = arith.constant 6 : i32
    %909 = arith.addi %908, %c6_i32_366 : i32
    %910 = arith.index_cast %909 : i32 to index
    %911 = memref.load %arg3[%910] : memref<98xf32, #tpu.memory_space<smem>>
    %c7_i32_367 = arith.constant 7 : i32
    %912 = arith.muli %c3_i32_280, %c7_i32_367 : i32
    %c49_i32_368 = arith.constant 49 : i32
    %913 = arith.addi %c49_i32_368, %912 : i32
    %c6_i32_369 = arith.constant 6 : i32
    %914 = arith.addi %913, %c6_i32_369 : i32
    %915 = arith.index_cast %914 : i32 to index
    %916 = memref.load %arg3[%915] : memref<98xf32, #tpu.memory_space<smem>>
    %917 = tpu.dynamic_rotate %1 by %907 dim 1 : vector<1x256xf32>, i32 -> vector<1x256xf32>
    %918 = vector.broadcast %911 : f32 to vector<1x256xf32>
    %919 = arith.mulf %917, %918 : vector<1x256xf32>
    %920 = tpu.dynamic_rotate %3 by %907 dim 1 : vector<1x256xf32>, i32 -> vector<1x256xf32>
    %921 = vector.broadcast %916 : f32 to vector<1x256xf32>
    %922 = arith.mulf %920, %921 : vector<1x256xf32>
    %923 = arith.addf %919, %922 : vector<1x256xf32>
    %924 = arith.mulf %923, %54 : vector<1x256xf32>
    %925 = arith.addf %896, %924 : vector<1x256xf32>
    %926 = arith.mulf %925, %719 : vector<1x256xf32>
    %927 = arith.addf %709, %926 : vector<1x256xf32>
    %c4_i32_370 = arith.constant 4 : i32
    %928 = arith.sitofp %c4_i32_370 : i32 to f32
    %cst_371 = arith.constant 3.000000e+00 : f32
    %929 = arith.subf %cst_371, %928 : f32
    %930 = vector.broadcast %929 : f32 to vector<1x256xf32>
    %931 = arith.cmpf oge, %4, %930 : vector<1x256xf32>
    %cst_372 = arith.constant 1.800000e+01 : f32
    %932 = arith.subf %cst_372, %928 : f32
    %933 = vector.broadcast %932 : f32 to vector<1x256xf32>
    %934 = arith.cmpf ole, %4, %933 : vector<1x256xf32>
    %935 = arith.andi %931, %934 : vector<1x256xi1>
    %936 = arith.extui %935 : vector<1x256xi1> to vector<1x256xi32>
    %937 = arith.sitofp %936 : vector<1x256xi32> to vector<1x256xf32>
    %c3_i32_373 = arith.constant 3 : i32
    %938 = arith.subi %c3_i32_373, %c4_i32_370 : i32
    %c16_i32_374 = arith.constant 16 : i32
    %939 = arith.muli %938, %c16_i32_374 : i32
    %cst_375 = arith.constant 0.000000e+00 : f32
    %940 = vector.broadcast %cst_375 : f32 to vector<1x256xf32>
    %c3_i32_376 = arith.constant 3 : i32
    %941 = arith.addi %939, %c3_i32_376 : i32
    %c256_i32_377 = arith.constant 256 : i32
    %c0_i32_378 = arith.constant 0 : i32
    %942 = arith.cmpi eq, %c256_i32_377, %c0_i32_378 : i32
    %c1_i32_379 = arith.constant 1 : i32
    %943 = arith.select %942, %c1_i32_379, %c256_i32_377 : i32
    %944 = arith.remsi %941, %943 : i32
    %c0_i32_380 = arith.constant 0 : i32
    %945 = arith.cmpi ne, %944, %c0_i32_380 : i32
    %c0_i32_381 = arith.constant 0 : i32
    %946 = arith.cmpi slt, %944, %c0_i32_381 : i32
    %c0_i32_382 = arith.constant 0 : i32
    %947 = arith.cmpi slt, %943, %c0_i32_382 : i32
    %948 = arith.xori %946, %947 : i1
    %949 = arith.andi %948, %945 : i1
    %950 = arith.addi %944, %943 : i32
    %951 = arith.select %949, %950, %944 : i32
    %c7_i32_383 = arith.constant 7 : i32
    %952 = arith.muli %c4_i32_370, %c7_i32_383 : i32
    %c0_i32_384 = arith.constant 0 : i32
    %953 = arith.addi %952, %c0_i32_384 : i32
    %954 = arith.index_cast %953 : i32 to index
    %955 = memref.load %arg3[%954] : memref<98xf32, #tpu.memory_space<smem>>
    %c7_i32_385 = arith.constant 7 : i32
    %956 = arith.muli %c4_i32_370, %c7_i32_385 : i32
    %c49_i32_386 = arith.constant 49 : i32
    %957 = arith.addi %c49_i32_386, %956 : i32
    %c0_i32_387 = arith.constant 0 : i32
    %958 = arith.addi %957, %c0_i32_387 : i32
    %959 = arith.index_cast %958 : i32 to index
    %960 = memref.load %arg3[%959] : memref<98xf32, #tpu.memory_space<smem>>
    %961 = tpu.dynamic_rotate %1 by %951 dim 1 : vector<1x256xf32>, i32 -> vector<1x256xf32>
    %962 = vector.broadcast %955 : f32 to vector<1x256xf32>
    %963 = arith.mulf %961, %962 : vector<1x256xf32>
    %964 = tpu.dynamic_rotate %3 by %951 dim 1 : vector<1x256xf32>, i32 -> vector<1x256xf32>
    %965 = vector.broadcast %960 : f32 to vector<1x256xf32>
    %966 = arith.mulf %964, %965 : vector<1x256xf32>
    %967 = arith.addf %963, %966 : vector<1x256xf32>
    %968 = arith.mulf %967, %12 : vector<1x256xf32>
    %969 = arith.addf %940, %968 : vector<1x256xf32>
    %c2_i32_388 = arith.constant 2 : i32
    %970 = arith.addi %939, %c2_i32_388 : i32
    %c256_i32_389 = arith.constant 256 : i32
    %c0_i32_390 = arith.constant 0 : i32
    %971 = arith.cmpi eq, %c256_i32_389, %c0_i32_390 : i32
    %c1_i32_391 = arith.constant 1 : i32
    %972 = arith.select %971, %c1_i32_391, %c256_i32_389 : i32
    %973 = arith.remsi %970, %972 : i32
    %c0_i32_392 = arith.constant 0 : i32
    %974 = arith.cmpi ne, %973, %c0_i32_392 : i32
    %c0_i32_393 = arith.constant 0 : i32
    %975 = arith.cmpi slt, %973, %c0_i32_393 : i32
    %c0_i32_394 = arith.constant 0 : i32
    %976 = arith.cmpi slt, %972, %c0_i32_394 : i32
    %977 = arith.xori %975, %976 : i1
    %978 = arith.andi %977, %974 : i1
    %979 = arith.addi %973, %972 : i32
    %980 = arith.select %978, %979, %973 : i32
    %c7_i32_395 = arith.constant 7 : i32
    %981 = arith.muli %c4_i32_370, %c7_i32_395 : i32
    %c1_i32_396 = arith.constant 1 : i32
    %982 = arith.addi %981, %c1_i32_396 : i32
    %983 = arith.index_cast %982 : i32 to index
    %984 = memref.load %arg3[%983] : memref<98xf32, #tpu.memory_space<smem>>
    %c7_i32_397 = arith.constant 7 : i32
    %985 = arith.muli %c4_i32_370, %c7_i32_397 : i32
    %c49_i32_398 = arith.constant 49 : i32
    %986 = arith.addi %c49_i32_398, %985 : i32
    %c1_i32_399 = arith.constant 1 : i32
    %987 = arith.addi %986, %c1_i32_399 : i32
    %988 = arith.index_cast %987 : i32 to index
    %989 = memref.load %arg3[%988] : memref<98xf32, #tpu.memory_space<smem>>
    %990 = tpu.dynamic_rotate %1 by %980 dim 1 : vector<1x256xf32>, i32 -> vector<1x256xf32>
    %991 = vector.broadcast %984 : f32 to vector<1x256xf32>
    %992 = arith.mulf %990, %991 : vector<1x256xf32>
    %993 = tpu.dynamic_rotate %3 by %980 dim 1 : vector<1x256xf32>, i32 -> vector<1x256xf32>
    %994 = vector.broadcast %989 : f32 to vector<1x256xf32>
    %995 = arith.mulf %993, %994 : vector<1x256xf32>
    %996 = arith.addf %992, %995 : vector<1x256xf32>
    %997 = arith.mulf %996, %19 : vector<1x256xf32>
    %998 = arith.addf %969, %997 : vector<1x256xf32>
    %c1_i32_400 = arith.constant 1 : i32
    %999 = arith.addi %939, %c1_i32_400 : i32
    %c256_i32_401 = arith.constant 256 : i32
    %c0_i32_402 = arith.constant 0 : i32
    %1000 = arith.cmpi eq, %c256_i32_401, %c0_i32_402 : i32
    %c1_i32_403 = arith.constant 1 : i32
    %1001 = arith.select %1000, %c1_i32_403, %c256_i32_401 : i32
    %1002 = arith.remsi %999, %1001 : i32
    %c0_i32_404 = arith.constant 0 : i32
    %1003 = arith.cmpi ne, %1002, %c0_i32_404 : i32
    %c0_i32_405 = arith.constant 0 : i32
    %1004 = arith.cmpi slt, %1002, %c0_i32_405 : i32
    %c0_i32_406 = arith.constant 0 : i32
    %1005 = arith.cmpi slt, %1001, %c0_i32_406 : i32
    %1006 = arith.xori %1004, %1005 : i1
    %1007 = arith.andi %1006, %1003 : i1
    %1008 = arith.addi %1002, %1001 : i32
    %1009 = arith.select %1007, %1008, %1002 : i32
    %c7_i32_407 = arith.constant 7 : i32
    %1010 = arith.muli %c4_i32_370, %c7_i32_407 : i32
    %c2_i32_408 = arith.constant 2 : i32
    %1011 = arith.addi %1010, %c2_i32_408 : i32
    %1012 = arith.index_cast %1011 : i32 to index
    %1013 = memref.load %arg3[%1012] : memref<98xf32, #tpu.memory_space<smem>>
    %c7_i32_409 = arith.constant 7 : i32
    %1014 = arith.muli %c4_i32_370, %c7_i32_409 : i32
    %c49_i32_410 = arith.constant 49 : i32
    %1015 = arith.addi %c49_i32_410, %1014 : i32
    %c2_i32_411 = arith.constant 2 : i32
    %1016 = arith.addi %1015, %c2_i32_411 : i32
    %1017 = arith.index_cast %1016 : i32 to index
    %1018 = memref.load %arg3[%1017] : memref<98xf32, #tpu.memory_space<smem>>
    %1019 = tpu.dynamic_rotate %1 by %1009 dim 1 : vector<1x256xf32>, i32 -> vector<1x256xf32>
    %1020 = vector.broadcast %1013 : f32 to vector<1x256xf32>
    %1021 = arith.mulf %1019, %1020 : vector<1x256xf32>
    %1022 = tpu.dynamic_rotate %3 by %1009 dim 1 : vector<1x256xf32>, i32 -> vector<1x256xf32>
    %1023 = vector.broadcast %1018 : f32 to vector<1x256xf32>
    %1024 = arith.mulf %1022, %1023 : vector<1x256xf32>
    %1025 = arith.addf %1021, %1024 : vector<1x256xf32>
    %1026 = arith.mulf %1025, %26 : vector<1x256xf32>
    %1027 = arith.addf %998, %1026 : vector<1x256xf32>
    %c0_i32_412 = arith.constant 0 : i32
    %1028 = arith.addi %939, %c0_i32_412 : i32
    %c256_i32_413 = arith.constant 256 : i32
    %c0_i32_414 = arith.constant 0 : i32
    %1029 = arith.cmpi eq, %c256_i32_413, %c0_i32_414 : i32
    %c1_i32_415 = arith.constant 1 : i32
    %1030 = arith.select %1029, %c1_i32_415, %c256_i32_413 : i32
    %1031 = arith.remsi %1028, %1030 : i32
    %c0_i32_416 = arith.constant 0 : i32
    %1032 = arith.cmpi ne, %1031, %c0_i32_416 : i32
    %c0_i32_417 = arith.constant 0 : i32
    %1033 = arith.cmpi slt, %1031, %c0_i32_417 : i32
    %c0_i32_418 = arith.constant 0 : i32
    %1034 = arith.cmpi slt, %1030, %c0_i32_418 : i32
    %1035 = arith.xori %1033, %1034 : i1
    %1036 = arith.andi %1035, %1032 : i1
    %1037 = arith.addi %1031, %1030 : i32
    %1038 = arith.select %1036, %1037, %1031 : i32
    %c7_i32_419 = arith.constant 7 : i32
    %1039 = arith.muli %c4_i32_370, %c7_i32_419 : i32
    %c3_i32_420 = arith.constant 3 : i32
    %1040 = arith.addi %1039, %c3_i32_420 : i32
    %1041 = arith.index_cast %1040 : i32 to index
    %1042 = memref.load %arg3[%1041] : memref<98xf32, #tpu.memory_space<smem>>
    %c7_i32_421 = arith.constant 7 : i32
    %1043 = arith.muli %c4_i32_370, %c7_i32_421 : i32
    %c49_i32_422 = arith.constant 49 : i32
    %1044 = arith.addi %c49_i32_422, %1043 : i32
    %c3_i32_423 = arith.constant 3 : i32
    %1045 = arith.addi %1044, %c3_i32_423 : i32
    %1046 = arith.index_cast %1045 : i32 to index
    %1047 = memref.load %arg3[%1046] : memref<98xf32, #tpu.memory_space<smem>>
    %1048 = tpu.dynamic_rotate %1 by %1038 dim 1 : vector<1x256xf32>, i32 -> vector<1x256xf32>
    %1049 = vector.broadcast %1042 : f32 to vector<1x256xf32>
    %1050 = arith.mulf %1048, %1049 : vector<1x256xf32>
    %1051 = tpu.dynamic_rotate %3 by %1038 dim 1 : vector<1x256xf32>, i32 -> vector<1x256xf32>
    %1052 = vector.broadcast %1047 : f32 to vector<1x256xf32>
    %1053 = arith.mulf %1051, %1052 : vector<1x256xf32>
    %1054 = arith.addf %1050, %1053 : vector<1x256xf32>
    %1055 = arith.mulf %1054, %33 : vector<1x256xf32>
    %1056 = arith.addf %1027, %1055 : vector<1x256xf32>
    %c-1_i32_424 = arith.constant -1 : i32
    %1057 = arith.addi %939, %c-1_i32_424 : i32
    %c256_i32_425 = arith.constant 256 : i32
    %c0_i32_426 = arith.constant 0 : i32
    %1058 = arith.cmpi eq, %c256_i32_425, %c0_i32_426 : i32
    %c1_i32_427 = arith.constant 1 : i32
    %1059 = arith.select %1058, %c1_i32_427, %c256_i32_425 : i32
    %1060 = arith.remsi %1057, %1059 : i32
    %c0_i32_428 = arith.constant 0 : i32
    %1061 = arith.cmpi ne, %1060, %c0_i32_428 : i32
    %c0_i32_429 = arith.constant 0 : i32
    %1062 = arith.cmpi slt, %1060, %c0_i32_429 : i32
    %c0_i32_430 = arith.constant 0 : i32
    %1063 = arith.cmpi slt, %1059, %c0_i32_430 : i32
    %1064 = arith.xori %1062, %1063 : i1
    %1065 = arith.andi %1064, %1061 : i1
    %1066 = arith.addi %1060, %1059 : i32
    %1067 = arith.select %1065, %1066, %1060 : i32
    %c7_i32_431 = arith.constant 7 : i32
    %1068 = arith.muli %c4_i32_370, %c7_i32_431 : i32
    %c4_i32_432 = arith.constant 4 : i32
    %1069 = arith.addi %1068, %c4_i32_432 : i32
    %1070 = arith.index_cast %1069 : i32 to index
    %1071 = memref.load %arg3[%1070] : memref<98xf32, #tpu.memory_space<smem>>
    %c7_i32_433 = arith.constant 7 : i32
    %1072 = arith.muli %c4_i32_370, %c7_i32_433 : i32
    %c49_i32_434 = arith.constant 49 : i32
    %1073 = arith.addi %c49_i32_434, %1072 : i32
    %c4_i32_435 = arith.constant 4 : i32
    %1074 = arith.addi %1073, %c4_i32_435 : i32
    %1075 = arith.index_cast %1074 : i32 to index
    %1076 = memref.load %arg3[%1075] : memref<98xf32, #tpu.memory_space<smem>>
    %1077 = tpu.dynamic_rotate %1 by %1067 dim 1 : vector<1x256xf32>, i32 -> vector<1x256xf32>
    %1078 = vector.broadcast %1071 : f32 to vector<1x256xf32>
    %1079 = arith.mulf %1077, %1078 : vector<1x256xf32>
    %1080 = tpu.dynamic_rotate %3 by %1067 dim 1 : vector<1x256xf32>, i32 -> vector<1x256xf32>
    %1081 = vector.broadcast %1076 : f32 to vector<1x256xf32>
    %1082 = arith.mulf %1080, %1081 : vector<1x256xf32>
    %1083 = arith.addf %1079, %1082 : vector<1x256xf32>
    %1084 = arith.mulf %1083, %40 : vector<1x256xf32>
    %1085 = arith.addf %1056, %1084 : vector<1x256xf32>
    %c-2_i32_436 = arith.constant -2 : i32
    %1086 = arith.addi %939, %c-2_i32_436 : i32
    %c256_i32_437 = arith.constant 256 : i32
    %c0_i32_438 = arith.constant 0 : i32
    %1087 = arith.cmpi eq, %c256_i32_437, %c0_i32_438 : i32
    %c1_i32_439 = arith.constant 1 : i32
    %1088 = arith.select %1087, %c1_i32_439, %c256_i32_437 : i32
    %1089 = arith.remsi %1086, %1088 : i32
    %c0_i32_440 = arith.constant 0 : i32
    %1090 = arith.cmpi ne, %1089, %c0_i32_440 : i32
    %c0_i32_441 = arith.constant 0 : i32
    %1091 = arith.cmpi slt, %1089, %c0_i32_441 : i32
    %c0_i32_442 = arith.constant 0 : i32
    %1092 = arith.cmpi slt, %1088, %c0_i32_442 : i32
    %1093 = arith.xori %1091, %1092 : i1
    %1094 = arith.andi %1093, %1090 : i1
    %1095 = arith.addi %1089, %1088 : i32
    %1096 = arith.select %1094, %1095, %1089 : i32
    %c7_i32_443 = arith.constant 7 : i32
    %1097 = arith.muli %c4_i32_370, %c7_i32_443 : i32
    %c5_i32_444 = arith.constant 5 : i32
    %1098 = arith.addi %1097, %c5_i32_444 : i32
    %1099 = arith.index_cast %1098 : i32 to index
    %1100 = memref.load %arg3[%1099] : memref<98xf32, #tpu.memory_space<smem>>
    %c7_i32_445 = arith.constant 7 : i32
    %1101 = arith.muli %c4_i32_370, %c7_i32_445 : i32
    %c49_i32_446 = arith.constant 49 : i32
    %1102 = arith.addi %c49_i32_446, %1101 : i32
    %c5_i32_447 = arith.constant 5 : i32
    %1103 = arith.addi %1102, %c5_i32_447 : i32
    %1104 = arith.index_cast %1103 : i32 to index
    %1105 = memref.load %arg3[%1104] : memref<98xf32, #tpu.memory_space<smem>>
    %1106 = tpu.dynamic_rotate %1 by %1096 dim 1 : vector<1x256xf32>, i32 -> vector<1x256xf32>
    %1107 = vector.broadcast %1100 : f32 to vector<1x256xf32>
    %1108 = arith.mulf %1106, %1107 : vector<1x256xf32>
    %1109 = tpu.dynamic_rotate %3 by %1096 dim 1 : vector<1x256xf32>, i32 -> vector<1x256xf32>
    %1110 = vector.broadcast %1105 : f32 to vector<1x256xf32>
    %1111 = arith.mulf %1109, %1110 : vector<1x256xf32>
    %1112 = arith.addf %1108, %1111 : vector<1x256xf32>
    %1113 = arith.mulf %1112, %47 : vector<1x256xf32>
    %1114 = arith.addf %1085, %1113 : vector<1x256xf32>
    %c-3_i32_448 = arith.constant -3 : i32
    %1115 = arith.addi %939, %c-3_i32_448 : i32
    %c256_i32_449 = arith.constant 256 : i32
    %c0_i32_450 = arith.constant 0 : i32
    %1116 = arith.cmpi eq, %c256_i32_449, %c0_i32_450 : i32
    %c1_i32_451 = arith.constant 1 : i32
    %1117 = arith.select %1116, %c1_i32_451, %c256_i32_449 : i32
    %1118 = arith.remsi %1115, %1117 : i32
    %c0_i32_452 = arith.constant 0 : i32
    %1119 = arith.cmpi ne, %1118, %c0_i32_452 : i32
    %c0_i32_453 = arith.constant 0 : i32
    %1120 = arith.cmpi slt, %1118, %c0_i32_453 : i32
    %c0_i32_454 = arith.constant 0 : i32
    %1121 = arith.cmpi slt, %1117, %c0_i32_454 : i32
    %1122 = arith.xori %1120, %1121 : i1
    %1123 = arith.andi %1122, %1119 : i1
    %1124 = arith.addi %1118, %1117 : i32
    %1125 = arith.select %1123, %1124, %1118 : i32
    %c7_i32_455 = arith.constant 7 : i32
    %1126 = arith.muli %c4_i32_370, %c7_i32_455 : i32
    %c6_i32_456 = arith.constant 6 : i32
    %1127 = arith.addi %1126, %c6_i32_456 : i32
    %1128 = arith.index_cast %1127 : i32 to index
    %1129 = memref.load %arg3[%1128] : memref<98xf32, #tpu.memory_space<smem>>
    %c7_i32_457 = arith.constant 7 : i32
    %1130 = arith.muli %c4_i32_370, %c7_i32_457 : i32
    %c49_i32_458 = arith.constant 49 : i32
    %1131 = arith.addi %c49_i32_458, %1130 : i32
    %c6_i32_459 = arith.constant 6 : i32
    %1132 = arith.addi %1131, %c6_i32_459 : i32
    %1133 = arith.index_cast %1132 : i32 to index
    %1134 = memref.load %arg3[%1133] : memref<98xf32, #tpu.memory_space<smem>>
    %1135 = tpu.dynamic_rotate %1 by %1125 dim 1 : vector<1x256xf32>, i32 -> vector<1x256xf32>
    %1136 = vector.broadcast %1129 : f32 to vector<1x256xf32>
    %1137 = arith.mulf %1135, %1136 : vector<1x256xf32>
    %1138 = tpu.dynamic_rotate %3 by %1125 dim 1 : vector<1x256xf32>, i32 -> vector<1x256xf32>
    %1139 = vector.broadcast %1134 : f32 to vector<1x256xf32>
    %1140 = arith.mulf %1138, %1139 : vector<1x256xf32>
    %1141 = arith.addf %1137, %1140 : vector<1x256xf32>
    %1142 = arith.mulf %1141, %54 : vector<1x256xf32>
    %1143 = arith.addf %1114, %1142 : vector<1x256xf32>
    %1144 = arith.mulf %1143, %937 : vector<1x256xf32>
    %1145 = arith.addf %927, %1144 : vector<1x256xf32>
    %c5_i32_460 = arith.constant 5 : i32
    %1146 = arith.sitofp %c5_i32_460 : i32 to f32
    %cst_461 = arith.constant 3.000000e+00 : f32
    %1147 = arith.subf %cst_461, %1146 : f32
    %1148 = vector.broadcast %1147 : f32 to vector<1x256xf32>
    %1149 = arith.cmpf oge, %4, %1148 : vector<1x256xf32>
    %cst_462 = arith.constant 1.800000e+01 : f32
    %1150 = arith.subf %cst_462, %1146 : f32
    %1151 = vector.broadcast %1150 : f32 to vector<1x256xf32>
    %1152 = arith.cmpf ole, %4, %1151 : vector<1x256xf32>
    %1153 = arith.andi %1149, %1152 : vector<1x256xi1>
    %1154 = arith.extui %1153 : vector<1x256xi1> to vector<1x256xi32>
    %1155 = arith.sitofp %1154 : vector<1x256xi32> to vector<1x256xf32>
    %c3_i32_463 = arith.constant 3 : i32
    %1156 = arith.subi %c3_i32_463, %c5_i32_460 : i32
    %c16_i32_464 = arith.constant 16 : i32
    %1157 = arith.muli %1156, %c16_i32_464 : i32
    %cst_465 = arith.constant 0.000000e+00 : f32
    %1158 = vector.broadcast %cst_465 : f32 to vector<1x256xf32>
    %c3_i32_466 = arith.constant 3 : i32
    %1159 = arith.addi %1157, %c3_i32_466 : i32
    %c256_i32_467 = arith.constant 256 : i32
    %c0_i32_468 = arith.constant 0 : i32
    %1160 = arith.cmpi eq, %c256_i32_467, %c0_i32_468 : i32
    %c1_i32_469 = arith.constant 1 : i32
    %1161 = arith.select %1160, %c1_i32_469, %c256_i32_467 : i32
    %1162 = arith.remsi %1159, %1161 : i32
    %c0_i32_470 = arith.constant 0 : i32
    %1163 = arith.cmpi ne, %1162, %c0_i32_470 : i32
    %c0_i32_471 = arith.constant 0 : i32
    %1164 = arith.cmpi slt, %1162, %c0_i32_471 : i32
    %c0_i32_472 = arith.constant 0 : i32
    %1165 = arith.cmpi slt, %1161, %c0_i32_472 : i32
    %1166 = arith.xori %1164, %1165 : i1
    %1167 = arith.andi %1166, %1163 : i1
    %1168 = arith.addi %1162, %1161 : i32
    %1169 = arith.select %1167, %1168, %1162 : i32
    %c7_i32_473 = arith.constant 7 : i32
    %1170 = arith.muli %c5_i32_460, %c7_i32_473 : i32
    %c0_i32_474 = arith.constant 0 : i32
    %1171 = arith.addi %1170, %c0_i32_474 : i32
    %1172 = arith.index_cast %1171 : i32 to index
    %1173 = memref.load %arg3[%1172] : memref<98xf32, #tpu.memory_space<smem>>
    %c7_i32_475 = arith.constant 7 : i32
    %1174 = arith.muli %c5_i32_460, %c7_i32_475 : i32
    %c49_i32_476 = arith.constant 49 : i32
    %1175 = arith.addi %c49_i32_476, %1174 : i32
    %c0_i32_477 = arith.constant 0 : i32
    %1176 = arith.addi %1175, %c0_i32_477 : i32
    %1177 = arith.index_cast %1176 : i32 to index
    %1178 = memref.load %arg3[%1177] : memref<98xf32, #tpu.memory_space<smem>>
    %1179 = tpu.dynamic_rotate %1 by %1169 dim 1 : vector<1x256xf32>, i32 -> vector<1x256xf32>
    %1180 = vector.broadcast %1173 : f32 to vector<1x256xf32>
    %1181 = arith.mulf %1179, %1180 : vector<1x256xf32>
    %1182 = tpu.dynamic_rotate %3 by %1169 dim 1 : vector<1x256xf32>, i32 -> vector<1x256xf32>
    %1183 = vector.broadcast %1178 : f32 to vector<1x256xf32>
    %1184 = arith.mulf %1182, %1183 : vector<1x256xf32>
    %1185 = arith.addf %1181, %1184 : vector<1x256xf32>
    %1186 = arith.mulf %1185, %12 : vector<1x256xf32>
    %1187 = arith.addf %1158, %1186 : vector<1x256xf32>
    %c2_i32_478 = arith.constant 2 : i32
    %1188 = arith.addi %1157, %c2_i32_478 : i32
    %c256_i32_479 = arith.constant 256 : i32
    %c0_i32_480 = arith.constant 0 : i32
    %1189 = arith.cmpi eq, %c256_i32_479, %c0_i32_480 : i32
    %c1_i32_481 = arith.constant 1 : i32
    %1190 = arith.select %1189, %c1_i32_481, %c256_i32_479 : i32
    %1191 = arith.remsi %1188, %1190 : i32
    %c0_i32_482 = arith.constant 0 : i32
    %1192 = arith.cmpi ne, %1191, %c0_i32_482 : i32
    %c0_i32_483 = arith.constant 0 : i32
    %1193 = arith.cmpi slt, %1191, %c0_i32_483 : i32
    %c0_i32_484 = arith.constant 0 : i32
    %1194 = arith.cmpi slt, %1190, %c0_i32_484 : i32
    %1195 = arith.xori %1193, %1194 : i1
    %1196 = arith.andi %1195, %1192 : i1
    %1197 = arith.addi %1191, %1190 : i32
    %1198 = arith.select %1196, %1197, %1191 : i32
    %c7_i32_485 = arith.constant 7 : i32
    %1199 = arith.muli %c5_i32_460, %c7_i32_485 : i32
    %c1_i32_486 = arith.constant 1 : i32
    %1200 = arith.addi %1199, %c1_i32_486 : i32
    %1201 = arith.index_cast %1200 : i32 to index
    %1202 = memref.load %arg3[%1201] : memref<98xf32, #tpu.memory_space<smem>>
    %c7_i32_487 = arith.constant 7 : i32
    %1203 = arith.muli %c5_i32_460, %c7_i32_487 : i32
    %c49_i32_488 = arith.constant 49 : i32
    %1204 = arith.addi %c49_i32_488, %1203 : i32
    %c1_i32_489 = arith.constant 1 : i32
    %1205 = arith.addi %1204, %c1_i32_489 : i32
    %1206 = arith.index_cast %1205 : i32 to index
    %1207 = memref.load %arg3[%1206] : memref<98xf32, #tpu.memory_space<smem>>
    %1208 = tpu.dynamic_rotate %1 by %1198 dim 1 : vector<1x256xf32>, i32 -> vector<1x256xf32>
    %1209 = vector.broadcast %1202 : f32 to vector<1x256xf32>
    %1210 = arith.mulf %1208, %1209 : vector<1x256xf32>
    %1211 = tpu.dynamic_rotate %3 by %1198 dim 1 : vector<1x256xf32>, i32 -> vector<1x256xf32>
    %1212 = vector.broadcast %1207 : f32 to vector<1x256xf32>
    %1213 = arith.mulf %1211, %1212 : vector<1x256xf32>
    %1214 = arith.addf %1210, %1213 : vector<1x256xf32>
    %1215 = arith.mulf %1214, %19 : vector<1x256xf32>
    %1216 = arith.addf %1187, %1215 : vector<1x256xf32>
    %c1_i32_490 = arith.constant 1 : i32
    %1217 = arith.addi %1157, %c1_i32_490 : i32
    %c256_i32_491 = arith.constant 256 : i32
    %c0_i32_492 = arith.constant 0 : i32
    %1218 = arith.cmpi eq, %c256_i32_491, %c0_i32_492 : i32
    %c1_i32_493 = arith.constant 1 : i32
    %1219 = arith.select %1218, %c1_i32_493, %c256_i32_491 : i32
    %1220 = arith.remsi %1217, %1219 : i32
    %c0_i32_494 = arith.constant 0 : i32
    %1221 = arith.cmpi ne, %1220, %c0_i32_494 : i32
    %c0_i32_495 = arith.constant 0 : i32
    %1222 = arith.cmpi slt, %1220, %c0_i32_495 : i32
    %c0_i32_496 = arith.constant 0 : i32
    %1223 = arith.cmpi slt, %1219, %c0_i32_496 : i32
    %1224 = arith.xori %1222, %1223 : i1
    %1225 = arith.andi %1224, %1221 : i1
    %1226 = arith.addi %1220, %1219 : i32
    %1227 = arith.select %1225, %1226, %1220 : i32
    %c7_i32_497 = arith.constant 7 : i32
    %1228 = arith.muli %c5_i32_460, %c7_i32_497 : i32
    %c2_i32_498 = arith.constant 2 : i32
    %1229 = arith.addi %1228, %c2_i32_498 : i32
    %1230 = arith.index_cast %1229 : i32 to index
    %1231 = memref.load %arg3[%1230] : memref<98xf32, #tpu.memory_space<smem>>
    %c7_i32_499 = arith.constant 7 : i32
    %1232 = arith.muli %c5_i32_460, %c7_i32_499 : i32
    %c49_i32_500 = arith.constant 49 : i32
    %1233 = arith.addi %c49_i32_500, %1232 : i32
    %c2_i32_501 = arith.constant 2 : i32
    %1234 = arith.addi %1233, %c2_i32_501 : i32
    %1235 = arith.index_cast %1234 : i32 to index
    %1236 = memref.load %arg3[%1235] : memref<98xf32, #tpu.memory_space<smem>>
    %1237 = tpu.dynamic_rotate %1 by %1227 dim 1 : vector<1x256xf32>, i32 -> vector<1x256xf32>
    %1238 = vector.broadcast %1231 : f32 to vector<1x256xf32>
    %1239 = arith.mulf %1237, %1238 : vector<1x256xf32>
    %1240 = tpu.dynamic_rotate %3 by %1227 dim 1 : vector<1x256xf32>, i32 -> vector<1x256xf32>
    %1241 = vector.broadcast %1236 : f32 to vector<1x256xf32>
    %1242 = arith.mulf %1240, %1241 : vector<1x256xf32>
    %1243 = arith.addf %1239, %1242 : vector<1x256xf32>
    %1244 = arith.mulf %1243, %26 : vector<1x256xf32>
    %1245 = arith.addf %1216, %1244 : vector<1x256xf32>
    %c0_i32_502 = arith.constant 0 : i32
    %1246 = arith.addi %1157, %c0_i32_502 : i32
    %c256_i32_503 = arith.constant 256 : i32
    %c0_i32_504 = arith.constant 0 : i32
    %1247 = arith.cmpi eq, %c256_i32_503, %c0_i32_504 : i32
    %c1_i32_505 = arith.constant 1 : i32
    %1248 = arith.select %1247, %c1_i32_505, %c256_i32_503 : i32
    %1249 = arith.remsi %1246, %1248 : i32
    %c0_i32_506 = arith.constant 0 : i32
    %1250 = arith.cmpi ne, %1249, %c0_i32_506 : i32
    %c0_i32_507 = arith.constant 0 : i32
    %1251 = arith.cmpi slt, %1249, %c0_i32_507 : i32
    %c0_i32_508 = arith.constant 0 : i32
    %1252 = arith.cmpi slt, %1248, %c0_i32_508 : i32
    %1253 = arith.xori %1251, %1252 : i1
    %1254 = arith.andi %1253, %1250 : i1
    %1255 = arith.addi %1249, %1248 : i32
    %1256 = arith.select %1254, %1255, %1249 : i32
    %c7_i32_509 = arith.constant 7 : i32
    %1257 = arith.muli %c5_i32_460, %c7_i32_509 : i32
    %c3_i32_510 = arith.constant 3 : i32
    %1258 = arith.addi %1257, %c3_i32_510 : i32
    %1259 = arith.index_cast %1258 : i32 to index
    %1260 = memref.load %arg3[%1259] : memref<98xf32, #tpu.memory_space<smem>>
    %c7_i32_511 = arith.constant 7 : i32
    %1261 = arith.muli %c5_i32_460, %c7_i32_511 : i32
    %c49_i32_512 = arith.constant 49 : i32
    %1262 = arith.addi %c49_i32_512, %1261 : i32
    %c3_i32_513 = arith.constant 3 : i32
    %1263 = arith.addi %1262, %c3_i32_513 : i32
    %1264 = arith.index_cast %1263 : i32 to index
    %1265 = memref.load %arg3[%1264] : memref<98xf32, #tpu.memory_space<smem>>
    %1266 = tpu.dynamic_rotate %1 by %1256 dim 1 : vector<1x256xf32>, i32 -> vector<1x256xf32>
    %1267 = vector.broadcast %1260 : f32 to vector<1x256xf32>
    %1268 = arith.mulf %1266, %1267 : vector<1x256xf32>
    %1269 = tpu.dynamic_rotate %3 by %1256 dim 1 : vector<1x256xf32>, i32 -> vector<1x256xf32>
    %1270 = vector.broadcast %1265 : f32 to vector<1x256xf32>
    %1271 = arith.mulf %1269, %1270 : vector<1x256xf32>
    %1272 = arith.addf %1268, %1271 : vector<1x256xf32>
    %1273 = arith.mulf %1272, %33 : vector<1x256xf32>
    %1274 = arith.addf %1245, %1273 : vector<1x256xf32>
    %c-1_i32_514 = arith.constant -1 : i32
    %1275 = arith.addi %1157, %c-1_i32_514 : i32
    %c256_i32_515 = arith.constant 256 : i32
    %c0_i32_516 = arith.constant 0 : i32
    %1276 = arith.cmpi eq, %c256_i32_515, %c0_i32_516 : i32
    %c1_i32_517 = arith.constant 1 : i32
    %1277 = arith.select %1276, %c1_i32_517, %c256_i32_515 : i32
    %1278 = arith.remsi %1275, %1277 : i32
    %c0_i32_518 = arith.constant 0 : i32
    %1279 = arith.cmpi ne, %1278, %c0_i32_518 : i32
    %c0_i32_519 = arith.constant 0 : i32
    %1280 = arith.cmpi slt, %1278, %c0_i32_519 : i32
    %c0_i32_520 = arith.constant 0 : i32
    %1281 = arith.cmpi slt, %1277, %c0_i32_520 : i32
    %1282 = arith.xori %1280, %1281 : i1
    %1283 = arith.andi %1282, %1279 : i1
    %1284 = arith.addi %1278, %1277 : i32
    %1285 = arith.select %1283, %1284, %1278 : i32
    %c7_i32_521 = arith.constant 7 : i32
    %1286 = arith.muli %c5_i32_460, %c7_i32_521 : i32
    %c4_i32_522 = arith.constant 4 : i32
    %1287 = arith.addi %1286, %c4_i32_522 : i32
    %1288 = arith.index_cast %1287 : i32 to index
    %1289 = memref.load %arg3[%1288] : memref<98xf32, #tpu.memory_space<smem>>
    %c7_i32_523 = arith.constant 7 : i32
    %1290 = arith.muli %c5_i32_460, %c7_i32_523 : i32
    %c49_i32_524 = arith.constant 49 : i32
    %1291 = arith.addi %c49_i32_524, %1290 : i32
    %c4_i32_525 = arith.constant 4 : i32
    %1292 = arith.addi %1291, %c4_i32_525 : i32
    %1293 = arith.index_cast %1292 : i32 to index
    %1294 = memref.load %arg3[%1293] : memref<98xf32, #tpu.memory_space<smem>>
    %1295 = tpu.dynamic_rotate %1 by %1285 dim 1 : vector<1x256xf32>, i32 -> vector<1x256xf32>
    %1296 = vector.broadcast %1289 : f32 to vector<1x256xf32>
    %1297 = arith.mulf %1295, %1296 : vector<1x256xf32>
    %1298 = tpu.dynamic_rotate %3 by %1285 dim 1 : vector<1x256xf32>, i32 -> vector<1x256xf32>
    %1299 = vector.broadcast %1294 : f32 to vector<1x256xf32>
    %1300 = arith.mulf %1298, %1299 : vector<1x256xf32>
    %1301 = arith.addf %1297, %1300 : vector<1x256xf32>
    %1302 = arith.mulf %1301, %40 : vector<1x256xf32>
    %1303 = arith.addf %1274, %1302 : vector<1x256xf32>
    %c-2_i32_526 = arith.constant -2 : i32
    %1304 = arith.addi %1157, %c-2_i32_526 : i32
    %c256_i32_527 = arith.constant 256 : i32
    %c0_i32_528 = arith.constant 0 : i32
    %1305 = arith.cmpi eq, %c256_i32_527, %c0_i32_528 : i32
    %c1_i32_529 = arith.constant 1 : i32
    %1306 = arith.select %1305, %c1_i32_529, %c256_i32_527 : i32
    %1307 = arith.remsi %1304, %1306 : i32
    %c0_i32_530 = arith.constant 0 : i32
    %1308 = arith.cmpi ne, %1307, %c0_i32_530 : i32
    %c0_i32_531 = arith.constant 0 : i32
    %1309 = arith.cmpi slt, %1307, %c0_i32_531 : i32
    %c0_i32_532 = arith.constant 0 : i32
    %1310 = arith.cmpi slt, %1306, %c0_i32_532 : i32
    %1311 = arith.xori %1309, %1310 : i1
    %1312 = arith.andi %1311, %1308 : i1
    %1313 = arith.addi %1307, %1306 : i32
    %1314 = arith.select %1312, %1313, %1307 : i32
    %c7_i32_533 = arith.constant 7 : i32
    %1315 = arith.muli %c5_i32_460, %c7_i32_533 : i32
    %c5_i32_534 = arith.constant 5 : i32
    %1316 = arith.addi %1315, %c5_i32_534 : i32
    %1317 = arith.index_cast %1316 : i32 to index
    %1318 = memref.load %arg3[%1317] : memref<98xf32, #tpu.memory_space<smem>>
    %c7_i32_535 = arith.constant 7 : i32
    %1319 = arith.muli %c5_i32_460, %c7_i32_535 : i32
    %c49_i32_536 = arith.constant 49 : i32
    %1320 = arith.addi %c49_i32_536, %1319 : i32
    %c5_i32_537 = arith.constant 5 : i32
    %1321 = arith.addi %1320, %c5_i32_537 : i32
    %1322 = arith.index_cast %1321 : i32 to index
    %1323 = memref.load %arg3[%1322] : memref<98xf32, #tpu.memory_space<smem>>
    %1324 = tpu.dynamic_rotate %1 by %1314 dim 1 : vector<1x256xf32>, i32 -> vector<1x256xf32>
    %1325 = vector.broadcast %1318 : f32 to vector<1x256xf32>
    %1326 = arith.mulf %1324, %1325 : vector<1x256xf32>
    %1327 = tpu.dynamic_rotate %3 by %1314 dim 1 : vector<1x256xf32>, i32 -> vector<1x256xf32>
    %1328 = vector.broadcast %1323 : f32 to vector<1x256xf32>
    %1329 = arith.mulf %1327, %1328 : vector<1x256xf32>
    %1330 = arith.addf %1326, %1329 : vector<1x256xf32>
    %1331 = arith.mulf %1330, %47 : vector<1x256xf32>
    %1332 = arith.addf %1303, %1331 : vector<1x256xf32>
    %c-3_i32_538 = arith.constant -3 : i32
    %1333 = arith.addi %1157, %c-3_i32_538 : i32
    %c256_i32_539 = arith.constant 256 : i32
    %c0_i32_540 = arith.constant 0 : i32
    %1334 = arith.cmpi eq, %c256_i32_539, %c0_i32_540 : i32
    %c1_i32_541 = arith.constant 1 : i32
    %1335 = arith.select %1334, %c1_i32_541, %c256_i32_539 : i32
    %1336 = arith.remsi %1333, %1335 : i32
    %c0_i32_542 = arith.constant 0 : i32
    %1337 = arith.cmpi ne, %1336, %c0_i32_542 : i32
    %c0_i32_543 = arith.constant 0 : i32
    %1338 = arith.cmpi slt, %1336, %c0_i32_543 : i32
    %c0_i32_544 = arith.constant 0 : i32
    %1339 = arith.cmpi slt, %1335, %c0_i32_544 : i32
    %1340 = arith.xori %1338, %1339 : i1
    %1341 = arith.andi %1340, %1337 : i1
    %1342 = arith.addi %1336, %1335 : i32
    %1343 = arith.select %1341, %1342, %1336 : i32
    %c7_i32_545 = arith.constant 7 : i32
    %1344 = arith.muli %c5_i32_460, %c7_i32_545 : i32
    %c6_i32_546 = arith.constant 6 : i32
    %1345 = arith.addi %1344, %c6_i32_546 : i32
    %1346 = arith.index_cast %1345 : i32 to index
    %1347 = memref.load %arg3[%1346] : memref<98xf32, #tpu.memory_space<smem>>
    %c7_i32_547 = arith.constant 7 : i32
    %1348 = arith.muli %c5_i32_460, %c7_i32_547 : i32
    %c49_i32_548 = arith.constant 49 : i32
    %1349 = arith.addi %c49_i32_548, %1348 : i32
    %c6_i32_549 = arith.constant 6 : i32
    %1350 = arith.addi %1349, %c6_i32_549 : i32
    %1351 = arith.index_cast %1350 : i32 to index
    %1352 = memref.load %arg3[%1351] : memref<98xf32, #tpu.memory_space<smem>>
    %1353 = tpu.dynamic_rotate %1 by %1343 dim 1 : vector<1x256xf32>, i32 -> vector<1x256xf32>
    %1354 = vector.broadcast %1347 : f32 to vector<1x256xf32>
    %1355 = arith.mulf %1353, %1354 : vector<1x256xf32>
    %1356 = tpu.dynamic_rotate %3 by %1343 dim 1 : vector<1x256xf32>, i32 -> vector<1x256xf32>
    %1357 = vector.broadcast %1352 : f32 to vector<1x256xf32>
    %1358 = arith.mulf %1356, %1357 : vector<1x256xf32>
    %1359 = arith.addf %1355, %1358 : vector<1x256xf32>
    %1360 = arith.mulf %1359, %54 : vector<1x256xf32>
    %1361 = arith.addf %1332, %1360 : vector<1x256xf32>
    %1362 = arith.mulf %1361, %1155 : vector<1x256xf32>
    %1363 = arith.addf %1145, %1362 : vector<1x256xf32>
    %c6_i32_550 = arith.constant 6 : i32
    %1364 = arith.sitofp %c6_i32_550 : i32 to f32
    %cst_551 = arith.constant 3.000000e+00 : f32
    %1365 = arith.subf %cst_551, %1364 : f32
    %1366 = vector.broadcast %1365 : f32 to vector<1x256xf32>
    %1367 = arith.cmpf oge, %4, %1366 : vector<1x256xf32>
    %cst_552 = arith.constant 1.800000e+01 : f32
    %1368 = arith.subf %cst_552, %1364 : f32
    %1369 = vector.broadcast %1368 : f32 to vector<1x256xf32>
    %1370 = arith.cmpf ole, %4, %1369 : vector<1x256xf32>
    %1371 = arith.andi %1367, %1370 : vector<1x256xi1>
    %1372 = arith.extui %1371 : vector<1x256xi1> to vector<1x256xi32>
    %1373 = arith.sitofp %1372 : vector<1x256xi32> to vector<1x256xf32>
    %c3_i32_553 = arith.constant 3 : i32
    %1374 = arith.subi %c3_i32_553, %c6_i32_550 : i32
    %c16_i32_554 = arith.constant 16 : i32
    %1375 = arith.muli %1374, %c16_i32_554 : i32
    %cst_555 = arith.constant 0.000000e+00 : f32
    %1376 = vector.broadcast %cst_555 : f32 to vector<1x256xf32>
    %c3_i32_556 = arith.constant 3 : i32
    %1377 = arith.addi %1375, %c3_i32_556 : i32
    %c256_i32_557 = arith.constant 256 : i32
    %c0_i32_558 = arith.constant 0 : i32
    %1378 = arith.cmpi eq, %c256_i32_557, %c0_i32_558 : i32
    %c1_i32_559 = arith.constant 1 : i32
    %1379 = arith.select %1378, %c1_i32_559, %c256_i32_557 : i32
    %1380 = arith.remsi %1377, %1379 : i32
    %c0_i32_560 = arith.constant 0 : i32
    %1381 = arith.cmpi ne, %1380, %c0_i32_560 : i32
    %c0_i32_561 = arith.constant 0 : i32
    %1382 = arith.cmpi slt, %1380, %c0_i32_561 : i32
    %c0_i32_562 = arith.constant 0 : i32
    %1383 = arith.cmpi slt, %1379, %c0_i32_562 : i32
    %1384 = arith.xori %1382, %1383 : i1
    %1385 = arith.andi %1384, %1381 : i1
    %1386 = arith.addi %1380, %1379 : i32
    %1387 = arith.select %1385, %1386, %1380 : i32
    %c7_i32_563 = arith.constant 7 : i32
    %1388 = arith.muli %c6_i32_550, %c7_i32_563 : i32
    %c0_i32_564 = arith.constant 0 : i32
    %1389 = arith.addi %1388, %c0_i32_564 : i32
    %1390 = arith.index_cast %1389 : i32 to index
    %1391 = memref.load %arg3[%1390] : memref<98xf32, #tpu.memory_space<smem>>
    %c7_i32_565 = arith.constant 7 : i32
    %1392 = arith.muli %c6_i32_550, %c7_i32_565 : i32
    %c49_i32_566 = arith.constant 49 : i32
    %1393 = arith.addi %c49_i32_566, %1392 : i32
    %c0_i32_567 = arith.constant 0 : i32
    %1394 = arith.addi %1393, %c0_i32_567 : i32
    %1395 = arith.index_cast %1394 : i32 to index
    %1396 = memref.load %arg3[%1395] : memref<98xf32, #tpu.memory_space<smem>>
    %1397 = tpu.dynamic_rotate %1 by %1387 dim 1 : vector<1x256xf32>, i32 -> vector<1x256xf32>
    %1398 = vector.broadcast %1391 : f32 to vector<1x256xf32>
    %1399 = arith.mulf %1397, %1398 : vector<1x256xf32>
    %1400 = tpu.dynamic_rotate %3 by %1387 dim 1 : vector<1x256xf32>, i32 -> vector<1x256xf32>
    %1401 = vector.broadcast %1396 : f32 to vector<1x256xf32>
    %1402 = arith.mulf %1400, %1401 : vector<1x256xf32>
    %1403 = arith.addf %1399, %1402 : vector<1x256xf32>
    %1404 = arith.mulf %1403, %12 : vector<1x256xf32>
    %1405 = arith.addf %1376, %1404 : vector<1x256xf32>
    %c2_i32_568 = arith.constant 2 : i32
    %1406 = arith.addi %1375, %c2_i32_568 : i32
    %c256_i32_569 = arith.constant 256 : i32
    %c0_i32_570 = arith.constant 0 : i32
    %1407 = arith.cmpi eq, %c256_i32_569, %c0_i32_570 : i32
    %c1_i32_571 = arith.constant 1 : i32
    %1408 = arith.select %1407, %c1_i32_571, %c256_i32_569 : i32
    %1409 = arith.remsi %1406, %1408 : i32
    %c0_i32_572 = arith.constant 0 : i32
    %1410 = arith.cmpi ne, %1409, %c0_i32_572 : i32
    %c0_i32_573 = arith.constant 0 : i32
    %1411 = arith.cmpi slt, %1409, %c0_i32_573 : i32
    %c0_i32_574 = arith.constant 0 : i32
    %1412 = arith.cmpi slt, %1408, %c0_i32_574 : i32
    %1413 = arith.xori %1411, %1412 : i1
    %1414 = arith.andi %1413, %1410 : i1
    %1415 = arith.addi %1409, %1408 : i32
    %1416 = arith.select %1414, %1415, %1409 : i32
    %c7_i32_575 = arith.constant 7 : i32
    %1417 = arith.muli %c6_i32_550, %c7_i32_575 : i32
    %c1_i32_576 = arith.constant 1 : i32
    %1418 = arith.addi %1417, %c1_i32_576 : i32
    %1419 = arith.index_cast %1418 : i32 to index
    %1420 = memref.load %arg3[%1419] : memref<98xf32, #tpu.memory_space<smem>>
    %c7_i32_577 = arith.constant 7 : i32
    %1421 = arith.muli %c6_i32_550, %c7_i32_577 : i32
    %c49_i32_578 = arith.constant 49 : i32
    %1422 = arith.addi %c49_i32_578, %1421 : i32
    %c1_i32_579 = arith.constant 1 : i32
    %1423 = arith.addi %1422, %c1_i32_579 : i32
    %1424 = arith.index_cast %1423 : i32 to index
    %1425 = memref.load %arg3[%1424] : memref<98xf32, #tpu.memory_space<smem>>
    %1426 = tpu.dynamic_rotate %1 by %1416 dim 1 : vector<1x256xf32>, i32 -> vector<1x256xf32>
    %1427 = vector.broadcast %1420 : f32 to vector<1x256xf32>
    %1428 = arith.mulf %1426, %1427 : vector<1x256xf32>
    %1429 = tpu.dynamic_rotate %3 by %1416 dim 1 : vector<1x256xf32>, i32 -> vector<1x256xf32>
    %1430 = vector.broadcast %1425 : f32 to vector<1x256xf32>
    %1431 = arith.mulf %1429, %1430 : vector<1x256xf32>
    %1432 = arith.addf %1428, %1431 : vector<1x256xf32>
    %1433 = arith.mulf %1432, %19 : vector<1x256xf32>
    %1434 = arith.addf %1405, %1433 : vector<1x256xf32>
    %c1_i32_580 = arith.constant 1 : i32
    %1435 = arith.addi %1375, %c1_i32_580 : i32
    %c256_i32_581 = arith.constant 256 : i32
    %c0_i32_582 = arith.constant 0 : i32
    %1436 = arith.cmpi eq, %c256_i32_581, %c0_i32_582 : i32
    %c1_i32_583 = arith.constant 1 : i32
    %1437 = arith.select %1436, %c1_i32_583, %c256_i32_581 : i32
    %1438 = arith.remsi %1435, %1437 : i32
    %c0_i32_584 = arith.constant 0 : i32
    %1439 = arith.cmpi ne, %1438, %c0_i32_584 : i32
    %c0_i32_585 = arith.constant 0 : i32
    %1440 = arith.cmpi slt, %1438, %c0_i32_585 : i32
    %c0_i32_586 = arith.constant 0 : i32
    %1441 = arith.cmpi slt, %1437, %c0_i32_586 : i32
    %1442 = arith.xori %1440, %1441 : i1
    %1443 = arith.andi %1442, %1439 : i1
    %1444 = arith.addi %1438, %1437 : i32
    %1445 = arith.select %1443, %1444, %1438 : i32
    %c7_i32_587 = arith.constant 7 : i32
    %1446 = arith.muli %c6_i32_550, %c7_i32_587 : i32
    %c2_i32_588 = arith.constant 2 : i32
    %1447 = arith.addi %1446, %c2_i32_588 : i32
    %1448 = arith.index_cast %1447 : i32 to index
    %1449 = memref.load %arg3[%1448] : memref<98xf32, #tpu.memory_space<smem>>
    %c7_i32_589 = arith.constant 7 : i32
    %1450 = arith.muli %c6_i32_550, %c7_i32_589 : i32
    %c49_i32_590 = arith.constant 49 : i32
    %1451 = arith.addi %c49_i32_590, %1450 : i32
    %c2_i32_591 = arith.constant 2 : i32
    %1452 = arith.addi %1451, %c2_i32_591 : i32
    %1453 = arith.index_cast %1452 : i32 to index
    %1454 = memref.load %arg3[%1453] : memref<98xf32, #tpu.memory_space<smem>>
    %1455 = tpu.dynamic_rotate %1 by %1445 dim 1 : vector<1x256xf32>, i32 -> vector<1x256xf32>
    %1456 = vector.broadcast %1449 : f32 to vector<1x256xf32>
    %1457 = arith.mulf %1455, %1456 : vector<1x256xf32>
    %1458 = tpu.dynamic_rotate %3 by %1445 dim 1 : vector<1x256xf32>, i32 -> vector<1x256xf32>
    %1459 = vector.broadcast %1454 : f32 to vector<1x256xf32>
    %1460 = arith.mulf %1458, %1459 : vector<1x256xf32>
    %1461 = arith.addf %1457, %1460 : vector<1x256xf32>
    %1462 = arith.mulf %1461, %26 : vector<1x256xf32>
    %1463 = arith.addf %1434, %1462 : vector<1x256xf32>
    %c0_i32_592 = arith.constant 0 : i32
    %1464 = arith.addi %1375, %c0_i32_592 : i32
    %c256_i32_593 = arith.constant 256 : i32
    %c0_i32_594 = arith.constant 0 : i32
    %1465 = arith.cmpi eq, %c256_i32_593, %c0_i32_594 : i32
    %c1_i32_595 = arith.constant 1 : i32
    %1466 = arith.select %1465, %c1_i32_595, %c256_i32_593 : i32
    %1467 = arith.remsi %1464, %1466 : i32
    %c0_i32_596 = arith.constant 0 : i32
    %1468 = arith.cmpi ne, %1467, %c0_i32_596 : i32
    %c0_i32_597 = arith.constant 0 : i32
    %1469 = arith.cmpi slt, %1467, %c0_i32_597 : i32
    %c0_i32_598 = arith.constant 0 : i32
    %1470 = arith.cmpi slt, %1466, %c0_i32_598 : i32
    %1471 = arith.xori %1469, %1470 : i1
    %1472 = arith.andi %1471, %1468 : i1
    %1473 = arith.addi %1467, %1466 : i32
    %1474 = arith.select %1472, %1473, %1467 : i32
    %c7_i32_599 = arith.constant 7 : i32
    %1475 = arith.muli %c6_i32_550, %c7_i32_599 : i32
    %c3_i32_600 = arith.constant 3 : i32
    %1476 = arith.addi %1475, %c3_i32_600 : i32
    %1477 = arith.index_cast %1476 : i32 to index
    %1478 = memref.load %arg3[%1477] : memref<98xf32, #tpu.memory_space<smem>>
    %c7_i32_601 = arith.constant 7 : i32
    %1479 = arith.muli %c6_i32_550, %c7_i32_601 : i32
    %c49_i32_602 = arith.constant 49 : i32
    %1480 = arith.addi %c49_i32_602, %1479 : i32
    %c3_i32_603 = arith.constant 3 : i32
    %1481 = arith.addi %1480, %c3_i32_603 : i32
    %1482 = arith.index_cast %1481 : i32 to index
    %1483 = memref.load %arg3[%1482] : memref<98xf32, #tpu.memory_space<smem>>
    %1484 = tpu.dynamic_rotate %1 by %1474 dim 1 : vector<1x256xf32>, i32 -> vector<1x256xf32>
    %1485 = vector.broadcast %1478 : f32 to vector<1x256xf32>
    %1486 = arith.mulf %1484, %1485 : vector<1x256xf32>
    %1487 = tpu.dynamic_rotate %3 by %1474 dim 1 : vector<1x256xf32>, i32 -> vector<1x256xf32>
    %1488 = vector.broadcast %1483 : f32 to vector<1x256xf32>
    %1489 = arith.mulf %1487, %1488 : vector<1x256xf32>
    %1490 = arith.addf %1486, %1489 : vector<1x256xf32>
    %1491 = arith.mulf %1490, %33 : vector<1x256xf32>
    %1492 = arith.addf %1463, %1491 : vector<1x256xf32>
    %c-1_i32_604 = arith.constant -1 : i32
    %1493 = arith.addi %1375, %c-1_i32_604 : i32
    %c256_i32_605 = arith.constant 256 : i32
    %c0_i32_606 = arith.constant 0 : i32
    %1494 = arith.cmpi eq, %c256_i32_605, %c0_i32_606 : i32
    %c1_i32_607 = arith.constant 1 : i32
    %1495 = arith.select %1494, %c1_i32_607, %c256_i32_605 : i32
    %1496 = arith.remsi %1493, %1495 : i32
    %c0_i32_608 = arith.constant 0 : i32
    %1497 = arith.cmpi ne, %1496, %c0_i32_608 : i32
    %c0_i32_609 = arith.constant 0 : i32
    %1498 = arith.cmpi slt, %1496, %c0_i32_609 : i32
    %c0_i32_610 = arith.constant 0 : i32
    %1499 = arith.cmpi slt, %1495, %c0_i32_610 : i32
    %1500 = arith.xori %1498, %1499 : i1
    %1501 = arith.andi %1500, %1497 : i1
    %1502 = arith.addi %1496, %1495 : i32
    %1503 = arith.select %1501, %1502, %1496 : i32
    %c7_i32_611 = arith.constant 7 : i32
    %1504 = arith.muli %c6_i32_550, %c7_i32_611 : i32
    %c4_i32_612 = arith.constant 4 : i32
    %1505 = arith.addi %1504, %c4_i32_612 : i32
    %1506 = arith.index_cast %1505 : i32 to index
    %1507 = memref.load %arg3[%1506] : memref<98xf32, #tpu.memory_space<smem>>
    %c7_i32_613 = arith.constant 7 : i32
    %1508 = arith.muli %c6_i32_550, %c7_i32_613 : i32
    %c49_i32_614 = arith.constant 49 : i32
    %1509 = arith.addi %c49_i32_614, %1508 : i32
    %c4_i32_615 = arith.constant 4 : i32
    %1510 = arith.addi %1509, %c4_i32_615 : i32
    %1511 = arith.index_cast %1510 : i32 to index
    %1512 = memref.load %arg3[%1511] : memref<98xf32, #tpu.memory_space<smem>>
    %1513 = tpu.dynamic_rotate %1 by %1503 dim 1 : vector<1x256xf32>, i32 -> vector<1x256xf32>
    %1514 = vector.broadcast %1507 : f32 to vector<1x256xf32>
    %1515 = arith.mulf %1513, %1514 : vector<1x256xf32>
    %1516 = tpu.dynamic_rotate %3 by %1503 dim 1 : vector<1x256xf32>, i32 -> vector<1x256xf32>
    %1517 = vector.broadcast %1512 : f32 to vector<1x256xf32>
    %1518 = arith.mulf %1516, %1517 : vector<1x256xf32>
    %1519 = arith.addf %1515, %1518 : vector<1x256xf32>
    %1520 = arith.mulf %1519, %40 : vector<1x256xf32>
    %1521 = arith.addf %1492, %1520 : vector<1x256xf32>
    %c-2_i32_616 = arith.constant -2 : i32
    %1522 = arith.addi %1375, %c-2_i32_616 : i32
    %c256_i32_617 = arith.constant 256 : i32
    %c0_i32_618 = arith.constant 0 : i32
    %1523 = arith.cmpi eq, %c256_i32_617, %c0_i32_618 : i32
    %c1_i32_619 = arith.constant 1 : i32
    %1524 = arith.select %1523, %c1_i32_619, %c256_i32_617 : i32
    %1525 = arith.remsi %1522, %1524 : i32
    %c0_i32_620 = arith.constant 0 : i32
    %1526 = arith.cmpi ne, %1525, %c0_i32_620 : i32
    %c0_i32_621 = arith.constant 0 : i32
    %1527 = arith.cmpi slt, %1525, %c0_i32_621 : i32
    %c0_i32_622 = arith.constant 0 : i32
    %1528 = arith.cmpi slt, %1524, %c0_i32_622 : i32
    %1529 = arith.xori %1527, %1528 : i1
    %1530 = arith.andi %1529, %1526 : i1
    %1531 = arith.addi %1525, %1524 : i32
    %1532 = arith.select %1530, %1531, %1525 : i32
    %c7_i32_623 = arith.constant 7 : i32
    %1533 = arith.muli %c6_i32_550, %c7_i32_623 : i32
    %c5_i32_624 = arith.constant 5 : i32
    %1534 = arith.addi %1533, %c5_i32_624 : i32
    %1535 = arith.index_cast %1534 : i32 to index
    %1536 = memref.load %arg3[%1535] : memref<98xf32, #tpu.memory_space<smem>>
    %c7_i32_625 = arith.constant 7 : i32
    %1537 = arith.muli %c6_i32_550, %c7_i32_625 : i32
    %c49_i32_626 = arith.constant 49 : i32
    %1538 = arith.addi %c49_i32_626, %1537 : i32
    %c5_i32_627 = arith.constant 5 : i32
    %1539 = arith.addi %1538, %c5_i32_627 : i32
    %1540 = arith.index_cast %1539 : i32 to index
    %1541 = memref.load %arg3[%1540] : memref<98xf32, #tpu.memory_space<smem>>
    %1542 = tpu.dynamic_rotate %1 by %1532 dim 1 : vector<1x256xf32>, i32 -> vector<1x256xf32>
    %1543 = vector.broadcast %1536 : f32 to vector<1x256xf32>
    %1544 = arith.mulf %1542, %1543 : vector<1x256xf32>
    %1545 = tpu.dynamic_rotate %3 by %1532 dim 1 : vector<1x256xf32>, i32 -> vector<1x256xf32>
    %1546 = vector.broadcast %1541 : f32 to vector<1x256xf32>
    %1547 = arith.mulf %1545, %1546 : vector<1x256xf32>
    %1548 = arith.addf %1544, %1547 : vector<1x256xf32>
    %1549 = arith.mulf %1548, %47 : vector<1x256xf32>
    %1550 = arith.addf %1521, %1549 : vector<1x256xf32>
    %c-3_i32_628 = arith.constant -3 : i32
    %1551 = arith.addi %1375, %c-3_i32_628 : i32
    %c256_i32_629 = arith.constant 256 : i32
    %c0_i32_630 = arith.constant 0 : i32
    %1552 = arith.cmpi eq, %c256_i32_629, %c0_i32_630 : i32
    %c1_i32_631 = arith.constant 1 : i32
    %1553 = arith.select %1552, %c1_i32_631, %c256_i32_629 : i32
    %1554 = arith.remsi %1551, %1553 : i32
    %c0_i32_632 = arith.constant 0 : i32
    %1555 = arith.cmpi ne, %1554, %c0_i32_632 : i32
    %c0_i32_633 = arith.constant 0 : i32
    %1556 = arith.cmpi slt, %1554, %c0_i32_633 : i32
    %c0_i32_634 = arith.constant 0 : i32
    %1557 = arith.cmpi slt, %1553, %c0_i32_634 : i32
    %1558 = arith.xori %1556, %1557 : i1
    %1559 = arith.andi %1558, %1555 : i1
    %1560 = arith.addi %1554, %1553 : i32
    %1561 = arith.select %1559, %1560, %1554 : i32
    %c7_i32_635 = arith.constant 7 : i32
    %1562 = arith.muli %c6_i32_550, %c7_i32_635 : i32
    %c6_i32_636 = arith.constant 6 : i32
    %1563 = arith.addi %1562, %c6_i32_636 : i32
    %1564 = arith.index_cast %1563 : i32 to index
    %1565 = memref.load %arg3[%1564] : memref<98xf32, #tpu.memory_space<smem>>
    %c7_i32_637 = arith.constant 7 : i32
    %1566 = arith.muli %c6_i32_550, %c7_i32_637 : i32
    %c49_i32_638 = arith.constant 49 : i32
    %1567 = arith.addi %c49_i32_638, %1566 : i32
    %c6_i32_639 = arith.constant 6 : i32
    %1568 = arith.addi %1567, %c6_i32_639 : i32
    %1569 = arith.index_cast %1568 : i32 to index
    %1570 = memref.load %arg3[%1569] : memref<98xf32, #tpu.memory_space<smem>>
    %1571 = tpu.dynamic_rotate %1 by %1561 dim 1 : vector<1x256xf32>, i32 -> vector<1x256xf32>
    %1572 = vector.broadcast %1565 : f32 to vector<1x256xf32>
    %1573 = arith.mulf %1571, %1572 : vector<1x256xf32>
    %1574 = tpu.dynamic_rotate %3 by %1561 dim 1 : vector<1x256xf32>, i32 -> vector<1x256xf32>
    %1575 = vector.broadcast %1570 : f32 to vector<1x256xf32>
    %1576 = arith.mulf %1574, %1575 : vector<1x256xf32>
    %1577 = arith.addf %1573, %1576 : vector<1x256xf32>
    %1578 = arith.mulf %1577, %54 : vector<1x256xf32>
    %1579 = arith.addf %1550, %1578 : vector<1x256xf32>
    %1580 = arith.mulf %1579, %1373 : vector<1x256xf32>
    %1581 = arith.addf %1363, %1580 : vector<1x256xf32>
    %c7_i32_640 = arith.constant 7 : i32
    %c0_641 = arith.constant 0 : index
    %1582 = memref.load %arg4[%c0_641] : memref<1xf32, #tpu.memory_space<smem>>
    %1583 = vector.broadcast %1582 : f32 to vector<1x256xf32>
    %1584 = arith.addf %1581, %1583 : vector<1x256xf32>
    %1585 = arith.negf %1584 : vector<1x256xf32>
    %1586 = math.exp %1585 : vector<1x256xf32>
    %cst_642 = arith.constant 1.000000e+00 : f32
    %1587 = vector.broadcast %cst_642 : f32 to vector<1x256xf32>
    %1588 = arith.addf %1587, %1586 : vector<1x256xf32>
    %1589 = arith.divf %1587, %1588 : vector<1x256xf32>
    %c0_643 = arith.constant 0 : index
    %c0_644 = arith.constant 0 : index
    %c0_645 = arith.constant 0 : index
    %1590 = vector.load %arg1[%c0_643, %c0_644, %c0_645] : memref<1x4x256xf32, #tpu.memory_space<vmem>>, vector<1x4x256xf32>
    %1591 = vector.shape_cast %1589 : vector<1x256xf32> to vector<1x1x256xf32>
    %1592 = vector.broadcast %1591 : vector<1x1x256xf32> to vector<1x4x256xf32>
    %1593 = arith.mulf %1590, %1592 : vector<1x4x256xf32>
    %c0_646 = arith.constant 0 : index
    %c0_647 = arith.constant 0 : index
    %c0_648 = arith.constant 0 : index
    %1594 = vector.load %arg5[%c0_646, %c0_647, %c0_648] : memref<1x4x256xf32, #tpu.memory_space<vmem>>, vector<1x4x256xf32>
    tpu.vector_store %arg5[%c0_646, %c0_647, %c0_648], %1593 {strides = array<i32>} : memref<1x4x256xf32, #tpu.memory_space<vmem>>, vector<1x4x256xf32>,
    return
  }
  func.func @transform_0(%arg0: i32) -> (i32, i32, i32) {
    %c0_i32 = arith.constant 0 : i32
    %c0_i32_0 = arith.constant 0 : i32
    %c0_i32_1 = arith.constant 0 : i32
    return %arg0, %c0_i32, %c0_i32_0 : i32, i32, i32
  }
  func.func @transform_1(%arg0: i32) -> (i32, i32) {
    %c0_i32 = arith.constant 0 : i32
    %c0_i32_0 = arith.constant 0 : i32
    %c0_i32_1 = arith.constant 0 : i32
    return %c0_i32, %c0_i32_0 : i32, i32
  }
  func.func @transform_2(%arg0: i32) -> i32 {
    %c0_i32 = arith.constant 0 : i32
    %c0_i32_0 = arith.constant 0 : i32
    return %c0_i32 : i32
  }
  func.func @transform_3(%arg0: i32) -> i32 {
    %c0_i32 = arith.constant 0 : i32
    %c0_i32_0 = arith.constant 0 : i32
    return %c0_i32 : i32
  }
  func.func @transform_4(%arg0: i32) -> (i32, i32, i32) {
    %c0_i32 = arith.constant 0 : i32
    %c0_i32_0 = arith.constant 0 : i32
    %c0_i32_1 = arith.constant 0 : i32
    return %arg0, %c0_i32, %c0_i32_0 : i32, i32, i32
  }
}

</mosaic_0001>

<llo_original>
// kernel: tpu_custom_call.1
$region0: #{tpu_custom_call.1}
  #allocation0 [shape = 'u32[]', space=smem, size = 0x4, offset = 0x4, fixed_abs, tag = 'smem constant byte address 0x4 - core index']
  #allocation1 [shape = 'u32[144,128]{1,0:T(1,128)}', space=vmem, size = 0x12000, scoped, tag = 'internal scratch']
  #allocation2 [shape = 'f32[1]{0:T(128)S(6)}', space=smem, size = 0x200, scoped, tag = 'scoped memory for tpu_custom_call.1']
  %s0 = inlined_call_operand.hbm [shape: f32[2,4,256], index: 0, kind: input, shape index: {}, may-alias: {0,4}]
  %s1 = inlined_call_operand.vmem [shape: f32[2,256], index: 1, kind: input, shape index: {}]
  %s2 = inlined_call_operand.vmem [shape: f32[98], index: 2, kind: input, shape index: {}]
  %s3 = inlined_call_operand.<no memory space> [shape: f32[1], index: 3, kind: input, shape index: {}]
  %s4 = inlined_call_operand.hbm [shape: f32[2,4,256], index: 4, kind: output, shape index: {}, may-alias: {0,4}]
  %s5 = sld [smem:[#allocation0]]
  $region57: #{tpu_custom_call.1} parent=0
    _
  %s7 = ssub.s32 1, %s5
  %s8 = scalar_select 0, %s7, %s5
  %9 = sst [smem:[#allocation2]] %s3
  $region1: #{tpu_custom_call.1} parent=0
    #allocation3 [shape = 'u8[8192]{0}', space=vmem, size = 0x2000, scoped, tag = 'input window, operand 0']
    #allocation4 [shape = 's32[2]{0}', space=sflag, size = 0x8, scoped, tag = 'scoped memory for tpu_custom_call.1']
    #allocation5 [shape = 's32[2]{0}', space=sflag, size = 0x8, scoped, tag = 'scoped memory for tpu_custom_call.1']
    #allocation6 [shape = 's32[2]{0}', space=sflag, size = 0x8, scoped, tag = 'scoped memory for tpu_custom_call.1']
    #allocation7 [shape = 'u8[512]{0}', space=smem, size = 0x200, scoped, tag = 'input window, operand 2, single buffered']
    #allocation8 [shape = 'u8[8192]{0}', space=vmem, size = 0x2000, scoped, tag = 'output window, operand 0']
    %10 = vsyncpa [#allocation4], 0
    %s11 = scalar_lea.sflag [#allocation4], 1
    %12 = vsyncpa %s11, 0
    %13 = vsyncpa [#allocation6], 0
    %14 = vsyncpa [#allocation5], 0
    %s15 = scalar_lea.sflag [#allocation5], 1
    %16 = vsyncpa %s15, 0
    loop: start=0, step=1, limit=4
    $region2: #{tpu_custom_call.1} parent=1 // loop_pre_header
      _
    $region3: #{tpu_custom_call.1} parent=1 // loop_header
      %s18 = sphi 0, %s22
      %p19 = scmp.ge.s32.totalorder %s18, 4
      %s28 = sphi 0, %s30
      %s31 = sphi 0, %s28
      %s32 = sphi 0, %s31
      %s48 = sphi 0, %s32
      %s52 = sphi 0, %s52
      %s54 = sphi 0, %s52
      %s55 = sphi 0, %s54
      %s69 = sphi 0, %s55
      %s73 = sphi 0, %s73
      %s75 = sphi 0, %s73
      %s76 = sphi 0, %s75
      %s90 = sphi 0, %s76
      %s94 = sphi 0, %s94
      %s96 = sphi 0, %s94
      %s97 = sphi 0, %s96
      %s111 = sphi 0, %s97
      %s117 = sphi 0, %s119
      %s120 = sphi 0, %s117
      %s121 = sphi 0, %s120
      %s137 = sphi 0, %s121
    $region4: #{tpu_custom_call.1} parent=1 // loop_header_branch
      %21 = sbr.rel (%p19) target = $region8
    $region5: #{tpu_custom_call.1} parent=1 // loop_body
      %s23 = ssub.s32 %s18, 1
      %s24 = ssub.s32 %s18, 2
      %s25 = sadd.s32 %s18, 1
      %s26 = ssub.s32 %s18, %s25
      %p27 = scmp.eq.s32.totalorder %s26, 0
      %s29 = sadd.s32 %s28, 1
      %s30 = scalar_select %p27, %s28, %s29
      %p33 = pneg %p27
      %p34 = scmp.eq.s32.totalorder %s18, 1
      %p35 = por %p33, %p34
      %p36 = scmp.ne.s32.totalorder %s28, %s31
      %p37 = scmp.eq.s32.totalorder %s18, 0
      %p38 = por %p36, %p37
      %p39 = scmp.ne.s32.totalorder %s28, %s31
      %p40 = scmp.eq.s32.totalorder %s23, 1
      %p41 = por %p39, %p40
      %p42 = scmp.ne.s32.totalorder %s31, %s32
      %p43 = scmp.eq.s32.totalorder %s23, 0
      %p44 = por %p42, %p43
      %p45 = scmp.ne.s32.totalorder %s31, %s32
      %p46 = scmp.eq.s32.totalorder %s24, 1
      %p47 = por %p45, %p46
      %p49 = scmp.ne.s32.totalorder %s32, %s48
      %p50 = scmp.eq.s32.totalorder %s24, 0
      %p51 = por %p49, %p50
      %s53 = sadd.s32 %s52, 1
      %p56 = scmp.eq.s32.totalorder %s18, 1
      %p57 = scmp.ne.s32.totalorder %s52, %s54
      %p58 = scmp.eq.s32.totalorder %s18, 0
      %p59 = por %p57, %p58
      %p60 = scmp.ne.s32.totalorder %s52, %s54
      %p61 = scmp.eq.s32.totalorder %s23, 1
      %p62 = por %p60, %p61
      %p63 = scmp.ne.s32.totalorder %s54, %s55
      %p64 = scmp.eq.s32.totalorder %s23, 0
      %p65 = por %p63, %p64
      %p66 = scmp.ne.s32.totalorder %s54, %s55
      %p67 = scmp.eq.s32.totalorder %s24, 1
      %p68 = por %p66, %p67
      %p70 = scmp.ne.s32.totalorder %s55, %s69
      %p71 = scmp.eq.s32.totalorder %s24, 0
      %p72 = por %p70, %p71
      %s74 = sadd.s32 %s73, 1
      %p77 = scmp.eq.s32.totalorder %s18, 1
      %p78 = scmp.ne.s32.totalorder %s73, %s75
      %p79 = scmp.eq.s32.totalorder %s18, 0
      %p80 = por %p78, %p79
      %p81 = scmp.ne.s32.totalorder %s73, %s75
      %p82 = scmp.eq.s32.totalorder %s23, 1
      %p83 = por %p81, %p82
      %p84 = scmp.ne.s32.totalorder %s75, %s76
      %p85 = scmp.eq.s32.totalorder %s23, 0
      %p86 = por %p84, %p85
      %p87 = scmp.ne.s32.totalorder %s75, %s76
      %p88 = scmp.eq.s32.totalorder %s24, 1
      %p89 = por %p87, %p88
      %p91 = scmp.ne.s32.totalorder %s76, %s90
      %p92 = scmp.eq.s32.totalorder %s24, 0
      %p93 = por %p91, %p92
      %s95 = sadd.s32 %s94, 1
      %p98 = scmp.eq.s32.totalorder %s18, 1
      %p99 = scmp.ne.s32.totalorder %s94, %s96
      %p100 = scmp.eq.s32.totalorder %s18, 0
      %p101 = por %p99, %p100
      %p102 = scmp.ne.s32.totalorder %s94, %s96
      %p103 = scmp.eq.s32.totalorder %s23, 1
      %p104 = por %p102, %p103
      %p105 = scmp.ne.s32.totalorder %s96, %s97
      %p106 = scmp.eq.s32.totalorder %s23, 0
      %p107 = por %p105, %p106
      %p108 = scmp.ne.s32.totalorder %s96, %s97
      %p109 = scmp.eq.s32.totalorder %s24, 1
      %p110 = por %p108, %p109
      %p112 = scmp.ne.s32.totalorder %s97, %s111
      %p113 = scmp.eq.s32.totalorder %s24, 0
      %p114 = por %p112, %p113
      %s115 = ssub.s32 %s18, %s25
      %p116 = scmp.eq.s32.totalorder %s115, 0
      %s118 = sadd.s32 %s117, 1
      %s119 = scalar_select %p116, %s117, %s118
      %p122 = pneg %p116
      %p123 = scmp.eq.s32.totalorder %s18, 1
      %p124 = por %p122, %p123
      %p125 = scmp.ne.s32.totalorder %s117, %s120
      %p126 = scmp.eq.s32.totalorder %s18, 0
      %p127 = por %p125, %p126
      %p128 = scmp.ne.s32.totalorder %s117, %s120
      %p129 = scmp.eq.s32.totalorder %s23, 1
      %p130 = por %p128, %p129
      %p131 = scmp.ne.s32.totalorder %s120, %s121
      %p132 = scmp.eq.s32.totalorder %s23, 0
      %p133 = por %p131, %p132
      %p134 = scmp.ne.s32.totalorder %s120, %s121
      %p135 = scmp.eq.s32.totalorder %s24, 1
      %p136 = por %p134, %p135
      %p138 = scmp.ne.s32.totalorder %s121, %s137
      %p139 = scmp.eq.s32.totalorder %s24, 0
      %p140 = por %p138, %p139
      %p141 = scmp.le.s32.totalorder 1, %s18
      %p142 = scmp.lt.s32.totalorder %s18, 3
      %p143 = pnand %p141, %p142
      %p144 = pneg %p143
      // Predicated region
      $region9: #{tpu_custom_call.1} parent=5 // pred_check
        _
      $region10: #{tpu_custom_call.1} parent=5 // pred_check_branch
        %146 = sbr.rel (%p143) target = $region12
      $region11: #{tpu_custom_call.1} parent=5 // pred_region
        %s147 = ssub.s32 %s18, 1
        // Predicated region
        $region13: #{tpu_custom_call.1} parent=11 // pred_check
          %p148 = pneg %p65
        $region14: #{tpu_custom_call.1} parent=11 // pred_check_branch
          %150 = sbr.rel (%p148) target = $region16
        $region15: #{tpu_custom_call.1} parent=11 // pred_region
          _
        $region16: #{tpu_custom_call.1} parent=11 // pred_fallthru
          _
        // Predicated region
        $region17: #{tpu_custom_call.1} parent=11 // pred_check
          %p151 = pneg %p86
        $region18: #{tpu_custom_call.1} parent=11 // pred_check_branch
          %153 = sbr.rel (%p151) target = $region20
        $region19: #{tpu_custom_call.1} parent=11 // pred_region
          %s155 = ssub.s32 16, 16
          %156 = vsyncadd [#allocation6], %s155
          %s158 = sshll.u32 %s2, 4
          %s159 = int_to_ptr.vmem [resolvable:$true] %s158
          %161 = dma.vmem_to_smem %s159, 16, [#allocation7], [#allocation6]
        $region20: #{tpu_custom_call.1} parent=11 // pred_fallthru
          _
        // Predicated region
        $region21: #{tpu_custom_call.1} parent=11 // pred_check
          %p162 = pneg %p107
        $region22: #{tpu_custom_call.1} parent=11 // pred_check_branch
          %164 = sbr.rel (%p162) target = $region24
        $region23: #{tpu_custom_call.1} parent=11 // pred_region
          _
        $region24: #{tpu_custom_call.1} parent=11 // pred_fallthru
          _
      $region12: #{tpu_custom_call.1} parent=5 // pred_fallthru
        _
      %p165 = scmp.lt.s32.totalorder %s18, 2
      // Predicated region
      $region25: #{tpu_custom_call.1} parent=5 // pred_check
        %p166 = pneg %p165
      $region26: #{tpu_custom_call.1} parent=5 // pred_check_branch
        %168 = sbr.rel (%p166) target = $region28
      $region27: #{tpu_custom_call.1} parent=5 // pred_region
        // Predicated region
        $region29: #{tpu_custom_call.1} parent=27 // pred_check
          %p169 = pneg %p38
        $region30: #{tpu_custom_call.1} parent=27 // pred_check_branch
          %171 = sbr.rel (%p169) target = $region32
        $region31: #{tpu_custom_call.1} parent=27 // pred_region
          %s172 = sand.u32 %s28, 1
          %s173 = scalar_lea.sflag [#allocation4], %s172
          %s174 = sand.u32 %s28, 1
          %s175 = smul.addr %s174, 8
          %s176 = scalar_lea.vmem [#allocation3], %s175
          %s178 = ssub.s32 128, 128
          %179 = vsyncadd %s173, %s178
          %s180 = smul.addr %s18, 2
          %s181 = smul.addr %s180, 64
          %s182 = scalar_lea.hbm %s0, %s181
          %s184 = sshll.u32 %s176, 4
          %s185 = int_to_ptr.vmem [resolvable:$true] %s184
          %187 = dma.hbm_to_vmem [thread:$0]  %s182, 128, %s185, %s173
        $region32: #{tpu_custom_call.1} parent=27 // pred_fallthru
          _
      $region28: #{tpu_custom_call.1} parent=5 // pred_fallthru
        _
      %p188 = scmp.le.s32.totalorder 1, %s18
      %p189 = scmp.lt.s32.totalorder %s18, 3
      %p190 = pnand %p188, %p189
      %p191 = pneg %p190
      // Predicated region
      $region33: #{tpu_custom_call.1} parent=5 // pred_check
        _
      $region34: #{tpu_custom_call.1} parent=5 // pred_check_branch
        %193 = sbr.rel (%p190) target = $region36
      $region35: #{tpu_custom_call.1} parent=5 // pred_region
        %s194 = ssub.s32 %s18, 1
        %s195 = sand.u32 %s31, 1
        %s196 = scalar_lea.sflag [#allocation4], %s195
        %s197 = sand.u32 %s31, 1
        %s198 = smul.addr %s197, 8
        %s199 = scalar_lea.vmem [#allocation3], %s198
        // Predicated region
        $region37: #{tpu_custom_call.1} parent=35 // pred_check
          %p200 = pneg %p44
        $region38: #{tpu_custom_call.1} parent=35 // pred_check_branch
          %202 = sbr.rel (%p200) target = $region40
        $region39: #{tpu_custom_call.1} parent=35 // pred_region
          %203 = dma.done %s196, 128
        $region40: #{tpu_custom_call.1} parent=35 // pred_fallthru
          _
        // Predicated region
        $region41: #{tpu_custom_call.1} parent=35 // pred_check
          %p204 = pneg %p86
        $region42: #{tpu_custom_call.1} parent=35 // pred_check_branch
          %206 = sbr.rel (%p204) target = $region44
        $region43: #{tpu_custom_call.1} parent=35 // pred_region
          %207 = dma.done [#allocation6], 16
        $region44: #{tpu_custom_call.1} parent=35 // pred_fallthru
          _
        %208 = sfence
        %s209 = sand.u32 %s31, 1
        %s210 = scalar_lea.sflag [#allocation4], %s209
        %s211 = sand.u32 %s31, 1
        %s212 = smul.addr %s211, 8
        %s213 = scalar_lea.vmem [#allocation3], %s212
        %p214 = pneg %p44
        %p215 = pneg %p41
        %p216 = pneg %p65
        %p217 = pneg %p62
        %p218 = pneg %p86
        %p219 = pneg %p83
        %p220 = pneg %p107
        %p221 = pneg %p104
        %p222 = pneg %p133
        %p223 = pneg %p130
        %s224 = sand.u32 %s120, 1
        %s225 = scalar_lea.sflag [#allocation5], %s224
        %s226 = sand.u32 %s120, 1
        %s227 = smul.addr %s226, 8
        %s228 = scalar_lea.vmem [#allocation8], %s227
        %v229 = vld [vmem:[%s199] sm:$0xff]
        %v231 = vcombine.high %v229, %v229
        %vm233 = vcmask 1043456
        %v234 = vsel %vm233, %v229, -inf
        %v235 = vrot.slane %v234, 4
        %v236 = vmax.f32 %v234, %v235
        %v237 = vrot.slane %v236, 2
        %v238 = vmax.f32 %v236, %v237
        %v239 = vrot.slane %v238, 1
        %v240 = vmax.f32 %v238, %v239
        %v241 = vsel %vm233, %v231, -inf
        %v242 = vrot.slane %v241, 4
        %v243 = vmax.f32 %v241, %v242
        %v244 = vrot.slane %v243, 2
        %v245 = vmax.f32 %v243, %v244
        %v246 = vrot.slane %v245, 1
        %v247 = vmax.f32 %v245, %v246
        %v248 = vsel %vm233, %v229, 0.0
        %v249 = vrot.slane %v248, 4
        %v250 = vadd.f32 %v248, %v249
        %v251 = vrot.slane %v250, 2
        %v252 = vadd.f32 %v250, %v251
        %v253 = vrot.slane %v252, 1
        %v254 = vadd.f32 %v252, %v253
        %v255 = vsel %vm233, %v231, 0.0
        %v256 = vrot.slane %v255, 4
        %v257 = vadd.f32 %v255, %v256
        %v258 = vrot.slane %v257, 2
        %v259 = vadd.f32 %v257, %v258
        %v260 = vrot.slane %v259, 1
        %v261 = vadd.f32 %v259, %v260
        %v262 = vld [vmem:[%s1] ss:$2 sm:$0x3]
        %s263 = scalar_lea.vmem %s1, 1
        %v264 = vld [vmem:[%s263] ss:$2 sm:$0x3]
        %vm265 = vcmp.ge.f32.partialorder %v264, 3.0
        %vm266 = vcmp.le.f32.partialorder %v264, 18.0
        %vm267 = vmand %vm265, %vm266
        %v268 = vsel %vm267, 1, 0
        %v269 = vcvt.s32.f32 %v268
        %vm270 = vcmp.ge.f32.partialorder %v264, 2.0
        %vm271 = vcmp.le.f32.partialorder %v264, 17.0
        %vm272 = vmand %vm270, %vm271
        %v273 = vsel %vm272, 1, 0
        %v274 = vcvt.s32.f32 %v273
        %vm275 = vcmp.ge.f32.partialorder %v264, 1.0
        %vm276 = vcmp.le.f32.partialorder %v264, 16.0
        %vm277 = vmand %vm275, %vm276
        %v278 = vsel %vm277, 1, 0
        %v279 = vcvt.s32.f32 %v278
        %vm280 = vcmp.ge.f32.partialorder %v264, 0.0
        %vm281 = vcmp.le.f32.partialorder %v264, 15.0
        %vm282 = vmand %vm280, %vm281
        %v283 = vsel %vm282, 1, 0
        %v284 = vcvt.s32.f32 %v283
        %vm285 = vcmp.ge.f32.partialorder %v264, -1.0
        %vm286 = vcmp.le.f32.partialorder %v264, 14.0
        %vm287 = vmand %vm285, %vm286
        %v288 = vsel %vm287, 1, 0
        %v289 = vcvt.s32.f32 %v288
        %vm290 = vcmp.ge.f32.partialorder %v264, -2.0
        %vm291 = vcmp.le.f32.partialorder %v264, 13.0
        %vm292 = vmand %vm290, %vm291
        %v293 = vsel %vm292, 1, 0
        %v294 = vcvt.s32.f32 %v293
        %vm295 = vcmp.ge.f32.partialorder %v264, -3.0
        %vm296 = vcmp.le.f32.partialorder %v264, 12.0
        %vm297 = vmand %vm295, %vm296
        %v298 = vsel %vm297, 1, 0
        %v299 = vcvt.s32.f32 %v298
        %vm300 = vcmp.ge.f32.partialorder %v262, 3.0
        %vm301 = vcmp.le.f32.partialorder %v262, 18.0
        %vm302 = vmand %vm300, %vm301
        %v303 = vsel %vm302, 1, 0
        %v304 = vcvt.s32.f32 %v303
        %s305 = sld [smem:[#allocation7]]
        %s306 = sld [smem:[#allocation7 + $0x31]]
        %307 = vrot.lane.b32.xlu0 %v240, 51
        %v308 = vpop.permute.xlu0 %307
        %309 = vrot.lane.b32.xlu0 %v247, 51
        %v310 = vpop.permute.xlu0 %309
        %v311 = vlaneseq
        %v312 = vand.u32 %v311, 127
        %vm313 = vcmp.lt.s32.totalorder %v312, 51
        %v314 = vsel %vm313, %v308, %v310
        %v315 = vsel %vm313, %v310, %v308
        %v316 = vstv %s305
        %v317 = vmul.f32 %v315, %v316
        %v318 = vmul.f32 %v314, %v316
        %319 = vrot.lane.b32.xlu0 %v254, 51
        %v320 = vpop.permute.xlu0 %319
        %321 = vrot.lane.b32.xlu0 %v261, 51
        %v322 = vpop.permute.xlu0 %321
        %v323 = vsel %vm313, %v320, %v322
        %v324 = vsel %vm313, %v322, %v320
        %v325 = vstv %s306
        %v326 = vmul.f32 %v324, %v325
        %v327 = vmul.f32 %v323, %v325
        %v328 = vadd.f32 %v317, %v326
        %v329 = vadd.f32 %v318, %v327
        %v331 = vlaneseq
        %v332 = vshrl.u32 %v331, 7
        %v333 = vsub.s32 0, %v332
        %v334 = vrot.slane %v269, %v333
        %v335 = vlaneseq
        %v336 = vshrl.u32 %v335, 7
        %v337 = vsub.s32 1, %v336
        %v338 = vrot.slane %v269, %v337
        %v341 = vmul.f32 %v328, %v334
        %v342 = vmul.f32 %v329, %v338
        %v343 = vadd.f32 %v341, 0.0
        %v344 = vadd.f32 %v342, 0.0
        %s345 = sld [smem:[#allocation7 + $0x1]]
        %s346 = sld [smem:[#allocation7 + $0x32]]
        %347 = vrot.lane.b32.xlu0 %v240, 50
        %v348 = vpop.permute.xlu0 %347
        %349 = vrot.lane.b32.xlu0 %v247, 50
        %v350 = vpop.permute.xlu0 %349
        %vm351 = vcmp.lt.s32.totalorder %v312, 50
        %v352 = vsel %vm351, %v348, %v350
        %v353 = vsel %vm351, %v350, %v348
        %v354 = vstv %s345
        %v355 = vmul.f32 %v353, %v354
        %v356 = vmul.f32 %v352, %v354
        %357 = vrot.lane.b32.xlu0 %v254, 50
        %v358 = vpop.permute.xlu0 %357
        %359 = vrot.lane.b32.xlu0 %v261, 50
        %v360 = vpop.permute.xlu0 %359
        %v361 = vsel %vm351, %v358, %v360
        %v362 = vsel %vm351, %v360, %v358
        %v363 = vstv %s346
        %v364 = vmul.f32 %v362, %v363
        %v365 = vmul.f32 %v361, %v363
        %v366 = vadd.f32 %v355, %v364
        %v367 = vadd.f32 %v356, %v365
        %v369 = vlaneseq
        %v370 = vshrl.u32 %v369, 7
        %v371 = vsub.s32 0, %v370
        %v372 = vrot.slane %v274, %v371
        %v373 = vlaneseq
        %v374 = vshrl.u32 %v373, 7
        %v375 = vsub.s32 1, %v374
        %v376 = vrot.slane %v274, %v375
        %v379 = vmul.f32 %v366, %v372
        %v380 = vmul.f32 %v367, %v376
        %v381 = vadd.f32 %v343, %v379
        %v382 = vadd.f32 %v344, %v380
        %s383 = sld [smem:[#allocation7 + $0x2]]
        %s384 = sld [smem:[#allocation7 + $0x33]]
        %385 = vrot.lane.b32.xlu0 %v240, 49
        %v386 = vpop.permute.xlu0 %385
        %387 = vrot.lane.b32.xlu0 %v247, 49
        %v388 = vpop.permute.xlu0 %387
        %vm389 = vcmp.lt.s32.totalorder %v312, 49
        %v390 = vsel %vm389, %v386, %v388
        %v391 = vsel %vm389, %v388, %v386
        %v392 = vstv %s383
        %v393 = vmul.f32 %v391, %v392
        %v394 = vmul.f32 %v390, %v392
        %395 = vrot.lane.b32.xlu0 %v254, 49
        %v396 = vpop.permute.xlu0 %395
        %397 = vrot.lane.b32.xlu0 %v261, 49
        %v398 = vpop.permute.xlu0 %397
        %v399 = vsel %vm389, %v396, %v398
        %v400 = vsel %vm389, %v398, %v396
        %v401 = vstv %s384
        %v402 = vmul.f32 %v400, %v401
        %v403 = vmul.f32 %v399, %v401
        %v404 = vadd.f32 %v393, %v402
        %v405 = vadd.f32 %v394, %v403
        %v407 = vlaneseq
        %v408 = vshrl.u32 %v407, 7
        %v409 = vsub.s32 0, %v408
        %v410 = vrot.slane %v279, %v409
        %v411 = vlaneseq
        %v412 = vshrl.u32 %v411, 7
        %v413 = vsub.s32 1, %v412
        %v414 = vrot.slane %v279, %v413
        %v417 = vmul.f32 %v404, %v410
        %v418 = vmul.f32 %v405, %v414
        %v419 = vadd.f32 %v381, %v417
        %v420 = vadd.f32 %v382, %v418
        %s421 = sld [smem:[#allocation7 + $0x3]]
        %s422 = sld [smem:[#allocation7 + $0x34]]
        %423 = vrot.lane.b32.xlu0 %v240, 48
        %v424 = vpop.permute.xlu0 %423
        %425 = vrot.lane.b32.xlu0 %v247, 48
        %v426 = vpop.permute.xlu0 %425
        %vm427 = vcmp.lt.s32.totalorder %v312, 48
        %v428 = vsel %vm427, %v424, %v426
        %v429 = vsel %vm427, %v426, %v424
        %v430 = vstv %s421
        %v431 = vmul.f32 %v429, %v430
        %v432 = vmul.f32 %v428, %v430
        %433 = vrot.lane.b32.xlu0 %v254, 48
        %v434 = vpop.permute.xlu0 %433
        %435 = vrot.lane.b32.xlu0 %v261, 48
        %v436 = vpop.permute.xlu0 %435
        %v437 = vsel %vm427, %v434, %v436
        %v438 = vsel %vm427, %v436, %v434
        %v439 = vstv %s422
        %v440 = vmul.f32 %v438, %v439
        %v441 = vmul.f32 %v437, %v439
        %v442 = vadd.f32 %v431, %v440
        %v443 = vadd.f32 %v432, %v441
        %v445 = vlaneseq
        %v446 = vshrl.u32 %v445, 7
        %v447 = vsub.s32 0, %v446
        %v448 = vrot.slane %v284, %v447
        %v449 = vlaneseq
        %v450 = vshrl.u32 %v449, 7
        %v451 = vsub.s32 1, %v450
        %v452 = vrot.slane %v284, %v451
        %v455 = vmul.f32 %v442, %v448
        %v456 = vmul.f32 %v443, %v452
        %v457 = vadd.f32 %v419, %v455
        %v458 = vadd.f32 %v420, %v456
        %s459 = sld [smem:[#allocation7 + $0x4]]
        %s460 = sld [smem:[#allocation7 + $0x35]]
        %461 = vrot.lane.b32.xlu0 %v240, 47
        %v462 = vpop.permute.xlu0 %461
        %463 = vrot.lane.b32.xlu0 %v247, 47
        %v464 = vpop.permute.xlu0 %463
        %vm465 = vcmp.lt.s32.totalorder %v312, 47
        %v466 = vsel %vm465, %v462, %v464
        %v467 = vsel %vm465, %v464, %v462
        %v468 = vstv %s459
        %v469 = vmul.f32 %v467, %v468
        %v470 = vmul.f32 %v466, %v468
        %471 = vrot.lane.b32.xlu0 %v254, 47
        %v472 = vpop.permute.xlu0 %471
        %473 = vrot.lane.b32.xlu0 %v261, 47
        %v474 = vpop.permute.xlu0 %473
        %v475 = vsel %vm465, %v472, %v474
        %v476 = vsel %vm465, %v474, %v472
        %v477 = vstv %s460
        %v478 = vmul.f32 %v476, %v477
        %v479 = vmul.f32 %v475, %v477
        %v480 = vadd.f32 %v469, %v478
        %v481 = vadd.f32 %v470, %v479
        %v483 = vlaneseq
        %v484 = vshrl.u32 %v483, 7
        %v485 = vsub.s32 0, %v484
        %v486 = vrot.slane %v289, %v485
        %v487 = vlaneseq
        %v488 = vshrl.u32 %v487, 7
        %v489 = vsub.s32 1, %v488
        %v490 = vrot.slane %v289, %v489
        %v493 = vmul.f32 %v480, %v486
        %v494 = vmul.f32 %v481, %v490
        %v495 = vadd.f32 %v457, %v493
        %v496 = vadd.f32 %v458, %v494
        %s497 = sld [smem:[#allocation7 + $0x5]]
        %s498 = sld [smem:[#allocation7 + $0x36]]
        %499 = vrot.lane.b32.xlu0 %v240, 46
        %v500 = vpop.permute.xlu0 %499
        %501 = vrot.lane.b32.xlu0 %v247, 46
        %v502 = vpop.permute.xlu0 %501
        %vm503 = vcmp.lt.s32.totalorder %v312, 46
        %v504 = vsel %vm503, %v500, %v502
        %v505 = vsel %vm503, %v502, %v500
        %v506 = vstv %s497
        %v507 = vmul.f32 %v505, %v506
        %v508 = vmul.f32 %v504, %v506
        %509 = vrot.lane.b32.xlu0 %v254, 46
        %v510 = vpop.permute.xlu0 %509
        %511 = vrot.lane.b32.xlu0 %v261, 46
        %v512 = vpop.permute.xlu0 %511
        %v513 = vsel %vm503, %v510, %v512
        %v514 = vsel %vm503, %v512, %v510
        %v515 = vstv %s498
        %v516 = vmul.f32 %v514, %v515
        %v517 = vmul.f32 %v513, %v515
        %v518 = vadd.f32 %v507, %v516
        %v519 = vadd.f32 %v508, %v517
        %v521 = vlaneseq
        %v522 = vshrl.u32 %v521, 7
        %v523 = vsub.s32 0, %v522
        %v524 = vrot.slane %v294, %v523
        %v525 = vlaneseq
        %v526 = vshrl.u32 %v525, 7
        %v527 = vsub.s32 1, %v526
        %v528 = vrot.slane %v294, %v527
        %v531 = vmul.f32 %v518, %v524
        %v532 = vmul.f32 %v519, %v528
        %v533 = vadd.f32 %v495, %v531
        %v534 = vadd.f32 %v496, %v532
        %s535 = sld [smem:[#allocation7 + $0x6]]
        %s536 = sld [smem:[#allocation7 + $0x37]]
        %537 = vrot.lane.b32.xlu0 %v240, 45
        %v538 = vpop.permute.xlu0 %537
        %539 = vrot.lane.b32.xlu0 %v247, 45
        %v540 = vpop.permute.xlu0 %539
        %vm541 = vcmp.lt.s32.totalorder %v312, 45
        %v542 = vsel %vm541, %v538, %v540
        %v543 = vsel %vm541, %v540, %v538
        %v544 = vstv %s535
        %v545 = vmul.f32 %v543, %v544
        %v546 = vmul.f32 %v542, %v544
        %547 = vrot.lane.b32.xlu0 %v254, 45
        %v548 = vpop.permute.xlu0 %547
        %549 = vrot.lane.b32.xlu0 %v261, 45
        %v550 = vpop.permute.xlu0 %549
        %v551 = vsel %vm541, %v548, %v550
        %v552 = vsel %vm541, %v550, %v548
        %v553 = vstv %s536
        %v554 = vmul.f32 %v552, %v553
        %v555 = vmul.f32 %v551, %v553
        %v556 = vadd.f32 %v545, %v554
        %v557 = vadd.f32 %v546, %v555
        %v559 = vlaneseq
        %v560 = vshrl.u32 %v559, 7
        %v561 = vsub.s32 0, %v560
        %v562 = vrot.slane %v299, %v561
        %v563 = vlaneseq
        %v564 = vshrl.u32 %v563, 7
        %v565 = vsub.s32 1, %v564
        %v566 = vrot.slane %v299, %v565
        %v569 = vmul.f32 %v556, %v562
        %v570 = vmul.f32 %v557, %v566
        %v571 = vadd.f32 %v533, %v569
        %v572 = vadd.f32 %v534, %v570
        %v574 = vlaneseq
        %v575 = vshrl.u32 %v574, 7
        %v576 = vsub.s32 0, %v575
        %v577 = vrot.slane %v304, %v576
        %v578 = vlaneseq
        %v579 = vshrl.u32 %v578, 7
        %v580 = vsub.s32 1, %v579
        %v581 = vrot.slane %v304, %v580
        %v584 = vmul.f32 %v571, %v577
        %v585 = vmul.f32 %v572, %v581
        %v586 = vadd.f32 %v584, 0.0
        %v587 = vadd.f32 %v585, 0.0
        %vm588 = vcmp.ge.f32.partialorder %v262, 2.0
        %vm589 = vcmp.le.f32.partialorder %v262, 17.0
        %vm590 = vmand %vm588, %vm589
        %v591 = vsel %vm590, 1, 0
        %v592 = vcvt.s32.f32 %v591
        %s593 = sld [smem:[#allocation7 + $0x7]]
        %s594 = sld [smem:[#allocation7 + $0x38]]
        %595 = vrot.lane.b32.xlu0 %v240, 35
        %v596 = vpop.permute.xlu0 %595
        %597 = vrot.lane.b32.xlu0 %v247, 35
        %v598 = vpop.permute.xlu0 %597
        %vm599 = vcmp.lt.s32.totalorder %v312, 35
        %v600 = vsel %vm599, %v596, %v598
        %v601 = vsel %vm599, %v598, %v596
        %v602 = vstv %s593
        %v603 = vmul.f32 %v601, %v602
        %v604 = vmul.f32 %v600, %v602
        %605 = vrot.lane.b32.xlu0 %v254, 35
        %v606 = vpop.permute.xlu0 %605
        %607 = vrot.lane.b32.xlu0 %v261, 35
        %v608 = vpop.permute.xlu0 %607
        %v609 = vsel %vm599, %v606, %v608
        %v610 = vsel %vm599, %v608, %v606
        %v611 = vstv %s594
        %v612 = vmul.f32 %v610, %v611
        %v613 = vmul.f32 %v609, %v611
        %v614 = vadd.f32 %v603, %v612
        %v615 = vadd.f32 %v604, %v613
        %v616 = vmul.f32 %v614, %v334
        %v617 = vmul.f32 %v615, %v338
        %v618 = vadd.f32 %v616, 0.0
        %v619 = vadd.f32 %v617, 0.0
        %s620 = sld [smem:[#allocation7 + $0x8]]
        %s621 = sld [smem:[#allocation7 + $0x39]]
        %622 = vrot.lane.b32.xlu0 %v240, 34
        %v623 = vpop.permute.xlu0 %622
        %624 = vrot.lane.b32.xlu0 %v247, 34
        %v625 = vpop.permute.xlu0 %624
        %vm626 = vcmp.lt.s32.totalorder %v312, 34
        %v627 = vsel %vm626, %v623, %v625
        %v628 = vsel %vm626, %v625, %v623
        %v629 = vstv %s620
        %v630 = vmul.f32 %v628, %v629
        %v631 = vmul.f32 %v627, %v629
        %632 = vrot.lane.b32.xlu0 %v254, 34
        %v633 = vpop.permute.xlu0 %632
        %634 = vrot.lane.b32.xlu0 %v261, 34
        %v635 = vpop.permute.xlu0 %634
        %v636 = vsel %vm626, %v633, %v635
        %v637 = vsel %vm626, %v635, %v633
        %v638 = vstv %s621
        %v639 = vmul.f32 %v637, %v638
        %v640 = vmul.f32 %v636, %v638
        %v641 = vadd.f32 %v630, %v639
        %v642 = vadd.f32 %v631, %v640
        %v643 = vmul.f32 %v641, %v372
        %v644 = vmul.f32 %v642, %v376
        %v645 = vadd.f32 %v618, %v643
        %v646 = vadd.f32 %v619, %v644
        %s647 = sld [smem:[#allocation7 + $0x9]]
        %s648 = sld [smem:[#allocation7 + $0x3a]]
        %649 = vrot.lane.b32.xlu0 %v240, 33
        %v650 = vpop.permute.xlu0 %649
        %651 = vrot.lane.b32.xlu0 %v247, 33
        %v652 = vpop.permute.xlu0 %651
        %vm653 = vcmp.lt.s32.totalorder %v312, 33
        %v654 = vsel %vm653, %v650, %v652
        %v655 = vsel %vm653, %v652, %v650
        %v656 = vstv %s647
        %v657 = vmul.f32 %v655, %v656
        %v658 = vmul.f32 %v654, %v656
        %659 = vrot.lane.b32.xlu0 %v254, 33
        %v660 = vpop.permute.xlu0 %659
        %661 = vrot.lane.b32.xlu0 %v261, 33
        %v662 = vpop.permute.xlu0 %661
        %v663 = vsel %vm653, %v660, %v662
        %v664 = vsel %vm653, %v662, %v660
        %v665 = vstv %s648
        %v666 = vmul.f32 %v664, %v665
        %v667 = vmul.f32 %v663, %v665
        %v668 = vadd.f32 %v657, %v666
        %v669 = vadd.f32 %v658, %v667
        %v670 = vmul.f32 %v668, %v410
        %v671 = vmul.f32 %v669, %v414
        %v672 = vadd.f32 %v645, %v670
        %v673 = vadd.f32 %v646, %v671
        %s674 = sld [smem:[#allocation7 + $0xa]]
        %s675 = sld [smem:[#allocation7 + $0x3b]]
        %676 = vrot.lane.b32.xlu0 %v240, 32
        %v677 = vpop.permute.xlu0 %676
        %678 = vrot.lane.b32.xlu0 %v247, 32
        %v679 = vpop.permute.xlu0 %678
        %vm680 = vcmp.lt.s32.totalorder %v312, 32
        %v681 = vsel %vm680, %v677, %v679
        %v682 = vsel %vm680, %v679, %v677
        %v683 = vstv %s674
        %v684 = vmul.f32 %v682, %v683
        %v685 = vmul.f32 %v681, %v683
        %686 = vrot.lane.b32.xlu0 %v254, 32
        %v687 = vpop.permute.xlu0 %686
        %688 = vrot.lane.b32.xlu0 %v261, 32
        %v689 = vpop.permute.xlu0 %688
        %v690 = vsel %vm680, %v687, %v689
        %v691 = vsel %vm680, %v689, %v687
        %v692 = vstv %s675
        %v693 = vmul.f32 %v691, %v692
        %v694 = vmul.f32 %v690, %v692
        %v695 = vadd.f32 %v684, %v693
        %v696 = vadd.f32 %v685, %v694
        %v697 = vmul.f32 %v695, %v448
        %v698 = vmul.f32 %v696, %v452
        %v699 = vadd.f32 %v672, %v697
        %v700 = vadd.f32 %v673, %v698
        %s701 = sld [smem:[#allocation7 + $0xb]]
        %s702 = sld [smem:[#allocation7 + $0x3c]]
        %703 = vrot.lane.b32.xlu0 %v240, 31
        %v704 = vpop.permute.xlu0 %703
        %705 = vrot.lane.b32.xlu0 %v247, 31
        %v706 = vpop.permute.xlu0 %705
        %vm707 = vcmp.lt.s32.totalorder %v312, 31
        %v708 = vsel %vm707, %v704, %v706
        %v709 = vsel %vm707, %v706, %v704
        %v710 = vstv %s701
        %v711 = vmul.f32 %v709, %v710
        %v712 = vmul.f32 %v708, %v710
        %713 = vrot.lane.b32.xlu0 %v254, 31
        %v714 = vpop.permute.xlu0 %713
        %715 = vrot.lane.b32.xlu0 %v261, 31
        %v716 = vpop.permute.xlu0 %715
        %v717 = vsel %vm707, %v714, %v716
        %v718 = vsel %vm707, %v716, %v714
        %v719 = vstv %s702
        %v720 = vmul.f32 %v718, %v719
        %v721 = vmul.f32 %v717, %v719
        %v722 = vadd.f32 %v711, %v720
        %v723 = vadd.f32 %v712, %v721
        %v724 = vmul.f32 %v722, %v486
        %v725 = vmul.f32 %v723, %v490
        %v726 = vadd.f32 %v699, %v724
        %v727 = vadd.f32 %v700, %v725
        %s728 = sld [smem:[#allocation7 + $0xc]]
        %s729 = sld [smem:[#allocation7 + $0x3d]]
        %730 = vrot.lane.b32.xlu0 %v240, 30
        %v731 = vpop.permute.xlu0 %730
        %732 = vrot.lane.b32.xlu0 %v247, 30
        %v733 = vpop.permute.xlu0 %732
        %vm734 = vcmp.lt.s32.totalorder %v312, 30
        %v735 = vsel %vm734, %v731, %v733
        %v736 = vsel %vm734, %v733, %v731
        %v737 = vstv %s728
        %v738 = vmul.f32 %v736, %v737
        %v739 = vmul.f32 %v735, %v737
        %740 = vrot.lane.b32.xlu0 %v254, 30
        %v741 = vpop.permute.xlu0 %740
        %742 = vrot.lane.b32.xlu0 %v261, 30
        %v743 = vpop.permute.xlu0 %742
        %v744 = vsel %vm734, %v741, %v743
        %v745 = vsel %vm734, %v743, %v741
        %v746 = vstv %s729
        %v747 = vmul.f32 %v745, %v746
        %v748 = vmul.f32 %v744, %v746
        %v749 = vadd.f32 %v738, %v747
        %v750 = vadd.f32 %v739, %v748
        %v751 = vmul.f32 %v749, %v524
        %v752 = vmul.f32 %v750, %v528
        %v753 = vadd.f32 %v726, %v751
        %v754 = vadd.f32 %v727, %v752
        %s755 = sld [smem:[#allocation7 + $0xd]]
        %s756 = sld [smem:[#allocation7 + $0x3e]]
        %757 = vrot.lane.b32.xlu0 %v240, 29
        %v758 = vpop.permute.xlu0 %757
        %759 = vrot.lane.b32.xlu0 %v247, 29
        %v760 = vpop.permute.xlu0 %759
        %vm761 = vcmp.lt.s32.totalorder %v312, 29
        %v762 = vsel %vm761, %v758, %v760
        %v763 = vsel %vm761, %v760, %v758
        %v764 = vstv %s755
        %v765 = vmul.f32 %v763, %v764
        %v766 = vmul.f32 %v762, %v764
        %767 = vrot.lane.b32.xlu0 %v254, 29
        %v768 = vpop.permute.xlu0 %767
        %769 = vrot.lane.b32.xlu0 %v261, 29
        %v770 = vpop.permute.xlu0 %769
        %v771 = vsel %vm761, %v768, %v770
        %v772 = vsel %vm761, %v770, %v768
        %v773 = vstv %s756
        %v774 = vmul.f32 %v772, %v773
        %v775 = vmul.f32 %v771, %v773
        %v776 = vadd.f32 %v765, %v774
        %v777 = vadd.f32 %v766, %v775
        %v778 = vmul.f32 %v776, %v562
        %v779 = vmul.f32 %v777, %v566
        %v780 = vadd.f32 %v753, %v778
        %v781 = vadd.f32 %v754, %v779
        %v783 = vlaneseq
        %v784 = vshrl.u32 %v783, 7
        %v785 = vsub.s32 0, %v784
        %v786 = vrot.slane %v592, %v785
        %v787 = vlaneseq
        %v788 = vshrl.u32 %v787, 7
        %v789 = vsub.s32 1, %v788
        %v790 = vrot.slane %v592, %v789
        %v793 = vmul.f32 %v780, %v786
        %v794 = vmul.f32 %v781, %v790
        %v795 = vadd.f32 %v586, %v793
        %v796 = vadd.f32 %v587, %v794
        %vm797 = vcmp.ge.f32.partialorder %v262, 1.0
        %vm798 = vcmp.le.f32.partialorder %v262, 16.0
        %vm799 = vmand %vm797, %vm798
        %v800 = vsel %vm799, 1, 0
        %v801 = vcvt.s32.f32 %v800
        %s802 = sld [smem:[#allocation7 + $0xe]]
        %s803 = sld [smem:[#allocation7 + $0x3f]]
        %804 = vrot.lane.b32.xlu0 %v240, 19
        %v805 = vpop.permute.xlu0 %804
        %806 = vrot.lane.b32.xlu0 %v247, 19
        %v807 = vpop.permute.xlu0 %806
        %vm808 = vcmp.lt.s32.totalorder %v312, 19
        %v809 = vsel %vm808, %v805, %v807
        %v810 = vsel %vm808, %v807, %v805
        %v811 = vstv %s802
        %v812 = vmul.f32 %v810, %v811
        %v813 = vmul.f32 %v809, %v811
        %814 = vrot.lane.b32.xlu0 %v254, 19
        %v815 = vpop.permute.xlu0 %814
        %816 = vrot.lane.b32.xlu0 %v261, 19
        %v817 = vpop.permute.xlu0 %816
        %v818 = vsel %vm808, %v815, %v817
        %v819 = vsel %vm808, %v817, %v815
        %v820 = vstv %s803
        %v821 = vmul.f32 %v819, %v820
        %v822 = vmul.f32 %v818, %v820
        %v823 = vadd.f32 %v812, %v821
        %v824 = vadd.f32 %v813, %v822
        %v825 = vmul.f32 %v823, %v334
        %v826 = vmul.f32 %v824, %v338
        %v827 = vadd.f32 %v825, 0.0
        %v828 = vadd.f32 %v826, 0.0
        %s829 = sld [smem:[#allocation7 + $0xf]]
        %s830 = sld [smem:[#allocation7 + $0x40]]
        %831 = vrot.lane.b32.xlu0 %v240, 18
        %v832 = vpop.permute.xlu0 %831
        %833 = vrot.lane.b32.xlu0 %v247, 18
        %v834 = vpop.permute.xlu0 %833
        %vm835 = vcmp.lt.s32.totalorder %v312, 18
        %v836 = vsel %vm835, %v832, %v834
        %v837 = vsel %vm835, %v834, %v832
        %v838 = vstv %s829
        %v839 = vmul.f32 %v837, %v838
        %v840 = vmul.f32 %v836, %v838
        %841 = vrot.lane.b32.xlu0 %v254, 18
        %v842 = vpop.permute.xlu0 %841
        %843 = vrot.lane.b32.xlu0 %v261, 18
        %v844 = vpop.permute.xlu0 %843
        %v845 = vsel %vm835, %v842, %v844
        %v846 = vsel %vm835, %v844, %v842
        %v847 = vstv %s830
        %v848 = vmul.f32 %v846, %v847
        %v849 = vmul.f32 %v845, %v847
        %v850 = vadd.f32 %v839, %v848
        %v851 = vadd.f32 %v840, %v849
        %v852 = vmul.f32 %v850, %v372
        %v853 = vmul.f32 %v851, %v376
        %v854 = vadd.f32 %v827, %v852
        %v855 = vadd.f32 %v828, %v853
        %s856 = sld [smem:[#allocation7 + $0x10]]
        %s857 = sld [smem:[#allocation7 + $0x41]]
        %858 = vrot.lane.b32.xlu0 %v240, 17
        %v859 = vpop.permute.xlu0 %858
        %860 = vrot.lane.b32.xlu0 %v247, 17
        %v861 = vpop.permute.xlu0 %860
        %vm862 = vcmp.lt.s32.totalorder %v312, 17
        %v863 = vsel %vm862, %v859, %v861
        %v864 = vsel %vm862, %v861, %v859
        %v865 = vstv %s856
        %v866 = vmul.f32 %v864, %v865
        %v867 = vmul.f32 %v863, %v865
        %868 = vrot.lane.b32.xlu0 %v254, 17
        %v869 = vpop.permute.xlu0 %868
        %870 = vrot.lane.b32.xlu0 %v261, 17
        %v871 = vpop.permute.xlu0 %870
        %v872 = vsel %vm862, %v869, %v871
        %v873 = vsel %vm862, %v871, %v869
        %v874 = vstv %s857
        %v875 = vmul.f32 %v873, %v874
        %v876 = vmul.f32 %v872, %v874
        %v877 = vadd.f32 %v866, %v875
        %v878 = vadd.f32 %v867, %v876
        %v879 = vmul.f32 %v877, %v410
        %v880 = vmul.f32 %v878, %v414
        %v881 = vadd.f32 %v854, %v879
        %v882 = vadd.f32 %v855, %v880
        %s883 = sld [smem:[#allocation7 + $0x11]]
        %s884 = sld [smem:[#allocation7 + $0x42]]
        %885 = vrot.lane.b32.xlu0 %v240, 16
        %v886 = vpop.permute.xlu0 %885
        %887 = vrot.lane.b32.xlu0 %v247, 16
        %v888 = vpop.permute.xlu0 %887
        %vm889 = vcmp.lt.s32.totalorder %v312, 16
        %v890 = vsel %vm889, %v886, %v888
        %v891 = vsel %vm889, %v888, %v886
        %v892 = vstv %s883
        %v893 = vmul.f32 %v891, %v892
        %v894 = vmul.f32 %v890, %v892
        %895 = vrot.lane.b32.xlu0 %v254, 16
        %v896 = vpop.permute.xlu0 %895
        %897 = vrot.lane.b32.xlu0 %v261, 16
        %v898 = vpop.permute.xlu0 %897
        %v899 = vsel %vm889, %v896, %v898
        %v900 = vsel %vm889, %v898, %v896
        %v901 = vstv %s884
        %v902 = vmul.f32 %v900, %v901
        %v903 = vmul.f32 %v899, %v901
        %v904 = vadd.f32 %v893, %v902
        %v905 = vadd.f32 %v894, %v903
        %v906 = vmul.f32 %v904, %v448
        %v907 = vmul.f32 %v905, %v452
        %v908 = vadd.f32 %v881, %v906
        %v909 = vadd.f32 %v882, %v907
        %s910 = sld [smem:[#allocation7 + $0x12]]
        %s911 = sld [smem:[#allocation7 + $0x43]]
        %912 = vrot.lane.b32.xlu0 %v240, 15
        %v913 = vpop.permute.xlu0 %912
        %914 = vrot.lane.b32.xlu0 %v247, 15
        %v915 = vpop.permute.xlu0 %914
        %vm916 = vcmp.lt.s32.totalorder %v312, 15
        %v917 = vsel %vm916, %v913, %v915
        %v918 = vsel %vm916, %v915, %v913
        %v919 = vstv %s910
        %v920 = vmul.f32 %v918, %v919
        %v921 = vmul.f32 %v917, %v919
        %922 = vrot.lane.b32.xlu0 %v254, 15
        %v923 = vpop.permute.xlu0 %922
        %924 = vrot.lane.b32.xlu0 %v261, 15
        %v925 = vpop.permute.xlu0 %924
        %v926 = vsel %vm916, %v923, %v925
        %v927 = vsel %vm916, %v925, %v923
        %v928 = vstv %s911
        %v929 = vmul.f32 %v927, %v928
        %v930 = vmul.f32 %v926, %v928
        %v931 = vadd.f32 %v920, %v929
        %v932 = vadd.f32 %v921, %v930
        %v933 = vmul.f32 %v931, %v486
        %v934 = vmul.f32 %v932, %v490
        %v935 = vadd.f32 %v908, %v933
        %v936 = vadd.f32 %v909, %v934
        %s937 = sld [smem:[#allocation7 + $0x13]]
        %s938 = sld [smem:[#allocation7 + $0x44]]
        %939 = vrot.lane.b32.xlu0 %v240, 14
        %v940 = vpop.permute.xlu0 %939
        %941 = vrot.lane.b32.xlu0 %v247, 14
        %v942 = vpop.permute.xlu0 %941
        %vm943 = vcmp.lt.s32.totalorder %v312, 14
        %v944 = vsel %vm943, %v940, %v942
        %v945 = vsel %vm943, %v942, %v940
        %v946 = vstv %s937
        %v947 = vmul.f32 %v945, %v946
        %v948 = vmul.f32 %v944, %v946
        %949 = vrot.lane.b32.xlu0 %v254, 14
        %v950 = vpop.permute.xlu0 %949
        %951 = vrot.lane.b32.xlu0 %v261, 14
        %v952 = vpop.permute.xlu0 %951
        %v953 = vsel %vm943, %v950, %v952
        %v954 = vsel %vm943, %v952, %v950
        %v955 = vstv %s938
        %v956 = vmul.f32 %v954, %v955
        %v957 = vmul.f32 %v953, %v955
        %v958 = vadd.f32 %v947, %v956
        %v959 = vadd.f32 %v948, %v957
        %v960 = vmul.f32 %v958, %v524
        %v961 = vmul.f32 %v959, %v528
        %v962 = vadd.f32 %v935, %v960
        %v963 = vadd.f32 %v936, %v961
        %s964 = sld [smem:[#allocation7 + $0x14]]
        %s965 = sld [smem:[#allocation7 + $0x45]]
        %966 = vrot.lane.b32.xlu0 %v240, 13
        %v967 = vpop.permute.xlu0 %966
        %968 = vrot.lane.b32.xlu0 %v247, 13
        %v969 = vpop.permute.xlu0 %968
        %vm970 = vcmp.lt.s32.totalorder %v312, 13
        %v971 = vsel %vm970, %v967, %v969
        %v972 = vsel %vm970, %v969, %v967
        %v973 = vstv %s964
        %v974 = vmul.f32 %v972, %v973
        %v975 = vmul.f32 %v971, %v973
        %976 = vrot.lane.b32.xlu0 %v254, 13
        %v977 = vpop.permute.xlu0 %976
        %978 = vrot.lane.b32.xlu0 %v261, 13
        %v979 = vpop.permute.xlu0 %978
        %v980 = vsel %vm970, %v977, %v979
        %v981 = vsel %vm970, %v979, %v977
        %v982 = vstv %s965
        %v983 = vmul.f32 %v981, %v982
        %v984 = vmul.f32 %v980, %v982
        %v985 = vadd.f32 %v974, %v983
        %v986 = vadd.f32 %v975, %v984
        %v987 = vmul.f32 %v985, %v562
        %v988 = vmul.f32 %v986, %v566
        %v989 = vadd.f32 %v962, %v987
        %v990 = vadd.f32 %v963, %v988
        %v992 = vlaneseq
        %v993 = vshrl.u32 %v992, 7
        %v994 = vsub.s32 0, %v993
        %v995 = vrot.slane %v801, %v994
        %v996 = vlaneseq
        %v997 = vshrl.u32 %v996, 7
        %v998 = vsub.s32 1, %v997
        %v999 = vrot.slane %v801, %v998
        %v1002 = vmul.f32 %v989, %v995
        %v1003 = vmul.f32 %v990, %v999
        %v1004 = vadd.f32 %v795, %v1002
        %v1005 = vadd.f32 %v796, %v1003
        %vm1006 = vcmp.ge.f32.partialorder %v262, 0.0
        %vm1007 = vcmp.le.f32.partialorder %v262, 15.0
        %vm1008 = vmand %vm1006, %vm1007
        %v1009 = vsel %vm1008, 1, 0
        %v1010 = vcvt.s32.f32 %v1009
        %s1011 = sld [smem:[#allocation7 + $0x15]]
        %s1012 = sld [smem:[#allocation7 + $0x46]]
        %1013 = vrot.lane.b32.xlu0 %v240, 3
        %v1014 = vpop.permute.xlu0 %1013
        %1015 = vrot.lane.b32.xlu0 %v247, 3
        %v1016 = vpop.permute.xlu0 %1015
        %vm1017 = vcmp.lt.s32.totalorder %v312, 3
        %v1018 = vsel %vm1017, %v1014, %v1016
        %v1019 = vsel %vm1017, %v1016, %v1014
        %v1020 = vstv %s1011
        %v1021 = vmul.f32 %v1019, %v1020
        %v1022 = vmul.f32 %v1018, %v1020
        %1023 = vrot.lane.b32.xlu0 %v254, 3
        %v1024 = vpop.permute.xlu0 %1023
        %1025 = vrot.lane.b32.xlu0 %v261, 3
        %v1026 = vpop.permute.xlu0 %1025
        %v1027 = vsel %vm1017, %v1024, %v1026
        %v1028 = vsel %vm1017, %v1026, %v1024
        %v1029 = vstv %s1012
        %v1030 = vmul.f32 %v1028, %v1029
        %v1031 = vmul.f32 %v1027, %v1029
        %v1032 = vadd.f32 %v1021, %v1030
        %v1033 = vadd.f32 %v1022, %v1031
        %v1034 = vmul.f32 %v1032, %v334
        %v1035 = vmul.f32 %v1033, %v338
        %v1036 = vadd.f32 %v1034, 0.0
        %v1037 = vadd.f32 %v1035, 0.0
        %s1038 = sld [smem:[#allocation7 + $0x16]]
        %s1039 = sld [smem:[#allocation7 + $0x47]]
        %1040 = vrot.lane.b32.xlu0 %v240, 2
        %v1041 = vpop.permute.xlu0 %1040
        %1042 = vrot.lane.b32.xlu0 %v247, 2
        %v1043 = vpop.permute.xlu0 %1042
        %vm1044 = vcmp.lt.s32.totalorder %v312, 2
        %v1045 = vsel %vm1044, %v1041, %v1043
        %v1046 = vsel %vm1044, %v1043, %v1041
        %v1047 = vstv %s1038
        %v1048 = vmul.f32 %v1046, %v1047
        %v1049 = vmul.f32 %v1045, %v1047
        %1050 = vrot.lane.b32.xlu0 %v254, 2
        %v1051 = vpop.permute.xlu0 %1050
        %1052 = vrot.lane.b32.xlu0 %v261, 2
        %v1053 = vpop.permute.xlu0 %1052
        %v1054 = vsel %vm1044, %v1051, %v1053
        %v1055 = vsel %vm1044, %v1053, %v1051
        %v1056 = vstv %s1039
        %v1057 = vmul.f32 %v1055, %v1056
        %v1058 = vmul.f32 %v1054, %v1056
        %v1059 = vadd.f32 %v1048, %v1057
        %v1060 = vadd.f32 %v1049, %v1058
        %v1061 = vmul.f32 %v1059, %v372
        %v1062 = vmul.f32 %v1060, %v376
        %v1063 = vadd.f32 %v1036, %v1061
        %v1064 = vadd.f32 %v1037, %v1062
        %s1065 = sld [smem:[#allocation7 + $0x17]]
        %s1066 = sld [smem:[#allocation7 + $0x48]]
        %1067 = vrot.lane.b32.xlu0 %v240, 1
        %v1068 = vpop.permute.xlu0 %1067
        %1069 = vrot.lane.b32.xlu0 %v247, 1
        %v1070 = vpop.permute.xlu0 %1069
        %vm1071 = vcmp.lt.s32.totalorder %v312, 1
        %v1072 = vsel %vm1071, %v1068, %v1070
        %v1073 = vsel %vm1071, %v1070, %v1068
        %v1074 = vstv %s1065
        %v1075 = vmul.f32 %v1073, %v1074
        %v1076 = vmul.f32 %v1072, %v1074
        %1077 = vrot.lane.b32.xlu0 %v254, 1
        %v1078 = vpop.permute.xlu0 %1077
        %1079 = vrot.lane.b32.xlu0 %v261, 1
        %v1080 = vpop.permute.xlu0 %1079
        %v1081 = vsel %vm1071, %v1078, %v1080
        %v1082 = vsel %vm1071, %v1080, %v1078
        %v1083 = vstv %s1066
        %v1084 = vmul.f32 %v1082, %v1083
        %v1085 = vmul.f32 %v1081, %v1083
        %v1086 = vadd.f32 %v1075, %v1084
        %v1087 = vadd.f32 %v1076, %v1085
        %v1088 = vmul.f32 %v1086, %v410
        %v1089 = vmul.f32 %v1087, %v414
        %v1090 = vadd.f32 %v1063, %v1088
        %v1091 = vadd.f32 %v1064, %v1089
        %s1092 = sld [smem:[#allocation7 + $0x18]]
        %s1093 = sld [smem:[#allocation7 + $0x49]]
        %v1094 = vstv %s1092
        %v1095 = vmul.f32 %v240, %v1094
        %v1096 = vmul.f32 %v247, %v1094
        %v1097 = vstv %s1093
        %v1098 = vmul.f32 %v254, %v1097
        %v1099 = vmul.f32 %v261, %v1097
        %v1100 = vadd.f32 %v1095, %v1098
        %v1101 = vadd.f32 %v1096, %v1099
        %v1102 = vmul.f32 %v1100, %v448
        %v1103 = vmul.f32 %v1101, %v452
        %v1104 = vadd.f32 %v1090, %v1102
        %v1105 = vadd.f32 %v1091, %v1103
        %s1106 = sld [smem:[#allocation7 + $0x19]]
        %s1107 = sld [smem:[#allocation7 + $0x4a]]
        %1108 = vrot.lane.b32.xlu0 %v240, 127
        %v1109 = vpop.permute.xlu0 %1108
        %1110 = vrot.lane.b32.xlu0 %v247, 127
        %v1111 = vpop.permute.xlu0 %1110
        %vm1112 = vcmp.lt.s32.totalorder %v312, 127
        %v1113 = vsel %vm1112, %v1109, %v1111
        %v1114 = vsel %vm1112, %v1111, %v1109
        %v1115 = vstv %s1106
        %v1116 = vmul.f32 %v1113, %v1115
        %v1117 = vmul.f32 %v1114, %v1115
        %1118 = vrot.lane.b32.xlu0 %v254, 127
        %v1119 = vpop.permute.xlu0 %1118
        %1120 = vrot.lane.b32.xlu0 %v261, 127
        %v1121 = vpop.permute.xlu0 %1120
        %v1122 = vsel %vm1112, %v1119, %v1121
        %v1123 = vsel %vm1112, %v1121, %v1119
        %v1124 = vstv %s1107
        %v1125 = vmul.f32 %v1122, %v1124
        %v1126 = vmul.f32 %v1123, %v1124
        %v1127 = vadd.f32 %v1116, %v1125
        %v1128 = vadd.f32 %v1117, %v1126
        %v1129 = vmul.f32 %v1127, %v486
        %v1130 = vmul.f32 %v1128, %v490
        %v1131 = vadd.f32 %v1104, %v1129
        %v1132 = vadd.f32 %v1105, %v1130
        %s1133 = sld [smem:[#allocation7 + $0x1a]]
        %s1134 = sld [smem:[#allocation7 + $0x4b]]
        %1135 = vrot.lane.b32.xlu0 %v240, 126
        %v1136 = vpop.permute.xlu0 %1135
        %1137 = vrot.lane.b32.xlu0 %v247, 126
        %v1138 = vpop.permute.xlu0 %1137
        %vm1139 = vcmp.lt.s32.totalorder %v312, 126
        %v1140 = vsel %vm1139, %v1136, %v1138
        %v1141 = vsel %vm1139, %v1138, %v1136
        %v1142 = vstv %s1133
        %v1143 = vmul.f32 %v1140, %v1142
        %v1144 = vmul.f32 %v1141, %v1142
        %1145 = vrot.lane.b32.xlu0 %v254, 126
        %v1146 = vpop.permute.xlu0 %1145
        %1147 = vrot.lane.b32.xlu0 %v261, 126
        %v1148 = vpop.permute.xlu0 %1147
        %v1149 = vsel %vm1139, %v1146, %v1148
        %v1150 = vsel %vm1139, %v1148, %v1146
        %v1151 = vstv %s1134
        %v1152 = vmul.f32 %v1149, %v1151
        %v1153 = vmul.f32 %v1150, %v1151
        %v1154 = vadd.f32 %v1143, %v1152
        %v1155 = vadd.f32 %v1144, %v1153
        %v1156 = vmul.f32 %v1154, %v524
        %v1157 = vmul.f32 %v1155, %v528
        %v1158 = vadd.f32 %v1131, %v1156
        %v1159 = vadd.f32 %v1132, %v1157
        %s1160 = sld [smem:[#allocation7 + $0x1b]]
        %s1161 = sld [smem:[#allocation7 + $0x4c]]
        %1162 = vrot.lane.b32.xlu0 %v240, 125
        %v1163 = vpop.permute.xlu0 %1162
        %1164 = vrot.lane.b32.xlu0 %v247, 125
        %v1165 = vpop.permute.xlu0 %1164
        %vm1166 = vcmp.lt.s32.totalorder %v312, 125
        %v1167 = vsel %vm1166, %v1163, %v1165
        %v1168 = vsel %vm1166, %v1165, %v1163
        %v1169 = vstv %s1160
        %v1170 = vmul.f32 %v1167, %v1169
        %v1171 = vmul.f32 %v1168, %v1169
        %1172 = vrot.lane.b32.xlu0 %v254, 125
        %v1173 = vpop.permute.xlu0 %1172
        %1174 = vrot.lane.b32.xlu0 %v261, 125
        %v1175 = vpop.permute.xlu0 %1174
        %v1176 = vsel %vm1166, %v1173, %v1175
        %v1177 = vsel %vm1166, %v1175, %v1173
        %v1178 = vstv %s1161
        %v1179 = vmul.f32 %v1176, %v1178
        %v1180 = vmul.f32 %v1177, %v1178
        %v1181 = vadd.f32 %v1170, %v1179
        %v1182 = vadd.f32 %v1171, %v1180
        %v1183 = vmul.f32 %v1181, %v562
        %v1184 = vmul.f32 %v1182, %v566
        %v1185 = vadd.f32 %v1158, %v1183
        %v1186 = vadd.f32 %v1159, %v1184
        %v1188 = vlaneseq
        %v1189 = vshrl.u32 %v1188, 7
        %v1190 = vsub.s32 0, %v1189
        %v1191 = vrot.slane %v1010, %v1190
        %v1192 = vlaneseq
        %v1193 = vshrl.u32 %v1192, 7
        %v1194 = vsub.s32 1, %v1193
        %v1195 = vrot.slane %v1010, %v1194
        %v1198 = vmul.f32 %v1185, %v1191
        %v1199 = vmul.f32 %v1186, %v1195
        %v1200 = vadd.f32 %v1004, %v1198
        %v1201 = vadd.f32 %v1005, %v1199
        %vm1202 = vcmp.ge.f32.partialorder %v262, -1.0
        %vm1203 = vcmp.le.f32.partialorder %v262, 14.0
        %vm1204 = vmand %vm1202, %vm1203
        %v1205 = vsel %vm1204, 1, 0
        %v1206 = vcvt.s32.f32 %v1205
        %s1207 = sld [smem:[#allocation7 + $0x1c]]
        %s1208 = sld [smem:[#allocation7 + $0x4d]]
        %1209 = vrot.lane.b32.xlu0 %v240, 115
        %v1210 = vpop.permute.xlu0 %1209
        %1211 = vrot.lane.b32.xlu0 %v247, 115
        %v1212 = vpop.permute.xlu0 %1211
        %vm1213 = vcmp.lt.s32.totalorder %v312, 115
        %v1214 = vsel %vm1213, %v1210, %v1212
        %v1215 = vsel %vm1213, %v1212, %v1210
        %v1216 = vstv %s1207
        %v1217 = vmul.f32 %v1214, %v1216
        %v1218 = vmul.f32 %v1215, %v1216
        %1219 = vrot.lane.b32.xlu0 %v254, 115
        %v1220 = vpop.permute.xlu0 %1219
        %1221 = vrot.lane.b32.xlu0 %v261, 115
        %v1222 = vpop.permute.xlu0 %1221
        %v1223 = vsel %vm1213, %v1220, %v1222
        %v1224 = vsel %vm1213, %v1222, %v1220
        %v1225 = vstv %s1208
        %v1226 = vmul.f32 %v1223, %v1225
        %v1227 = vmul.f32 %v1224, %v1225
        %v1228 = vadd.f32 %v1217, %v1226
        %v1229 = vadd.f32 %v1218, %v1227
        %v1230 = vmul.f32 %v1228, %v334
        %v1231 = vmul.f32 %v1229, %v338
        %v1232 = vadd.f32 %v1230, 0.0
        %v1233 = vadd.f32 %v1231, 0.0
        %s1234 = sld [smem:[#allocation7 + $0x1d]]
        %s1235 = sld [smem:[#allocation7 + $0x4e]]
        %1236 = vrot.lane.b32.xlu0 %v240, 114
        %v1237 = vpop.permute.xlu0 %1236
        %1238 = vrot.lane.b32.xlu0 %v247, 114
        %v1239 = vpop.permute.xlu0 %1238
        %vm1240 = vcmp.lt.s32.totalorder %v312, 114
        %v1241 = vsel %vm1240, %v1237, %v1239
        %v1242 = vsel %vm1240, %v1239, %v1237
        %v1243 = vstv %s1234
        %v1244 = vmul.f32 %v1241, %v1243
        %v1245 = vmul.f32 %v1242, %v1243
        %1246 = vrot.lane.b32.xlu0 %v254, 114
        %v1247 = vpop.permute.xlu0 %1246
        %1248 = vrot.lane.b32.xlu0 %v261, 114
        %v1249 = vpop.permute.xlu0 %1248
        %v1250 = vsel %vm1240, %v1247, %v1249
        %v1251 = vsel %vm1240, %v1249, %v1247
        %v1252 = vstv %s1235
        %v1253 = vmul.f32 %v1250, %v1252
        %v1254 = vmul.f32 %v1251, %v1252
        %v1255 = vadd.f32 %v1244, %v1253
        %v1256 = vadd.f32 %v1245, %v1254
        %v1257 = vmul.f32 %v1255, %v372
        %v1258 = vmul.f32 %v1256, %v376
        %v1259 = vadd.f32 %v1232, %v1257
        %v1260 = vadd.f32 %v1233, %v1258
        %s1261 = sld [smem:[#allocation7 + $0x1e]]
        %s1262 = sld [smem:[#allocation7 + $0x4f]]
        %1263 = vrot.lane.b32.xlu0 %v240, 113
        %v1264 = vpop.permute.xlu0 %1263
        %1265 = vrot.lane.b32.xlu0 %v247, 113
        %v1266 = vpop.permute.xlu0 %1265
        %vm1267 = vcmp.lt.s32.totalorder %v312, 113
        %v1268 = vsel %vm1267, %v1264, %v1266
        %v1269 = vsel %vm1267, %v1266, %v1264
        %v1270 = vstv %s1261
        %v1271 = vmul.f32 %v1268, %v1270
        %v1272 = vmul.f32 %v1269, %v1270
        %1273 = vrot.lane.b32.xlu0 %v254, 113
        %v1274 = vpop.permute.xlu0 %1273
        %1275 = vrot.lane.b32.xlu0 %v261, 113
        %v1276 = vpop.permute.xlu0 %1275
        %v1277 = vsel %vm1267, %v1274, %v1276
        %v1278 = vsel %vm1267, %v1276, %v1274
        %v1279 = vstv %s1262
        %v1280 = vmul.f32 %v1277, %v1279
        %v1281 = vmul.f32 %v1278, %v1279
        %v1282 = vadd.f32 %v1271, %v1280
        %v1283 = vadd.f32 %v1272, %v1281
        %v1284 = vmul.f32 %v1282, %v410
        %v1285 = vmul.f32 %v1283, %v414
        %v1286 = vadd.f32 %v1259, %v1284
        %v1287 = vadd.f32 %v1260, %v1285
        %s1288 = sld [smem:[#allocation7 + $0x1f]]
        %s1289 = sld [smem:[#allocation7 + $0x50]]
        %1290 = vrot.lane.b32.xlu0 %v240, 112
        %v1291 = vpop.permute.xlu0 %1290
        %1292 = vrot.lane.b32.xlu0 %v247, 112
        %v1293 = vpop.permute.xlu0 %1292
        %vm1294 = vcmp.lt.s32.totalorder %v312, 112
        %v1295 = vsel %vm1294, %v1291, %v1293
        %v1296 = vsel %vm1294, %v1293, %v1291
        %v1297 = vstv %s1288
        %v1298 = vmul.f32 %v1295, %v1297
        %v1299 = vmul.f32 %v1296, %v1297
        %1300 = vrot.lane.b32.xlu0 %v254, 112
        %v1301 = vpop.permute.xlu0 %1300
        %1302 = vrot.lane.b32.xlu0 %v261, 112
        %v1303 = vpop.permute.xlu0 %1302
        %v1304 = vsel %vm1294, %v1301, %v1303
        %v1305 = vsel %vm1294, %v1303, %v1301
        %v1306 = vstv %s1289
        %v1307 = vmul.f32 %v1304, %v1306
        %v1308 = vmul.f32 %v1305, %v1306
        %v1309 = vadd.f32 %v1298, %v1307
        %v1310 = vadd.f32 %v1299, %v1308
        %v1311 = vmul.f32 %v1309, %v448
        %v1312 = vmul.f32 %v1310, %v452
        %v1313 = vadd.f32 %v1286, %v1311
        %v1314 = vadd.f32 %v1287, %v1312
        %s1315 = sld [smem:[#allocation7 + $0x20]]
        %s1316 = sld [smem:[#allocation7 + $0x51]]
        %1317 = vrot.lane.b32.xlu0 %v240, 111
        %v1318 = vpop.permute.xlu0 %1317
        %1319 = vrot.lane.b32.xlu0 %v247, 111
        %v1320 = vpop.permute.xlu0 %1319
        %vm1321 = vcmp.lt.s32.totalorder %v312, 111
        %v1322 = vsel %vm1321, %v1318, %v1320
        %v1323 = vsel %vm1321, %v1320, %v1318
        %v1324 = vstv %s1315
        %v1325 = vmul.f32 %v1322, %v1324
        %v1326 = vmul.f32 %v1323, %v1324
        %1327 = vrot.lane.b32.xlu0 %v254, 111
        %v1328 = vpop.permute.xlu0 %1327
        %1329 = vrot.lane.b32.xlu0 %v261, 111
        %v1330 = vpop.permute.xlu0 %1329
        %v1331 = vsel %vm1321, %v1328, %v1330
        %v1332 = vsel %vm1321, %v1330, %v1328
        %v1333 = vstv %s1316
        %v1334 = vmul.f32 %v1331, %v1333
        %v1335 = vmul.f32 %v1332, %v1333
        %v1336 = vadd.f32 %v1325, %v1334
        %v1337 = vadd.f32 %v1326, %v1335
        %v1338 = vmul.f32 %v1336, %v486
        %v1339 = vmul.f32 %v1337, %v490
        %v1340 = vadd.f32 %v1313, %v1338
        %v1341 = vadd.f32 %v1314, %v1339
        %s1342 = sld [smem:[#allocation7 + $0x21]]
        %s1343 = sld [smem:[#allocation7 + $0x52]]
        %1344 = vrot.lane.b32.xlu0 %v240, 110
        %v1345 = vpop.permute.xlu0 %1344
        %1346 = vrot.lane.b32.xlu0 %v247, 110
        %v1347 = vpop.permute.xlu0 %1346
        %vm1348 = vcmp.lt.s32.totalorder %v312, 110
        %v1349 = vsel %vm1348, %v1345, %v1347
        %v1350 = vsel %vm1348, %v1347, %v1345
        %v1351 = vstv %s1342
        %v1352 = vmul.f32 %v1349, %v1351
        %v1353 = vmul.f32 %v1350, %v1351
        %1354 = vrot.lane.b32.xlu0 %v254, 110
        %v1355 = vpop.permute.xlu0 %1354
        %1356 = vrot.lane.b32.xlu0 %v261, 110
        %v1357 = vpop.permute.xlu0 %1356
        %v1358 = vsel %vm1348, %v1355, %v1357
        %v1359 = vsel %vm1348, %v1357, %v1355
        %v1360 = vstv %s1343
        %v1361 = vmul.f32 %v1358, %v1360
        %v1362 = vmul.f32 %v1359, %v1360
        %v1363 = vadd.f32 %v1352, %v1361
        %v1364 = vadd.f32 %v1353, %v1362
        %v1365 = vmul.f32 %v1363, %v524
        %v1366 = vmul.f32 %v1364, %v528
        %v1367 = vadd.f32 %v1340, %v1365
        %v1368 = vadd.f32 %v1341, %v1366
        %s1369 = sld [smem:[#allocation7 + $0x22]]
        %s1370 = sld [smem:[#allocation7 + $0x53]]
        %1371 = vrot.lane.b32.xlu0 %v240, 109
        %v1372 = vpop.permute.xlu0 %1371
        %1373 = vrot.lane.b32.xlu0 %v247, 109
        %v1374 = vpop.permute.xlu0 %1373
        %vm1375 = vcmp.lt.s32.totalorder %v312, 109
        %v1376 = vsel %vm1375, %v1372, %v1374
        %v1377 = vsel %vm1375, %v1374, %v1372
        %v1378 = vstv %s1369
        %v1379 = vmul.f32 %v1376, %v1378
        %v1380 = vmul.f32 %v1377, %v1378
        %1381 = vrot.lane.b32.xlu0 %v254, 109
        %v1382 = vpop.permute.xlu0 %1381
        %1383 = vrot.lane.b32.xlu0 %v261, 109
        %v1384 = vpop.permute.xlu0 %1383
        %v1385 = vsel %vm1375, %v1382, %v1384
        %v1386 = vsel %vm1375, %v1384, %v1382
        %v1387 = vstv %s1370
        %v1388 = vmul.f32 %v1385, %v1387
        %v1389 = vmul.f32 %v1386, %v1387
        %v1390 = vadd.f32 %v1379, %v1388
        %v1391 = vadd.f32 %v1380, %v1389
        %v1392 = vmul.f32 %v1390, %v562
        %v1393 = vmul.f32 %v1391, %v566
        %v1394 = vadd.f32 %v1367, %v1392
        %v1395 = vadd.f32 %v1368, %v1393
        %v1397 = vlaneseq
        %v1398 = vshrl.u32 %v1397, 7
        %v1399 = vsub.s32 0, %v1398
        %v1400 = vrot.slane %v1206, %v1399
        %v1401 = vlaneseq
        %v1402 = vshrl.u32 %v1401, 7
        %v1403 = vsub.s32 1, %v1402
        %v1404 = vrot.slane %v1206, %v1403
        %v1407 = vmul.f32 %v1394, %v1400
        %v1408 = vmul.f32 %v1395, %v1404
        %v1409 = vadd.f32 %v1200, %v1407
        %v1410 = vadd.f32 %v1201, %v1408
        %vm1411 = vcmp.ge.f32.partialorder %v262, -2.0
        %vm1412 = vcmp.le.f32.partialorder %v262, 13.0
        %vm1413 = vmand %vm1411, %vm1412
        %v1414 = vsel %vm1413, 1, 0
        %v1415 = vcvt.s32.f32 %v1414
        %s1416 = sld [smem:[#allocation7 + $0x23]]
        %s1417 = sld [smem:[#allocation7 + $0x54]]
        %1418 = vrot.lane.b32.xlu0 %v240, 99
        %v1419 = vpop.permute.xlu0 %1418
        %1420 = vrot.lane.b32.xlu0 %v247, 99
        %v1421 = vpop.permute.xlu0 %1420
        %vm1422 = vcmp.lt.s32.totalorder %v312, 99
        %v1423 = vsel %vm1422, %v1419, %v1421
        %v1424 = vsel %vm1422, %v1421, %v1419
        %v1425 = vstv %s1416
        %v1426 = vmul.f32 %v1423, %v1425
        %v1427 = vmul.f32 %v1424, %v1425
        %1428 = vrot.lane.b32.xlu0 %v254, 99
        %v1429 = vpop.permute.xlu0 %1428
        %1430 = vrot.lane.b32.xlu0 %v261, 99
        %v1431 = vpop.permute.xlu0 %1430
        %v1432 = vsel %vm1422, %v1429, %v1431
        %v1433 = vsel %vm1422, %v1431, %v1429
        %v1434 = vstv %s1417
        %v1435 = vmul.f32 %v1432, %v1434
        %v1436 = vmul.f32 %v1433, %v1434
        %v1437 = vadd.f32 %v1426, %v1435
        %v1438 = vadd.f32 %v1427, %v1436
        %v1439 = vmul.f32 %v1437, %v334
        %v1440 = vmul.f32 %v1438, %v338
        %v1441 = vadd.f32 %v1439, 0.0
        %v1442 = vadd.f32 %v1440, 0.0
        %s1443 = sld [smem:[#allocation7 + $0x24]]
        %s1444 = sld [smem:[#allocation7 + $0x55]]
        %1445 = vrot.lane.b32.xlu0 %v240, 98
        %v1446 = vpop.permute.xlu0 %1445
        %1447 = vrot.lane.b32.xlu0 %v247, 98
        %v1448 = vpop.permute.xlu0 %1447
        %vm1449 = vcmp.lt.s32.totalorder %v312, 98
        %v1450 = vsel %vm1449, %v1446, %v1448
        %v1451 = vsel %vm1449, %v1448, %v1446
        %v1452 = vstv %s1443
        %v1453 = vmul.f32 %v1450, %v1452
        %v1454 = vmul.f32 %v1451, %v1452
        %1455 = vrot.lane.b32.xlu0 %v254, 98
        %v1456 = vpop.permute.xlu0 %1455
        %1457 = vrot.lane.b32.xlu0 %v261, 98
        %v1458 = vpop.permute.xlu0 %1457
        %v1459 = vsel %vm1449, %v1456, %v1458
        %v1460 = vsel %vm1449, %v1458, %v1456
        %v1461 = vstv %s1444
        %v1462 = vmul.f32 %v1459, %v1461
        %v1463 = vmul.f32 %v1460, %v1461
        %v1464 = vadd.f32 %v1453, %v1462
        %v1465 = vadd.f32 %v1454, %v1463
        %v1466 = vmul.f32 %v1464, %v372
        %v1467 = vmul.f32 %v1465, %v376
        %v1468 = vadd.f32 %v1441, %v1466
        %v1469 = vadd.f32 %v1442, %v1467
        %s1470 = sld [smem:[#allocation7 + $0x25]]
        %s1471 = sld [smem:[#allocation7 + $0x56]]
        %1472 = vrot.lane.b32.xlu0 %v240, 97
        %v1473 = vpop.permute.xlu0 %1472
        %1474 = vrot.lane.b32.xlu0 %v247, 97
        %v1475 = vpop.permute.xlu0 %1474
        %vm1476 = vcmp.lt.s32.totalorder %v312, 97
        %v1477 = vsel %vm1476, %v1473, %v1475
        %v1478 = vsel %vm1476, %v1475, %v1473
        %v1479 = vstv %s1470
        %v1480 = vmul.f32 %v1477, %v1479
        %v1481 = vmul.f32 %v1478, %v1479
        %1482 = vrot.lane.b32.xlu0 %v254, 97
        %v1483 = vpop.permute.xlu0 %1482
        %1484 = vrot.lane.b32.xlu0 %v261, 97
        %v1485 = vpop.permute.xlu0 %1484
        %v1486 = vsel %vm1476, %v1483, %v1485
        %v1487 = vsel %vm1476, %v1485, %v1483
        %v1488 = vstv %s1471
        %v1489 = vmul.f32 %v1486, %v1488
        %v1490 = vmul.f32 %v1487, %v1488
        %v1491 = vadd.f32 %v1480, %v1489
        %v1492 = vadd.f32 %v1481, %v1490
        %v1493 = vmul.f32 %v1491, %v410
        %v1494 = vmul.f32 %v1492, %v414
        %v1495 = vadd.f32 %v1468, %v1493
        %v1496 = vadd.f32 %v1469, %v1494
        %s1497 = sld [smem:[#allocation7 + $0x26]]
        %s1498 = sld [smem:[#allocation7 + $0x57]]
        %1499 = vrot.lane.b32.xlu0 %v240, 96
        %v1500 = vpop.permute.xlu0 %1499
        %1501 = vrot.lane.b32.xlu0 %v247, 96
        %v1502 = vpop.permute.xlu0 %1501
        %vm1503 = vcmp.lt.s32.totalorder %v312, 96
        %v1504 = vsel %vm1503, %v1500, %v1502
        %v1505 = vsel %vm1503, %v1502, %v1500
        %v1506 = vstv %s1497
        %v1507 = vmul.f32 %v1504, %v1506
        %v1508 = vmul.f32 %v1505, %v1506
        %1509 = vrot.lane.b32.xlu0 %v254, 96
        %v1510 = vpop.permute.xlu0 %1509
        %1511 = vrot.lane.b32.xlu0 %v261, 96
        %v1512 = vpop.permute.xlu0 %1511
        %v1513 = vsel %vm1503, %v1510, %v1512
        %v1514 = vsel %vm1503, %v1512, %v1510
        %v1515 = vstv %s1498
        %v1516 = vmul.f32 %v1513, %v1515
        %v1517 = vmul.f32 %v1514, %v1515
        %v1518 = vadd.f32 %v1507, %v1516
        %v1519 = vadd.f32 %v1508, %v1517
        %v1520 = vmul.f32 %v1518, %v448
        %v1521 = vmul.f32 %v1519, %v452
        %v1522 = vadd.f32 %v1495, %v1520
        %v1523 = vadd.f32 %v1496, %v1521
        %s1524 = sld [smem:[#allocation7 + $0x27]]
        %s1525 = sld [smem:[#allocation7 + $0x58]]
        %1526 = vrot.lane.b32.xlu0 %v240, 95
        %v1527 = vpop.permute.xlu0 %1526
        %1528 = vrot.lane.b32.xlu0 %v247, 95
        %v1529 = vpop.permute.xlu0 %1528
        %vm1530 = vcmp.lt.s32.totalorder %v312, 95
        %v1531 = vsel %vm1530, %v1527, %v1529
        %v1532 = vsel %vm1530, %v1529, %v1527
        %v1533 = vstv %s1524
        %v1534 = vmul.f32 %v1531, %v1533
        %v1535 = vmul.f32 %v1532, %v1533
        %1536 = vrot.lane.b32.xlu0 %v254, 95
        %v1537 = vpop.permute.xlu0 %1536
        %1538 = vrot.lane.b32.xlu0 %v261, 95
        %v1539 = vpop.permute.xlu0 %1538
        %v1540 = vsel %vm1530, %v1537, %v1539
        %v1541 = vsel %vm1530, %v1539, %v1537
        %v1542 = vstv %s1525
        %v1543 = vmul.f32 %v1540, %v1542
        %v1544 = vmul.f32 %v1541, %v1542
        %v1545 = vadd.f32 %v1534, %v1543
        %v1546 = vadd.f32 %v1535, %v1544
        %v1547 = vmul.f32 %v1545, %v486
        %v1548 = vmul.f32 %v1546, %v490
        %v1549 = vadd.f32 %v1522, %v1547
        %v1550 = vadd.f32 %v1523, %v1548
        %s1551 = sld [smem:[#allocation7 + $0x28]]
        %s1552 = sld [smem:[#allocation7 + $0x59]]
        %1553 = vrot.lane.b32.xlu0 %v240, 94
        %v1554 = vpop.permute.xlu0 %1553
        %1555 = vrot.lane.b32.xlu0 %v247, 94
        %v1556 = vpop.permute.xlu0 %1555
        %vm1557 = vcmp.lt.s32.totalorder %v312, 94
        %v1558 = vsel %vm1557, %v1554, %v1556
        %v1559 = vsel %vm1557, %v1556, %v1554
        %v1560 = vstv %s1551
        %v1561 = vmul.f32 %v1558, %v1560
        %v1562 = vmul.f32 %v1559, %v1560
        %1563 = vrot.lane.b32.xlu0 %v254, 94
        %v1564 = vpop.permute.xlu0 %1563
        %1565 = vrot.lane.b32.xlu0 %v261, 94
        %v1566 = vpop.permute.xlu0 %1565
        %v1567 = vsel %vm1557, %v1564, %v1566
        %v1568 = vsel %vm1557, %v1566, %v1564
        %v1569 = vstv %s1552
        %v1570 = vmul.f32 %v1567, %v1569
        %v1571 = vmul.f32 %v1568, %v1569
        %v1572 = vadd.f32 %v1561, %v1570
        %v1573 = vadd.f32 %v1562, %v1571
        %v1574 = vmul.f32 %v1572, %v524
        %v1575 = vmul.f32 %v1573, %v528
        %v1576 = vadd.f32 %v1549, %v1574
        %v1577 = vadd.f32 %v1550, %v1575
        %s1578 = sld [smem:[#allocation7 + $0x29]]
        %s1579 = sld [smem:[#allocation7 + $0x5a]]
        %1580 = vrot.lane.b32.xlu0 %v240, 93
        %v1581 = vpop.permute.xlu0 %1580
        %1582 = vrot.lane.b32.xlu0 %v247, 93
        %v1583 = vpop.permute.xlu0 %1582
        %vm1584 = vcmp.lt.s32.totalorder %v312, 93
        %v1585 = vsel %vm1584, %v1581, %v1583
        %v1586 = vsel %vm1584, %v1583, %v1581
        %v1587 = vstv %s1578
        %v1588 = vmul.f32 %v1585, %v1587
        %v1589 = vmul.f32 %v1586, %v1587
        %1590 = vrot.lane.b32.xlu0 %v254, 93
        %v1591 = vpop.permute.xlu0 %1590
        %1592 = vrot.lane.b32.xlu0 %v261, 93
        %v1593 = vpop.permute.xlu0 %1592
        %v1594 = vsel %vm1584, %v1591, %v1593
        %v1595 = vsel %vm1584, %v1593, %v1591
        %v1596 = vstv %s1579
        %v1597 = vmul.f32 %v1594, %v1596
        %v1598 = vmul.f32 %v1595, %v1596
        %v1599 = vadd.f32 %v1588, %v1597
        %v1600 = vadd.f32 %v1589, %v1598
        %v1601 = vmul.f32 %v1599, %v562
        %v1602 = vmul.f32 %v1600, %v566
        %v1603 = vadd.f32 %v1576, %v1601
        %v1604 = vadd.f32 %v1577, %v1602
        %v1606 = vlaneseq
        %v1607 = vshrl.u32 %v1606, 7
        %v1608 = vsub.s32 0, %v1607
        %v1609 = vrot.slane %v1415, %v1608
        %v1610 = vlaneseq
        %v1611 = vshrl.u32 %v1610, 7
        %v1612 = vsub.s32 1, %v1611
        %v1613 = vrot.slane %v1415, %v1612
        %v1616 = vmul.f32 %v1603, %v1609
        %v1617 = vmul.f32 %v1604, %v1613
        %v1618 = vadd.f32 %v1409, %v1616
        %v1619 = vadd.f32 %v1410, %v1617
        %vm1620 = vcmp.ge.f32.partialorder %v262, -3.0
        %vm1621 = vcmp.le.f32.partialorder %v262, 12.0
        %vm1622 = vmand %vm1620, %vm1621
        %v1623 = vsel %vm1622, 1, 0
        %v1624 = vcvt.s32.f32 %v1623
        %s1625 = sld [smem:[#allocation7 + $0x2a]]
        %s1626 = sld [smem:[#allocation7 + $0x5b]]
        %1627 = vrot.lane.b32.xlu0 %v240, 83
        %v1628 = vpop.permute.xlu0 %1627
        %1629 = vrot.lane.b32.xlu0 %v247, 83
        %v1630 = vpop.permute.xlu0 %1629
        %vm1631 = vcmp.lt.s32.totalorder %v312, 83
        %v1632 = vsel %vm1631, %v1628, %v1630
        %v1633 = vsel %vm1631, %v1630, %v1628
        %v1634 = vstv %s1625
        %v1635 = vmul.f32 %v1632, %v1634
        %v1636 = vmul.f32 %v1633, %v1634
        %1637 = vrot.lane.b32.xlu0 %v254, 83
        %v1638 = vpop.permute.xlu0 %1637
        %1639 = vrot.lane.b32.xlu0 %v261, 83
        %v1640 = vpop.permute.xlu0 %1639
        %v1641 = vsel %vm1631, %v1638, %v1640
        %v1642 = vsel %vm1631, %v1640, %v1638
        %v1643 = vstv %s1626
        %v1644 = vmul.f32 %v1641, %v1643
        %v1645 = vmul.f32 %v1642, %v1643
        %v1646 = vadd.f32 %v1635, %v1644
        %v1647 = vadd.f32 %v1636, %v1645
        %v1648 = vmul.f32 %v1646, %v334
        %v1649 = vmul.f32 %v1647, %v338
        %v1650 = vadd.f32 %v1648, 0.0
        %v1651 = vadd.f32 %v1649, 0.0
        %s1652 = sld [smem:[#allocation7 + $0x2b]]
        %s1653 = sld [smem:[#allocation7 + $0x5c]]
        %1654 = vrot.lane.b32.xlu0 %v240, 82
        %v1655 = vpop.permute.xlu0 %1654
        %1656 = vrot.lane.b32.xlu0 %v247, 82
        %v1657 = vpop.permute.xlu0 %1656
        %vm1658 = vcmp.lt.s32.totalorder %v312, 82
        %v1659 = vsel %vm1658, %v1655, %v1657
        %v1660 = vsel %vm1658, %v1657, %v1655
        %v1661 = vstv %s1652
        %v1662 = vmul.f32 %v1659, %v1661
        %v1663 = vmul.f32 %v1660, %v1661
        %1664 = vrot.lane.b32.xlu0 %v254, 82
        %v1665 = vpop.permute.xlu0 %1664
        %1666 = vrot.lane.b32.xlu0 %v261, 82
        %v1667 = vpop.permute.xlu0 %1666
        %v1668 = vsel %vm1658, %v1665, %v1667
        %v1669 = vsel %vm1658, %v1667, %v1665
        %v1670 = vstv %s1653
        %v1671 = vmul.f32 %v1668, %v1670
        %v1672 = vmul.f32 %v1669, %v1670
        %v1673 = vadd.f32 %v1662, %v1671
        %v1674 = vadd.f32 %v1663, %v1672
        %v1675 = vmul.f32 %v1673, %v372
        %v1676 = vmul.f32 %v1674, %v376
        %v1677 = vadd.f32 %v1650, %v1675
        %v1678 = vadd.f32 %v1651, %v1676
        %s1679 = sld [smem:[#allocation7 + $0x2c]]
        %s1680 = sld [smem:[#allocation7 + $0x5d]]
        %1681 = vrot.lane.b32.xlu0 %v240, 81
        %v1682 = vpop.permute.xlu0 %1681
        %1683 = vrot.lane.b32.xlu0 %v247, 81
        %v1684 = vpop.permute.xlu0 %1683
        %vm1685 = vcmp.lt.s32.totalorder %v312, 81
        %v1686 = vsel %vm1685, %v1682, %v1684
        %v1687 = vsel %vm1685, %v1684, %v1682
        %v1688 = vstv %s1679
        %v1689 = vmul.f32 %v1686, %v1688
        %v1690 = vmul.f32 %v1687, %v1688
        %1691 = vrot.lane.b32.xlu0 %v254, 81
        %v1692 = vpop.permute.xlu0 %1691
        %1693 = vrot.lane.b32.xlu0 %v261, 81
        %v1694 = vpop.permute.xlu0 %1693
        %v1695 = vsel %vm1685, %v1692, %v1694
        %v1696 = vsel %vm1685, %v1694, %v1692
        %v1697 = vstv %s1680
        %v1698 = vmul.f32 %v1695, %v1697
        %v1699 = vmul.f32 %v1696, %v1697
        %v1700 = vadd.f32 %v1689, %v1698
        %v1701 = vadd.f32 %v1690, %v1699
        %v1702 = vmul.f32 %v1700, %v410
        %v1703 = vmul.f32 %v1701, %v414
        %v1704 = vadd.f32 %v1677, %v1702
        %v1705 = vadd.f32 %v1678, %v1703
        %s1706 = sld [smem:[#allocation7 + $0x2d]]
        %s1707 = sld [smem:[#allocation7 + $0x5e]]
        %1708 = vrot.lane.b32.xlu0 %v240, 80
        %v1709 = vpop.permute.xlu0 %1708
        %1710 = vrot.lane.b32.xlu0 %v247, 80
        %v1711 = vpop.permute.xlu0 %1710
        %vm1712 = vcmp.lt.s32.totalorder %v312, 80
        %v1713 = vsel %vm1712, %v1709, %v1711
        %v1714 = vsel %vm1712, %v1711, %v1709
        %v1715 = vstv %s1706
        %v1716 = vmul.f32 %v1713, %v1715
        %v1717 = vmul.f32 %v1714, %v1715
        %1718 = vrot.lane.b32.xlu0 %v254, 80
        %v1719 = vpop.permute.xlu0 %1718
        %1720 = vrot.lane.b32.xlu0 %v261, 80
        %v1721 = vpop.permute.xlu0 %1720
        %v1722 = vsel %vm1712, %v1719, %v1721
        %v1723 = vsel %vm1712, %v1721, %v1719
        %v1724 = vstv %s1707
        %v1725 = vmul.f32 %v1722, %v1724
        %v1726 = vmul.f32 %v1723, %v1724
        %v1727 = vadd.f32 %v1716, %v1725
        %v1728 = vadd.f32 %v1717, %v1726
        %v1729 = vmul.f32 %v1727, %v448
        %v1730 = vmul.f32 %v1728, %v452
        %v1731 = vadd.f32 %v1704, %v1729
        %v1732 = vadd.f32 %v1705, %v1730
        %s1733 = sld [smem:[#allocation7 + $0x2e]]
        %s1734 = sld [smem:[#allocation7 + $0x5f]]
        %1735 = vrot.lane.b32.xlu0 %v240, 79
        %v1736 = vpop.permute.xlu0 %1735
        %1737 = vrot.lane.b32.xlu0 %v247, 79
        %v1738 = vpop.permute.xlu0 %1737
        %vm1739 = vcmp.lt.s32.totalorder %v312, 79
        %v1740 = vsel %vm1739, %v1736, %v1738
        %v1741 = vsel %vm1739, %v1738, %v1736
        %v1742 = vstv %s1733
        %v1743 = vmul.f32 %v1740, %v1742
        %v1744 = vmul.f32 %v1741, %v1742
        %1745 = vrot.lane.b32.xlu0 %v254, 79
        %v1746 = vpop.permute.xlu0 %1745
        %1747 = vrot.lane.b32.xlu0 %v261, 79
        %v1748 = vpop.permute.xlu0 %1747
        %v1749 = vsel %vm1739, %v1746, %v1748
        %v1750 = vsel %vm1739, %v1748, %v1746
        %v1751 = vstv %s1734
        %v1752 = vmul.f32 %v1749, %v1751
        %v1753 = vmul.f32 %v1750, %v1751
        %v1754 = vadd.f32 %v1743, %v1752
        %v1755 = vadd.f32 %v1744, %v1753
        %v1756 = vmul.f32 %v1754, %v486
        %v1757 = vmul.f32 %v1755, %v490
        %v1758 = vadd.f32 %v1731, %v1756
        %v1759 = vadd.f32 %v1732, %v1757
        %s1760 = sld [smem:[#allocation7 + $0x2f]]
        %s1761 = sld [smem:[#allocation7 + $0x60]]
        %1762 = vrot.lane.b32.xlu0 %v240, 78
        %v1763 = vpop.permute.xlu0 %1762
        %1764 = vrot.lane.b32.xlu0 %v247, 78
        %v1765 = vpop.permute.xlu0 %1764
        %vm1766 = vcmp.lt.s32.totalorder %v312, 78
        %v1767 = vsel %vm1766, %v1763, %v1765
        %v1768 = vsel %vm1766, %v1765, %v1763
        %v1769 = vstv %s1760
        %v1770 = vmul.f32 %v1767, %v1769
        %v1771 = vmul.f32 %v1768, %v1769
        %1772 = vrot.lane.b32.xlu0 %v254, 78
        %v1773 = vpop.permute.xlu0 %1772
        %1774 = vrot.lane.b32.xlu0 %v261, 78
        %v1775 = vpop.permute.xlu0 %1774
        %v1776 = vsel %vm1766, %v1773, %v1775
        %v1777 = vsel %vm1766, %v1775, %v1773
        %v1778 = vstv %s1761
        %v1779 = vmul.f32 %v1776, %v1778
        %v1780 = vmul.f32 %v1777, %v1778
        %v1781 = vadd.f32 %v1770, %v1779
        %v1782 = vadd.f32 %v1771, %v1780
        %v1783 = vmul.f32 %v1781, %v524
        %v1784 = vmul.f32 %v1782, %v528
        %v1785 = vadd.f32 %v1758, %v1783
        %v1786 = vadd.f32 %v1759, %v1784
        %s1787 = sld [smem:[#allocation7 + $0x30]]
        %s1788 = sld [smem:[#allocation7 + $0x61]]
        %1789 = vrot.lane.b32.xlu0 %v240, 77
        %v1790 = vpop.permute.xlu0 %1789
        %1791 = vrot.lane.b32.xlu0 %v247, 77
        %v1792 = vpop.permute.xlu0 %1791
        %vm1793 = vcmp.lt.s32.totalorder %v312, 77
        %v1794 = vsel %vm1793, %v1790, %v1792
        %v1795 = vsel %vm1793, %v1792, %v1790
        %v1796 = vstv %s1787
        %v1797 = vmul.f32 %v1794, %v1796
        %v1798 = vmul.f32 %v1795, %v1796
        %1799 = vrot.lane.b32.xlu0 %v254, 77
        %v1800 = vpop.permute.xlu0 %1799
        %1801 = vrot.lane.b32.xlu0 %v261, 77
        %v1802 = vpop.permute.xlu0 %1801
        %v1803 = vsel %vm1793, %v1800, %v1802
        %v1804 = vsel %vm1793, %v1802, %v1800
        %v1805 = vstv %s1788
        %v1806 = vmul.f32 %v1803, %v1805
        %v1807 = vmul.f32 %v1804, %v1805
        %v1808 = vadd.f32 %v1797, %v1806
        %v1809 = vadd.f32 %v1798, %v1807
        %v1810 = vmul.f32 %v1808, %v562
        %v1811 = vmul.f32 %v1809, %v566
        %v1812 = vadd.f32 %v1785, %v1810
        %v1813 = vadd.f32 %v1786, %v1811
        %v1815 = vlaneseq
        %v1816 = vshrl.u32 %v1815, 7
        %v1817 = vsub.s32 0, %v1816
        %v1818 = vrot.slane %v1624, %v1817
        %v1819 = vlaneseq
        %v1820 = vshrl.u32 %v1819, 7
        %v1821 = vsub.s32 1, %v1820
        %v1822 = vrot.slane %v1624, %v1821
        %v1825 = vmul.f32 %v1812, %v1818
        %v1826 = vmul.f32 %v1813, %v1822
        %v1827 = vadd.f32 %v1618, %v1825
        %v1828 = vadd.f32 %v1619, %v1826
        %s1829 = sld [smem:[#allocation2]]
        %v1830 = vstv %s1829
        %v1831 = vadd.f32 %v1827, %v1830
        %v1832 = vadd.f32 %v1828, %v1830
        %v1833 = vxor.u32 %v1831, 2147483648
        %v1834 = vxor.u32 %v1832, 2147483648
        %v1835 = vmul.f32 %v1833, 1.442695
        %v1836 = vpow.pop %v1835
        %v1837 = vmul.f32 %v1834, 1.442695
        %v1838 = vpow.pop %v1837
        %v1839 = vadd.f32 %v1836, 1.0
        %v1840 = vadd.f32 %v1838, 1.0
        %v1841 = vrcp.pop %v1839
        %v1842 = vmul.f32 1.0, %v1841
        %v1843 = vrcp.pop %v1840
        %v1844 = vmul.f32 1.0, %v1843
        %v1845 = vlaneseq
        %v1846 = vshrl.u32 %v1845, 7
        %v1847 = vsub.s32 0, %v1846
        %v1848 = vrot.slane %v1842, %v1847
        %v1849 = vlaneseq
        %v1850 = vshrl.u32 %v1849, 7
        %v1851 = vsub.s32 0, %v1850
        %v1852 = vrot.slane %v1844, %v1851
        %v1855 = vcombine.low %v1848, %v1852
        %v1857 = vmul.f32 %v229, %v1855
        %1858 = vst [vmem:[%s228] sm:$0xff] %v1857
        %s1859 = sand.u32 %s120, 1
        %s1860 = scalar_lea.sflag [#allocation5], %s1859
        %s1861 = sand.u32 %s120, 1
        %s1862 = smul.addr %s1861, 8
        %s1863 = scalar_lea.vmem [#allocation8], %s1862
        // Predicated region
        $region45: #{tpu_custom_call.1} parent=35 // pred_check
          %p1864 = pneg %p130
        $region46: #{tpu_custom_call.1} parent=35 // pred_check_branch
          %1866 = sbr.rel (%p1864) target = $region48
        $region47: #{tpu_custom_call.1} parent=35 // pred_region
          %s1868 = ssub.s32 128, 128
          %1869 = vsyncadd %s1860, %s1868
          %s1870 = smul.addr %s23, 2
          %s1871 = smul.addr %s1870, 64
          %s1872 = scalar_lea.hbm %s4, %s1871
          %s1874 = sshll.u32 %s1863, 4
          %s1875 = int_to_ptr.vmem [resolvable:$true] %s1874
          %1877 = dma.vmem_to_hbm [thread:$0]  %s1875, 128, %s1872, %s1860
        $region48: #{tpu_custom_call.1} parent=35 // pred_fallthru
          _
      $region36: #{tpu_custom_call.1} parent=5 // pred_fallthru
        _
      %p1878 = scmp.le.s32.totalorder 2, %s18
      // Predicated region
      $region49: #{tpu_custom_call.1} parent=5 // pred_check
        %p1879 = pneg %p1878
      $region50: #{tpu_custom_call.1} parent=5 // pred_check_branch
        %1881 = sbr.rel (%p1879) target = $region52
      $region51: #{tpu_custom_call.1} parent=5 // pred_region
        %s1882 = ssub.s32 %s18, 2
        // Predicated region
        $region53: #{tpu_custom_call.1} parent=51 // pred_check
          %p1883 = pneg %p136
        $region54: #{tpu_custom_call.1} parent=51 // pred_check_branch
          %1885 = sbr.rel (%p1883) target = $region56
        $region55: #{tpu_custom_call.1} parent=51 // pred_region
          %s1886 = sand.u32 %s121, 1
          %s1887 = scalar_lea.sflag [#allocation5], %s1886
          %s1888 = sand.u32 %s121, 1
          %s1889 = smul.addr %s1888, 8
          %s1890 = scalar_lea.vmem [#allocation8], %s1889
          %1891 = dma.done %s1887, 128
        $region56: #{tpu_custom_call.1} parent=51 // pred_fallthru
          _
      $region52: #{tpu_custom_call.1} parent=5 // pred_fallthru
        _
    $region6: #{tpu_custom_call.1} parent=1 // loop_footer
      %s22 = sadd.s32 1, %s18
    $region7: #{tpu_custom_call.1} parent=1 // loop_footer_branch
      %17 = sbr.rel target = $region3
    $region8: #{tpu_custom_call.1} parent=1 // loop_exit
      _
    %1892 = vsyncpa [#allocation4], 1
    %s1893 = scalar_lea.sflag [#allocation4], 1
    %1894 = vsyncpa %s1893, 1
    %1895 = vsyncpa [#allocation5], 1
    %s1896 = scalar_lea.sflag [#allocation5], 1
    %1897 = vsyncpa %s1896, 1
    %1898 = vsyncpa [#allocation6], 1
    %s1899 = scalar_lea.sflag [#allocation6], 1
    %1900 = vsyncpa %s1899, 1

</llo_original>
